<compile_context>
chip_gen: v6e
topology: v6e:2x2x1
jax: 0.10.0
libtpu: 0.0.40
codegen_flags: <defaults>
</compile_context>

<pallas_src>
import functools

import jax
import jax.numpy as jnp
from jax import lax
from jax.experimental import pallas as pl
from jax.experimental.pallas import tpu as pltpu

HIDDEN = 64   # hidden_size in the PyTorch script
INPUT = 8     # input_size in the PyTorch script


# ------------------------------- fused kernel --------------------------------

def _fused_lstm_kernel(xcat_ref, w1_ref, w2_ref, whh2_ref, head_ref, out_ref,
                       gx1_s, x2_s, gx2_s, *, T, B):
    """Whole model in one kernel invocation (no grid).

    xcat_ref: (T*B, 2I)  row t*B+b carries [x_t | x_{T-1-t}] for batch b
    w1_ref:   (2H+2I+1, 8H)  rows [0:2H)=fused W_hh(l1), [2H:2H+2I)=fused W_ih(l1), last=bias
    w2_ref:   (2H+1, 8H)     rows [0:2H)=W_ih(l2) [fwd i,f,o,g | bwd i,f,o,g], last=bias
    whh2_ref: (H, 4H)        layer-2 forward W_hh, gate cols [i, f, o, g]
    head_ref: (4H+3, 64)     [fw1(2H); fw2_pad(64); fw3_pad(64); fb1; fb2_pad; fb3_pad]
    out_ref:  (B, 1)
    """
    H = HIDDEN
    f32 = jnp.float32

    def sigmoid(x):
        # sigmoid(x) = 0.5*(1 + tanh(x/2)): one EUP launch per gate block instead of
        # exp + reciprocal on the recurrent critical path.
        return 0.5 * (1.0 + jnp.tanh(0.5 * x))

    # ----------------------- layer 1 (bidirectional, fused) -----------------------
    # Hoisted input projection for both directions at once.  Fused gate layout (8H cols):
    #   [ i_f|i_b | f_f|f_b | o_f|o_b | g_f|g_b ]   (each gate block = 2H = 128 lanes)
    # Because xcat row t holds [x_t | x_{T-1-t}], the fwd gates of step k and the bwd gates of
    # the mirrored step T-1-k come out of the SAME matmul row block.
    gx1_s[...] = (
        jnp.dot(xcat_ref[...], w1_ref[2 * H:2 * H + 2 * INPUT, :], preferred_element_type=f32)
        + w1_ref[2 * H + 2 * INPUT:2 * H + 2 * INPUT + 1, :])

    h = jnp.zeros((B, 2 * H), f32)          # [h_fwd | h_bwd] packed on one 128-lane row
    c = jnp.zeros((B, 2 * H), f32)
    for k in range(T):                      # fwd step k and bwd step T-1-k share every vector op
        tb = T - 1 - k
        gates = gx1_s[k * B:(k + 1) * B, :]
        if k > 0:                           # h == 0 at k == 0 -> skip the recurrent matmul
            gates = gates + jnp.dot(h, w1_ref[0:2 * H, :], preferred_element_type=f32)
        sig = sigmoid(gates[:, 0:6 * H])    # one sigmoid launch over [i|f|o] of both directions
        i = sig[:, 0:2 * H]
        f = sig[:, 2 * H:4 * H]
        o = sig[:, 4 * H:6 * H]
        g = jnp.tanh(gates[:, 6 * H:8 * H])
        c = f * c + i * g                   # full 128-lane VPU ops, no lane rotates
        h = o * jnp.tanh(c)
        # lane-dense layer-1 output stack in VMEM scratch (replaces lists + lane concats)
        x2_s[k * B:(k + 1) * B, 0:H] = h[:, 0:H]
        x2_s[tb * B:(tb + 1) * B, H:2 * H] = h[:, H:2 * H]

    # ------------------------------- layer 2 -------------------------------------
    # Hoisted input projection over the whole (T*B, 2H) stack; gate cols:
    #   [ fwd: i f o g | bwd: i f o g ]   (H lanes per gate)
    gx2_s[...] = (jnp.dot(x2_s[...], w2_ref[0:2 * H, :], preferred_element_type=f32)
                  + w2_ref[2 * H:2 * H + 1, :])

    def cell(gates4, c_prev):               # single direction, gate cols [i, f, o, g]
        s = sigmoid(gates4[:, 0:3 * H])
        g = jnp.tanh(gates4[:, 3 * H:4 * H])
        c_new = s[:, H:2 * H] * c_prev + s[:, 0:H] * g
        return s[:, 2 * H:3 * H] * jnp.tanh(c_new), c_new

    h2f = jnp.zeros((B, H), f32)
    c2f = jnp.zeros((B, H), f32)
    for k in range(T):
        g2 = gx2_s[k * B:(k + 1) * B, 0:4 * H]
        if k > 0:
            g2 = g2 + jnp.dot(h2f, whh2_ref[...], preferred_element_type=f32)
        h2f, c2f = cell(g2, c2f)

    # Backward direction of layer 2: out[:, -1, :] only consumes its hidden at t = T-1,
    # which is ONE step from the zero state (h0 @ W_hh == 0) -> the other T-1 steps are skipped.
    h2b, _ = cell(gx2_s[(T - 1) * B:T * B, 4 * H:8 * H], jnp.zeros((B, H), f32))

    # -------------------- fc head (Dropout = identity in eval) --------------------
    # Linear-1 is split over its row halves so [h2f | h2b] never needs a lane concat.
    h1 = jnp.maximum(
        jnp.dot(h2f, head_ref[0:H, :], preferred_element_type=f32)
        + jnp.dot(h2b, head_ref[H:2 * H, :], preferred_element_type=f32)
        + head_ref[4 * H:4 * H + 1, :], 0.0)
    hh = jnp.maximum(
        jnp.dot(h1, head_ref[2 * H:3 * H, :], preferred_element_type=f32)
        + head_ref[4 * H + 1:4 * H + 2, :], 0.0)
    y = (jnp.dot(hh, head_ref[3 * H:4 * H, :], preferred_element_type=f32)
         + head_ref[4 * H + 2:4 * H + 3, :])
    out_ref[...] = y[:, 0:1]


# ------------------------------ kernel wrapper --------------------------------

@jax.jit
def lstm_model_forward(x, packed):
    """x: (B, T, I) batch-first, like the PyTorch module. Returns (B, 1)."""
    B, T, I = x.shape
    H = HIDDEN
    x_tm = jnp.transpose(x, (1, 0, 2)).astype(jnp.float32)              # (T, B, I)
    xcat = jnp.concatenate([x_tm, x_tm[::-1]], axis=-1).reshape(T * B, 2 * I)

    kernel = functools.partial(_fused_lstm_kernel, T=T, B=B)
    args = (xcat, packed["w1"], packed["w2"], packed["whh2"], packed["head"])
    return pl.pallas_call(
        kernel,
        out_shape=jax.ShapeDtypeStruct((B, 1), jnp.float32),
        in_specs=[pl.BlockSpec(memory_space=pltpu.MemorySpace.VMEM)] * len(args),
        out_specs=pl.BlockSpec(memory_space=pltpu.MemorySpace.VMEM),
        scratch_shapes=[pltpu.VMEM((T * B, 8 * H), jnp.float32),   # gx1: layer-1 input projection
                        pltpu.VMEM((T * B, 2 * H), jnp.float32),   # x2 : layer-1 output stack
                        pltpu.VMEM((T * B, 8 * H), jnp.float32)],  # gx2: layer-2 input projection
    )(*args)


# ---------------------- parameters (PyTorch layout) + packing -----------------

def init_raw_params(key):
    """Raw weights in PyTorch layout: w_ih (4H,in), w_hh (4H,H), gate order [i,f,g,o]."""
    keys = iter(jax.random.split(key, 24))

    def u(shape, bound):
        return jax.random.uniform(next(keys), shape, jnp.float32, -bound, bound)

    k = 1.0 / (HIDDEN ** 0.5)
    in_sizes = [INPUT, 2 * HIDDEN]
    lstm = []
    for layer in range(2):
        lp = {}
        for d in ("fwd", "bwd"):
            lp[d] = {"w_ih": u((4 * HIDDEN, in_sizes[layer]), k),
                     "w_hh": u((4 * HIDDEN, HIDDEN), k),
                     "b_ih": u((4 * HIDDEN,), k),
                     "b_hh": u((4 * HIDDEN,), k)}
        lstm.append(lp)

    def linear(in_f, out_f):
        bd = 1.0 / (in_f ** 0.5)
        return {"w": u((out_f, in_f), bd), "b": u((out_f,), bd)}

    fc = [linear(2 * HIDDEN, 64), linear(64, 32), linear(32, 1)]
    return {"lstm": lstm, "fc": fc}


def _split_gate_cols(w):
    """PyTorch (4H, in), row blocks [i; f; g; o] -> transposed (in, H) blocks (i, f, g, o)."""
    H = HIDDEN
    wt = w.T
    return wt[:, 0:H], wt[:, H:2 * H], wt[:, 2 * H:3 * H], wt[:, 3 * H:4 * H]


def _bias_gates(b_ih, b_hh):
    H = HIDDEN
    b = b_ih + b_hh
    return b[0:H], b[H:2 * H], b[2 * H:3 * H], b[3 * H:4 * H]


def _pack_layer1(lf, lb):
    """(2H + 2I + 1, 8H) buffer: fused W_hh | fused W_ih | fused bias, gate cols per-gate fused."""
    H, I = HIDDEN, INPUT
    i_f, f_f, g_f, o_f = _split_gate_cols(lf["w_ih"])
    i_b, f_b, g_b, o_b = _split_gate_cols(lb["w_ih"])
    zi = jnp.zeros((I, H), jnp.float32)
    w1x = jnp.concatenate([
        jnp.concatenate([i_f, zi, f_f, zi, o_f, zi, g_f, zi], axis=1),   # rows fed by x_t
        jnp.concatenate([zi, i_b, zi, f_b, zi, o_b, zi, g_b], axis=1),   # rows fed by x_{T-1-t}
    ], axis=0)                                                            # (2I, 8H)

    hi_f, hf_f, hg_f, ho_f = _split_gate_cols(lf["w_hh"])
    hi_b, hf_b, hg_b, ho_b = _split_gate_cols(lb["w_hh"])
    zh = jnp.zeros((H, H), jnp.float32)
    w1h = jnp.concatenate([
        jnp.concatenate([hi_f, zh, hf_f, zh, ho_f, zh, hg_f, zh], axis=1),  # rows fed by h_fwd
        jnp.concatenate([zh, hi_b, zh, hf_b, zh, ho_b, zh, hg_b], axis=1),  # rows fed by h_bwd
    ], axis=0)                                                               # (2H, 8H)

    bi_f, bf_f, bg_f, bo_f = _bias_gates(lf["b_ih"], lf["b_hh"])
    bi_b, bf_b, bg_b, bo_b = _bias_gates(lb["b_ih"], lb["b_hh"])
    b1 = jnp.concatenate([bi_f, bi_b, bf_f, bf_b, bo_f, bo_b, bg_f, bg_b])[None, :]

    return jnp.concatenate([w1h, w1x, b1], axis=0)          # (145, 512)


def _pack_layer2(lf, lb):
    """Returns ((2H+1, 8H) input-projection buffer, (H, 4H) forward W_hh)."""
    i_f, f_f, g_f, o_f = _split_gate_cols(lf["w_ih"])
    i_b, f_b, g_b, o_b = _split_gate_cols(lb["w_ih"])
    w2x = jnp.concatenate([i_f, f_f, o_f, g_f, i_b, f_b, o_b, g_b], axis=1)   # (2H, 8H)
    bi_f, bf_f, bg_f, bo_f = _bias_gates(lf["b_ih"], lf["b_hh"])
    bi_b, bf_b, bg_b, bo_b = _bias_gates(lb["b_ih"], lb["b_hh"])
    b2 = jnp.concatenate([bi_f, bf_f, bo_f, bg_f, bi_b, bf_b, bo_b, bg_b])[None, :]
    w2 = jnp.concatenate([w2x, b2], axis=0)                                   # (129, 512)

    hi, hf, hg, ho = _split_gate_cols(lf["w_hh"])
    whh2 = jnp.concatenate([hi, hf, ho, hg], axis=1)                          # (64, 256)
    return w2, whh2


def _pack_head(fc):
    """(4H+3, 64) buffer: fc1.W^T | padded fc2.W^T | padded fc3.W^T | the three bias rows."""
    fw1 = fc[0]["w"].T                                                          # (128, 64)
    fw2 = jnp.zeros((64, 64), jnp.float32).at[:, 0:32].set(fc[1]["w"].T)        # (64, 64)
    fw3 = jnp.zeros((64, 64), jnp.float32).at[0:32, 0:1].set(fc[2]["w"].T)      # (64, 64)
    fb1 = fc[0]["b"][None, :]                                                   # (1, 64)
    fb2 = jnp.zeros((1, 64), jnp.float32).at[0, 0:32].set(fc[1]["b"])
    fb3 = jnp.zeros((1, 64), jnp.float32).at[0, 0:1].set(fc[2]["b"])
    return jnp.concatenate([fw1, fw2, fw3, fb1, fb2, fb3], axis=0)              # (259, 64)


def pack_params(raw):
    l1, l2 = raw["lstm"]
    w2, whh2 = _pack_layer2(l2["fwd"], l2["bwd"])
    return {"w1": _pack_layer1(l1["fwd"], l1["bwd"]),
            "w2": w2,
            "whh2": whh2,
            "head": _pack_head(raw["fc"])}


# ------------------------------ pure-JAX reference ----------------------------

_PREC = jax.lax.Precision.HIGHEST


def _ref_lstm_dir(x_tm, w_ih, w_hh, b_ih, b_hh):
    H = HIDDEN
    wih_t, whh_t, bias = w_ih.T, w_hh.T, (b_ih + b_hh)[None, :]

    def step(carry, x_t):
        h, c = carry
        gates = (jnp.dot(x_t, wih_t, precision=_PREC)
                 + jnp.dot(h, whh_t, precision=_PREC) + bias)
        i = jax.nn.sigmoid(gates[:, 0 * H:1 * H])
        f = jax.nn.sigmoid(gates[:, 1 * H:2 * H])
        g = jnp.tanh(gates[:, 2 * H:3 * H])
        o = jax.nn.sigmoid(gates[:, 3 * H:4 * H])
        c = f * c + i * g
        h = o * jnp.tanh(c)
        return (h, c), h

    h0 = jnp.zeros((x_tm.shape[1], H), jnp.float32)
    _, hs = lax.scan(step, (h0, h0), x_tm)
    return hs


def ref_forward(x, raw):
    h = jnp.transpose(x, (1, 0, 2))
    for lp in raw["lstm"]:
        f, b = lp["fwd"], lp["bwd"]
        out_f = _ref_lstm_dir(h, f["w_ih"], f["w_hh"], f["b_ih"], f["b_hh"])
        out_b = _ref_lstm_dir(h[::-1], b["w_ih"], b["w_hh"], b["b_ih"], b["b_hh"])[::-1]
        h = jnp.concatenate([out_f, out_b], axis=-1)
    feat = h[-1]
    fc = raw["fc"]
    h1 = jnp.maximum(jnp.dot(feat, fc[0]["w"].T, precision=_PREC) + fc[0]["b"], 0.0)
    h2 = jnp.maximum(jnp.dot(h1, fc[1]["w"].T, precision=_PREC) + fc[1]["b"], 0.0)
    return jnp.dot(h2, fc[2]["w"].T, precision=_PREC) + fc[2]["b"]


# ------------------------------------ main ------------------------------------

if __name__ == "__main__":
    B, T = 8, 8
    key = jax.random.PRNGKey(0)
    kx, kp = jax.random.split(key)
    x = jax.random.normal(kx, (B, T, INPUT), jnp.float32)

    raw = init_raw_params(kp)
    packed = pack_params(raw)

    out = jax.block_until_ready(lstm_model_forward(x, packed))
    assert out.shape == (B, 1), out.shape

    ref = jax.block_until_ready(ref_forward(x, raw))
    # Kernel matmuls stay on the full-precision f32 MXU path; the margin only covers
    # transcendental (tanh/sigmoid) implementation differences between Mosaic and XLA.
    assert jnp.allclose(out, ref, atol=2e-4, rtol=2e-4), (out, ref)

    print("KERNEL_OK")
</pallas_src>

<mosaic_0001>
module attributes {stable_mosaic.version = 11 : i64} {
  func.func @_fused_lstm_kernel(%arg0: memref<64x16xf32, #tpu.memory_space<vmem>>, %arg1: memref<145x512xf32, #tpu.memory_space<vmem>>, %arg2: memref<129x512xf32, #tpu.memory_space<vmem>>, %arg3: memref<64x256xf32, #tpu.memory_space<vmem>>, %arg4: memref<259x64xf32, #tpu.memory_space<vmem>>, %arg5: memref<8x1xf32, #tpu.memory_space<vmem>>, %arg6: memref<64x512xf32, #tpu.memory_space<vmem>>, %arg7: memref<64x128xf32, #tpu.memory_space<vmem>>, %arg8: memref<64x512xf32, #tpu.memory_space<vmem>>) attributes {dimension_semantics = [], scalar_prefetch = 0 : i64, scratch_operands = 3 : i64, tpu.core_type = #tpu.core_type<tc>} {
    %c0 = arith.constant 0 : index
    %c0_0 = arith.constant 0 : index
    %0 = vector.load %arg0[%c0, %c0_0] : memref<64x16xf32, #tpu.memory_space<vmem>>, vector<64x16xf32>
    %c128 = arith.constant 128 : index
    %c0_1 = arith.constant 0 : index
    %1 = vector.load %arg1[%c128, %c0_1] : memref<145x512xf32, #tpu.memory_space<vmem>>, vector<16x512xf32>
    %cst = arith.constant dense<0.000000e+00> : vector<64x512xf32>
    %2 = tpu.matmul %0, %1, %cst {dimension_numbers = #tpu.dot_dimension_numbers<[1], [0], [0], [1], [0, 0, 1, 1], [], []>} : vector<64x16xf32>, vector<16x512xf32>, vector<64x512xf32> -> vector<64x512xf32>
    %c144 = arith.constant 144 : index
    %c0_2 = arith.constant 0 : index
    %3 = vector.load %arg1[%c144, %c0_2] : memref<145x512xf32, #tpu.memory_space<vmem>>, vector<1x512xf32>
    %4 = vector.broadcast %3 : vector<1x512xf32> to vector<64x512xf32>
    %5 = arith.addf %2, %4 : vector<64x512xf32>
    %c0_3 = arith.constant 0 : index
    %c0_4 = arith.constant 0 : index
    %6 = vector.load %arg6[%c0_3, %c0_4] : memref<64x512xf32, #tpu.memory_space<vmem>>, vector<64x512xf32>
    tpu.vector_store %arg6[%c0_3, %c0_4], %5 {strides = array<i32>} : memref<64x512xf32, #tpu.memory_space<vmem>>, vector<64x512xf32>,
    %cst_5 = arith.constant 0.000000e+00 : f32
    %7 = vector.broadcast %cst_5 : f32 to vector<8x128xf32>
    %c0_6 = arith.constant 0 : index
    %c0_7 = arith.constant 0 : index
    %8 = vector.load %arg6[%c0_6, %c0_7] : memref<64x512xf32, #tpu.memory_space<vmem>>, vector<8x512xf32>
    %9 = vector.extract_strided_slice %8 {offsets = [0, 0], sizes = [8, 384], strides = [1, 1]} : vector<8x512xf32> to vector<8x384xf32>
    %cst_8 = arith.constant 5.000000e-01 : f32
    %10 = vector.broadcast %cst_8 : f32 to vector<8x384xf32>
    %11 = arith.mulf %10, %9 : vector<8x384xf32>
    %12 = math.tanh %11 : vector<8x384xf32>
    %cst_9 = arith.constant 1.000000e+00 : f32
    %13 = vector.broadcast %cst_9 : f32 to vector<8x384xf32>
    %14 = arith.addf %13, %12 : vector<8x384xf32>
    %cst_10 = arith.constant 5.000000e-01 : f32
    %15 = vector.broadcast %cst_10 : f32 to vector<8x384xf32>
    %16 = arith.mulf %15, %14 : vector<8x384xf32>
    %17 = vector.extract_strided_slice %16 {offsets = [0, 0], sizes = [8, 128], strides = [1, 1]} : vector<8x384xf32> to vector<8x128xf32>
    %18 = vector.extract_strided_slice %16 {offsets = [0, 128], sizes = [8, 128], strides = [1, 1]} : vector<8x384xf32> to vector<8x128xf32>
    %19 = vector.extract_strided_slice %16 {offsets = [0, 256], sizes = [8, 128], strides = [1, 1]} : vector<8x384xf32> to vector<8x128xf32>
    %20 = vector.extract_strided_slice %8 {offsets = [0, 384], sizes = [8, 128], strides = [1, 1]} : vector<8x512xf32> to vector<8x128xf32>
    %21 = math.tanh %20 : vector<8x128xf32>
    %22 = arith.mulf %18, %7 : vector<8x128xf32>
    %23 = arith.mulf %17, %21 : vector<8x128xf32>
    %24 = arith.addf %22, %23 : vector<8x128xf32>
    %25 = math.tanh %24 : vector<8x128xf32>
    %26 = arith.mulf %19, %25 : vector<8x128xf32>
    %27 = vector.extract_strided_slice %26 {offsets = [0, 0], sizes = [8, 64], strides = [1, 1]} : vector<8x128xf32> to vector<8x64xf32>
    %c0_11 = arith.constant 0 : index
    %c0_12 = arith.constant 0 : index
    %28 = vector.load %arg7[%c0_11, %c0_12] : memref<64x128xf32, #tpu.memory_space<vmem>>, vector<8x64xf32>
    tpu.vector_store %arg7[%c0_11, %c0_12], %27 {strides = array<i32>} : memref<64x128xf32, #tpu.memory_space<vmem>>, vector<8x64xf32>,
    %29 = vector.extract_strided_slice %26 {offsets = [0, 64], sizes = [8, 64], strides = [1, 1]} : vector<8x128xf32> to vector<8x64xf32>
    %c56 = arith.constant 56 : index
    %c64 = arith.constant 64 : index
    %30 = vector.load %arg7[%c56, %c64] : memref<64x128xf32, #tpu.memory_space<vmem>>, vector<8x64xf32>
    tpu.vector_store %arg7[%c56, %c64], %29 {strides = array<i32>} : memref<64x128xf32, #tpu.memory_space<vmem>>, vector<8x64xf32>,
    %c8 = arith.constant 8 : index
    %c0_13 = arith.constant 0 : index
    %31 = vector.load %arg6[%c8, %c0_13] : memref<64x512xf32, #tpu.memory_space<vmem>>, vector<8x512xf32>
    %c0_14 = arith.constant 0 : index
    %c0_15 = arith.constant 0 : index
    %32 = vector.load %arg1[%c0_14, %c0_15] : memref<145x512xf32, #tpu.memory_space<vmem>>, vector<128x512xf32>
    %cst_16 = arith.constant dense<0.000000e+00> : vector<8x512xf32>
    %33 = tpu.matmul %26, %32, %cst_16 {dimension_numbers = #tpu.dot_dimension_numbers<[1], [0], [0], [1], [0, 0, 1, 1], [], []>} : vector<8x128xf32>, vector<128x512xf32>, vector<8x512xf32> -> vector<8x512xf32>
    %34 = arith.addf %31, %33 : vector<8x512xf32>
    %35 = vector.extract_strided_slice %34 {offsets = [0, 0], sizes = [8, 384], strides = [1, 1]} : vector<8x512xf32> to vector<8x384xf32>
    %cst_17 = arith.constant 5.000000e-01 : f32
    %36 = vector.broadcast %cst_17 : f32 to vector<8x384xf32>
    %37 = arith.mulf %36, %35 : vector<8x384xf32>
    %38 = math.tanh %37 : vector<8x384xf32>
    %cst_18 = arith.constant 1.000000e+00 : f32
    %39 = vector.broadcast %cst_18 : f32 to vector<8x384xf32>
    %40 = arith.addf %39, %38 : vector<8x384xf32>
    %cst_19 = arith.constant 5.000000e-01 : f32
    %41 = vector.broadcast %cst_19 : f32 to vector<8x384xf32>
    %42 = arith.mulf %41, %40 : vector<8x384xf32>
    %43 = vector.extract_strided_slice %42 {offsets = [0, 0], sizes = [8, 128], strides = [1, 1]} : vector<8x384xf32> to vector<8x128xf32>
    %44 = vector.extract_strided_slice %42 {offsets = [0, 128], sizes = [8, 128], strides = [1, 1]} : vector<8x384xf32> to vector<8x128xf32>
    %45 = vector.extract_strided_slice %42 {offsets = [0, 256], sizes = [8, 128], strides = [1, 1]} : vector<8x384xf32> to vector<8x128xf32>
    %46 = vector.extract_strided_slice %34 {offsets = [0, 384], sizes = [8, 128], strides = [1, 1]} : vector<8x512xf32> to vector<8x128xf32>
    %47 = math.tanh %46 : vector<8x128xf32>
    %48 = arith.mulf %44, %24 : vector<8x128xf32>
    %49 = arith.mulf %43, %47 : vector<8x128xf32>
    %50 = arith.addf %48, %49 : vector<8x128xf32>
    %51 = math.tanh %50 : vector<8x128xf32>
    %52 = arith.mulf %45, %51 : vector<8x128xf32>
    %53 = vector.extract_strided_slice %52 {offsets = [0, 0], sizes = [8, 64], strides = [1, 1]} : vector<8x128xf32> to vector<8x64xf32>
    %c8_20 = arith.constant 8 : index
    %c0_21 = arith.constant 0 : index
    %54 = vector.load %arg7[%c8_20, %c0_21] : memref<64x128xf32, #tpu.memory_space<vmem>>, vector<8x64xf32>
    tpu.vector_store %arg7[%c8_20, %c0_21], %53 {strides = array<i32>} : memref<64x128xf32, #tpu.memory_space<vmem>>, vector<8x64xf32>,
    %55 = vector.extract_strided_slice %52 {offsets = [0, 64], sizes = [8, 64], strides = [1, 1]} : vector<8x128xf32> to vector<8x64xf32>
    %c48 = arith.constant 48 : index
    %c64_22 = arith.constant 64 : index
    %56 = vector.load %arg7[%c48, %c64_22] : memref<64x128xf32, #tpu.memory_space<vmem>>, vector<8x64xf32>
    tpu.vector_store %arg7[%c48, %c64_22], %55 {strides = array<i32>} : memref<64x128xf32, #tpu.memory_space<vmem>>, vector<8x64xf32>,
    %c16 = arith.constant 16 : index
    %c0_23 = arith.constant 0 : index
    %57 = vector.load %arg6[%c16, %c0_23] : memref<64x512xf32, #tpu.memory_space<vmem>>, vector<8x512xf32>
    %c0_24 = arith.constant 0 : index
    %c0_25 = arith.constant 0 : index
    %58 = vector.load %arg1[%c0_24, %c0_25] : memref<145x512xf32, #tpu.memory_space<vmem>>, vector<128x512xf32>
    %cst_26 = arith.constant dense<0.000000e+00> : vector<8x512xf32>
    %59 = tpu.matmul %52, %58, %cst_26 {dimension_numbers = #tpu.dot_dimension_numbers<[1], [0], [0], [1], [0, 0, 1, 1], [], []>} : vector<8x128xf32>, vector<128x512xf32>, vector<8x512xf32> -> vector<8x512xf32>
    %60 = arith.addf %57, %59 : vector<8x512xf32>
    %61 = vector.extract_strided_slice %60 {offsets = [0, 0], sizes = [8, 384], strides = [1, 1]} : vector<8x512xf32> to vector<8x384xf32>
    %cst_27 = arith.constant 5.000000e-01 : f32
    %62 = vector.broadcast %cst_27 : f32 to vector<8x384xf32>
    %63 = arith.mulf %62, %61 : vector<8x384xf32>
    %64 = math.tanh %63 : vector<8x384xf32>
    %cst_28 = arith.constant 1.000000e+00 : f32
    %65 = vector.broadcast %cst_28 : f32 to vector<8x384xf32>
    %66 = arith.addf %65, %64 : vector<8x384xf32>
    %cst_29 = arith.constant 5.000000e-01 : f32
    %67 = vector.broadcast %cst_29 : f32 to vector<8x384xf32>
    %68 = arith.mulf %67, %66 : vector<8x384xf32>
    %69 = vector.extract_strided_slice %68 {offsets = [0, 0], sizes = [8, 128], strides = [1, 1]} : vector<8x384xf32> to vector<8x128xf32>
    %70 = vector.extract_strided_slice %68 {offsets = [0, 128], sizes = [8, 128], strides = [1, 1]} : vector<8x384xf32> to vector<8x128xf32>
    %71 = vector.extract_strided_slice %68 {offsets = [0, 256], sizes = [8, 128], strides = [1, 1]} : vector<8x384xf32> to vector<8x128xf32>
    %72 = vector.extract_strided_slice %60 {offsets = [0, 384], sizes = [8, 128], strides = [1, 1]} : vector<8x512xf32> to vector<8x128xf32>
    %73 = math.tanh %72 : vector<8x128xf32>
    %74 = arith.mulf %70, %50 : vector<8x128xf32>
    %75 = arith.mulf %69, %73 : vector<8x128xf32>
    %76 = arith.addf %74, %75 : vector<8x128xf32>
    %77 = math.tanh %76 : vector<8x128xf32>
    %78 = arith.mulf %71, %77 : vector<8x128xf32>
    %79 = vector.extract_strided_slice %78 {offsets = [0, 0], sizes = [8, 64], strides = [1, 1]} : vector<8x128xf32> to vector<8x64xf32>
    %c16_30 = arith.constant 16 : index
    %c0_31 = arith.constant 0 : index
    %80 = vector.load %arg7[%c16_30, %c0_31] : memref<64x128xf32, #tpu.memory_space<vmem>>, vector<8x64xf32>
    tpu.vector_store %arg7[%c16_30, %c0_31], %79 {strides = array<i32>} : memref<64x128xf32, #tpu.memory_space<vmem>>, vector<8x64xf32>,
    %81 = vector.extract_strided_slice %78 {offsets = [0, 64], sizes = [8, 64], strides = [1, 1]} : vector<8x128xf32> to vector<8x64xf32>
    %c40 = arith.constant 40 : index
    %c64_32 = arith.constant 64 : index
    %82 = vector.load %arg7[%c40, %c64_32] : memref<64x128xf32, #tpu.memory_space<vmem>>, vector<8x64xf32>
    tpu.vector_store %arg7[%c40, %c64_32], %81 {strides = array<i32>} : memref<64x128xf32, #tpu.memory_space<vmem>>, vector<8x64xf32>,
    %c24 = arith.constant 24 : index
    %c0_33 = arith.constant 0 : index
    %83 = vector.load %arg6[%c24, %c0_33] : memref<64x512xf32, #tpu.memory_space<vmem>>, vector<8x512xf32>
    %c0_34 = arith.constant 0 : index
    %c0_35 = arith.constant 0 : index
    %84 = vector.load %arg1[%c0_34, %c0_35] : memref<145x512xf32, #tpu.memory_space<vmem>>, vector<128x512xf32>
    %cst_36 = arith.constant dense<0.000000e+00> : vector<8x512xf32>
    %85 = tpu.matmul %78, %84, %cst_36 {dimension_numbers = #tpu.dot_dimension_numbers<[1], [0], [0], [1], [0, 0, 1, 1], [], []>} : vector<8x128xf32>, vector<128x512xf32>, vector<8x512xf32> -> vector<8x512xf32>
    %86 = arith.addf %83, %85 : vector<8x512xf32>
    %87 = vector.extract_strided_slice %86 {offsets = [0, 0], sizes = [8, 384], strides = [1, 1]} : vector<8x512xf32> to vector<8x384xf32>
    %cst_37 = arith.constant 5.000000e-01 : f32
    %88 = vector.broadcast %cst_37 : f32 to vector<8x384xf32>
    %89 = arith.mulf %88, %87 : vector<8x384xf32>
    %90 = math.tanh %89 : vector<8x384xf32>
    %cst_38 = arith.constant 1.000000e+00 : f32
    %91 = vector.broadcast %cst_38 : f32 to vector<8x384xf32>
    %92 = arith.addf %91, %90 : vector<8x384xf32>
    %cst_39 = arith.constant 5.000000e-01 : f32
    %93 = vector.broadcast %cst_39 : f32 to vector<8x384xf32>
    %94 = arith.mulf %93, %92 : vector<8x384xf32>
    %95 = vector.extract_strided_slice %94 {offsets = [0, 0], sizes = [8, 128], strides = [1, 1]} : vector<8x384xf32> to vector<8x128xf32>
    %96 = vector.extract_strided_slice %94 {offsets = [0, 128], sizes = [8, 128], strides = [1, 1]} : vector<8x384xf32> to vector<8x128xf32>
    %97 = vector.extract_strided_slice %94 {offsets = [0, 256], sizes = [8, 128], strides = [1, 1]} : vector<8x384xf32> to vector<8x128xf32>
    %98 = vector.extract_strided_slice %86 {offsets = [0, 384], sizes = [8, 128], strides = [1, 1]} : vector<8x512xf32> to vector<8x128xf32>
    %99 = math.tanh %98 : vector<8x128xf32>
    %100 = arith.mulf %96, %76 : vector<8x128xf32>
    %101 = arith.mulf %95, %99 : vector<8x128xf32>
    %102 = arith.addf %100, %101 : vector<8x128xf32>
    %103 = math.tanh %102 : vector<8x128xf32>
    %104 = arith.mulf %97, %103 : vector<8x128xf32>
    %105 = vector.extract_strided_slice %104 {offsets = [0, 0], sizes = [8, 64], strides = [1, 1]} : vector<8x128xf32> to vector<8x64xf32>
    %c24_40 = arith.constant 24 : index
    %c0_41 = arith.constant 0 : index
    %106 = vector.load %arg7[%c24_40, %c0_41] : memref<64x128xf32, #tpu.memory_space<vmem>>, vector<8x64xf32>
    tpu.vector_store %arg7[%c24_40, %c0_41], %105 {strides = array<i32>} : memref<64x128xf32, #tpu.memory_space<vmem>>, vector<8x64xf32>,
    %107 = vector.extract_strided_slice %104 {offsets = [0, 64], sizes = [8, 64], strides = [1, 1]} : vector<8x128xf32> to vector<8x64xf32>
    %c32 = arith.constant 32 : index
    %c64_42 = arith.constant 64 : index
    %108 = vector.load %arg7[%c32, %c64_42] : memref<64x128xf32, #tpu.memory_space<vmem>>, vector<8x64xf32>
    tpu.vector_store %arg7[%c32, %c64_42], %107 {strides = array<i32>} : memref<64x128xf32, #tpu.memory_space<vmem>>, vector<8x64xf32>,
    %c32_43 = arith.constant 32 : index
    %c0_44 = arith.constant 0 : index
    %109 = vector.load %arg6[%c32_43, %c0_44] : memref<64x512xf32, #tpu.memory_space<vmem>>, vector<8x512xf32>
    %c0_45 = arith.constant 0 : index
    %c0_46 = arith.constant 0 : index
    %110 = vector.load %arg1[%c0_45, %c0_46] : memref<145x512xf32, #tpu.memory_space<vmem>>, vector<128x512xf32>
    %cst_47 = arith.constant dense<0.000000e+00> : vector<8x512xf32>
    %111 = tpu.matmul %104, %110, %cst_47 {dimension_numbers = #tpu.dot_dimension_numbers<[1], [0], [0], [1], [0, 0, 1, 1], [], []>} : vector<8x128xf32>, vector<128x512xf32>, vector<8x512xf32> -> vector<8x512xf32>
    %112 = arith.addf %109, %111 : vector<8x512xf32>
    %113 = vector.extract_strided_slice %112 {offsets = [0, 0], sizes = [8, 384], strides = [1, 1]} : vector<8x512xf32> to vector<8x384xf32>
    %cst_48 = arith.constant 5.000000e-01 : f32
    %114 = vector.broadcast %cst_48 : f32 to vector<8x384xf32>
    %115 = arith.mulf %114, %113 : vector<8x384xf32>
    %116 = math.tanh %115 : vector<8x384xf32>
    %cst_49 = arith.constant 1.000000e+00 : f32
    %117 = vector.broadcast %cst_49 : f32 to vector<8x384xf32>
    %118 = arith.addf %117, %116 : vector<8x384xf32>
    %cst_50 = arith.constant 5.000000e-01 : f32
    %119 = vector.broadcast %cst_50 : f32 to vector<8x384xf32>
    %120 = arith.mulf %119, %118 : vector<8x384xf32>
    %121 = vector.extract_strided_slice %120 {offsets = [0, 0], sizes = [8, 128], strides = [1, 1]} : vector<8x384xf32> to vector<8x128xf32>
    %122 = vector.extract_strided_slice %120 {offsets = [0, 128], sizes = [8, 128], strides = [1, 1]} : vector<8x384xf32> to vector<8x128xf32>
    %123 = vector.extract_strided_slice %120 {offsets = [0, 256], sizes = [8, 128], strides = [1, 1]} : vector<8x384xf32> to vector<8x128xf32>
    %124 = vector.extract_strided_slice %112 {offsets = [0, 384], sizes = [8, 128], strides = [1, 1]} : vector<8x512xf32> to vector<8x128xf32>
    %125 = math.tanh %124 : vector<8x128xf32>
    %126 = arith.mulf %122, %102 : vector<8x128xf32>
    %127 = arith.mulf %121, %125 : vector<8x128xf32>
    %128 = arith.addf %126, %127 : vector<8x128xf32>
    %129 = math.tanh %128 : vector<8x128xf32>
    %130 = arith.mulf %123, %129 : vector<8x128xf32>
    %131 = vector.extract_strided_slice %130 {offsets = [0, 0], sizes = [8, 64], strides = [1, 1]} : vector<8x128xf32> to vector<8x64xf32>
    %c32_51 = arith.constant 32 : index
    %c0_52 = arith.constant 0 : index
    %132 = vector.load %arg7[%c32_51, %c0_52] : memref<64x128xf32, #tpu.memory_space<vmem>>, vector<8x64xf32>
    tpu.vector_store %arg7[%c32_51, %c0_52], %131 {strides = array<i32>} : memref<64x128xf32, #tpu.memory_space<vmem>>, vector<8x64xf32>,
    %133 = vector.extract_strided_slice %130 {offsets = [0, 64], sizes = [8, 64], strides = [1, 1]} : vector<8x128xf32> to vector<8x64xf32>
    %c24_53 = arith.constant 24 : index
    %c64_54 = arith.constant 64 : index
    %134 = vector.load %arg7[%c24_53, %c64_54] : memref<64x128xf32, #tpu.memory_space<vmem>>, vector<8x64xf32>
    tpu.vector_store %arg7[%c24_53, %c64_54], %133 {strides = array<i32>} : memref<64x128xf32, #tpu.memory_space<vmem>>, vector<8x64xf32>,
    %c40_55 = arith.constant 40 : index
    %c0_56 = arith.constant 0 : index
    %135 = vector.load %arg6[%c40_55, %c0_56] : memref<64x512xf32, #tpu.memory_space<vmem>>, vector<8x512xf32>
    %c0_57 = arith.constant 0 : index
    %c0_58 = arith.constant 0 : index
    %136 = vector.load %arg1[%c0_57, %c0_58] : memref<145x512xf32, #tpu.memory_space<vmem>>, vector<128x512xf32>
    %cst_59 = arith.constant dense<0.000000e+00> : vector<8x512xf32>
    %137 = tpu.matmul %130, %136, %cst_59 {dimension_numbers = #tpu.dot_dimension_numbers<[1], [0], [0], [1], [0, 0, 1, 1], [], []>} : vector<8x128xf32>, vector<128x512xf32>, vector<8x512xf32> -> vector<8x512xf32>
    %138 = arith.addf %135, %137 : vector<8x512xf32>
    %139 = vector.extract_strided_slice %138 {offsets = [0, 0], sizes = [8, 384], strides = [1, 1]} : vector<8x512xf32> to vector<8x384xf32>
    %cst_60 = arith.constant 5.000000e-01 : f32
    %140 = vector.broadcast %cst_60 : f32 to vector<8x384xf32>
    %141 = arith.mulf %140, %139 : vector<8x384xf32>
    %142 = math.tanh %141 : vector<8x384xf32>
    %cst_61 = arith.constant 1.000000e+00 : f32
    %143 = vector.broadcast %cst_61 : f32 to vector<8x384xf32>
    %144 = arith.addf %143, %142 : vector<8x384xf32>
    %cst_62 = arith.constant 5.000000e-01 : f32
    %145 = vector.broadcast %cst_62 : f32 to vector<8x384xf32>
    %146 = arith.mulf %145, %144 : vector<8x384xf32>
    %147 = vector.extract_strided_slice %146 {offsets = [0, 0], sizes = [8, 128], strides = [1, 1]} : vector<8x384xf32> to vector<8x128xf32>
    %148 = vector.extract_strided_slice %146 {offsets = [0, 128], sizes = [8, 128], strides = [1, 1]} : vector<8x384xf32> to vector<8x128xf32>
    %149 = vector.extract_strided_slice %146 {offsets = [0, 256], sizes = [8, 128], strides = [1, 1]} : vector<8x384xf32> to vector<8x128xf32>
    %150 = vector.extract_strided_slice %138 {offsets = [0, 384], sizes = [8, 128], strides = [1, 1]} : vector<8x512xf32> to vector<8x128xf32>
    %151 = math.tanh %150 : vector<8x128xf32>
    %152 = arith.mulf %148, %128 : vector<8x128xf32>
    %153 = arith.mulf %147, %151 : vector<8x128xf32>
    %154 = arith.addf %152, %153 : vector<8x128xf32>
    %155 = math.tanh %154 : vector<8x128xf32>
    %156 = arith.mulf %149, %155 : vector<8x128xf32>
    %157 = vector.extract_strided_slice %156 {offsets = [0, 0], sizes = [8, 64], strides = [1, 1]} : vector<8x128xf32> to vector<8x64xf32>
    %c40_63 = arith.constant 40 : index
    %c0_64 = arith.constant 0 : index
    %158 = vector.load %arg7[%c40_63, %c0_64] : memref<64x128xf32, #tpu.memory_space<vmem>>, vector<8x64xf32>
    tpu.vector_store %arg7[%c40_63, %c0_64], %157 {strides = array<i32>} : memref<64x128xf32, #tpu.memory_space<vmem>>, vector<8x64xf32>,
    %159 = vector.extract_strided_slice %156 {offsets = [0, 64], sizes = [8, 64], strides = [1, 1]} : vector<8x128xf32> to vector<8x64xf32>
    %c16_65 = arith.constant 16 : index
    %c64_66 = arith.constant 64 : index
    %160 = vector.load %arg7[%c16_65, %c64_66] : memref<64x128xf32, #tpu.memory_space<vmem>>, vector<8x64xf32>
    tpu.vector_store %arg7[%c16_65, %c64_66], %159 {strides = array<i32>} : memref<64x128xf32, #tpu.memory_space<vmem>>, vector<8x64xf32>,
    %c48_67 = arith.constant 48 : index
    %c0_68 = arith.constant 0 : index
    %161 = vector.load %arg6[%c48_67, %c0_68] : memref<64x512xf32, #tpu.memory_space<vmem>>, vector<8x512xf32>
    %c0_69 = arith.constant 0 : index
    %c0_70 = arith.constant 0 : index
    %162 = vector.load %arg1[%c0_69, %c0_70] : memref<145x512xf32, #tpu.memory_space<vmem>>, vector<128x512xf32>
    %cst_71 = arith.constant dense<0.000000e+00> : vector<8x512xf32>
    %163 = tpu.matmul %156, %162, %cst_71 {dimension_numbers = #tpu.dot_dimension_numbers<[1], [0], [0], [1], [0, 0, 1, 1], [], []>} : vector<8x128xf32>, vector<128x512xf32>, vector<8x512xf32> -> vector<8x512xf32>
    %164 = arith.addf %161, %163 : vector<8x512xf32>
    %165 = vector.extract_strided_slice %164 {offsets = [0, 0], sizes = [8, 384], strides = [1, 1]} : vector<8x512xf32> to vector<8x384xf32>
    %cst_72 = arith.constant 5.000000e-01 : f32
    %166 = vector.broadcast %cst_72 : f32 to vector<8x384xf32>
    %167 = arith.mulf %166, %165 : vector<8x384xf32>
    %168 = math.tanh %167 : vector<8x384xf32>
    %cst_73 = arith.constant 1.000000e+00 : f32
    %169 = vector.broadcast %cst_73 : f32 to vector<8x384xf32>
    %170 = arith.addf %169, %168 : vector<8x384xf32>
    %cst_74 = arith.constant 5.000000e-01 : f32
    %171 = vector.broadcast %cst_74 : f32 to vector<8x384xf32>
    %172 = arith.mulf %171, %170 : vector<8x384xf32>
    %173 = vector.extract_strided_slice %172 {offsets = [0, 0], sizes = [8, 128], strides = [1, 1]} : vector<8x384xf32> to vector<8x128xf32>
    %174 = vector.extract_strided_slice %172 {offsets = [0, 128], sizes = [8, 128], strides = [1, 1]} : vector<8x384xf32> to vector<8x128xf32>
    %175 = vector.extract_strided_slice %172 {offsets = [0, 256], sizes = [8, 128], strides = [1, 1]} : vector<8x384xf32> to vector<8x128xf32>
    %176 = vector.extract_strided_slice %164 {offsets = [0, 384], sizes = [8, 128], strides = [1, 1]} : vector<8x512xf32> to vector<8x128xf32>
    %177 = math.tanh %176 : vector<8x128xf32>
    %178 = arith.mulf %174, %154 : vector<8x128xf32>
    %179 = arith.mulf %173, %177 : vector<8x128xf32>
    %180 = arith.addf %178, %179 : vector<8x128xf32>
    %181 = math.tanh %180 : vector<8x128xf32>
    %182 = arith.mulf %175, %181 : vector<8x128xf32>
    %183 = vector.extract_strided_slice %182 {offsets = [0, 0], sizes = [8, 64], strides = [1, 1]} : vector<8x128xf32> to vector<8x64xf32>
    %c48_75 = arith.constant 48 : index
    %c0_76 = arith.constant 0 : index
    %184 = vector.load %arg7[%c48_75, %c0_76] : memref<64x128xf32, #tpu.memory_space<vmem>>, vector<8x64xf32>
    tpu.vector_store %arg7[%c48_75, %c0_76], %183 {strides = array<i32>} : memref<64x128xf32, #tpu.memory_space<vmem>>, vector<8x64xf32>,
    %185 = vector.extract_strided_slice %182 {offsets = [0, 64], sizes = [8, 64], strides = [1, 1]} : vector<8x128xf32> to vector<8x64xf32>
    %c8_77 = arith.constant 8 : index
    %c64_78 = arith.constant 64 : index
    %186 = vector.load %arg7[%c8_77, %c64_78] : memref<64x128xf32, #tpu.memory_space<vmem>>, vector<8x64xf32>
    tpu.vector_store %arg7[%c8_77, %c64_78], %185 {strides = array<i32>} : memref<64x128xf32, #tpu.memory_space<vmem>>, vector<8x64xf32>,
    %c56_79 = arith.constant 56 : index
    %c0_80 = arith.constant 0 : index
    %187 = vector.load %arg6[%c56_79, %c0_80] : memref<64x512xf32, #tpu.memory_space<vmem>>, vector<8x512xf32>
    %c0_81 = arith.constant 0 : index
    %c0_82 = arith.constant 0 : index
    %188 = vector.load %arg1[%c0_81, %c0_82] : memref<145x512xf32, #tpu.memory_space<vmem>>, vector<128x512xf32>
    %cst_83 = arith.constant dense<0.000000e+00> : vector<8x512xf32>
    %189 = tpu.matmul %182, %188, %cst_83 {dimension_numbers = #tpu.dot_dimension_numbers<[1], [0], [0], [1], [0, 0, 1, 1], [], []>} : vector<8x128xf32>, vector<128x512xf32>, vector<8x512xf32> -> vector<8x512xf32>
    %190 = arith.addf %187, %189 : vector<8x512xf32>
    %191 = vector.extract_strided_slice %190 {offsets = [0, 0], sizes = [8, 384], strides = [1, 1]} : vector<8x512xf32> to vector<8x384xf32>
    %cst_84 = arith.constant 5.000000e-01 : f32
    %192 = vector.broadcast %cst_84 : f32 to vector<8x384xf32>
    %193 = arith.mulf %192, %191 : vector<8x384xf32>
    %194 = math.tanh %193 : vector<8x384xf32>
    %cst_85 = arith.constant 1.000000e+00 : f32
    %195 = vector.broadcast %cst_85 : f32 to vector<8x384xf32>
    %196 = arith.addf %195, %194 : vector<8x384xf32>
    %cst_86 = arith.constant 5.000000e-01 : f32
    %197 = vector.broadcast %cst_86 : f32 to vector<8x384xf32>
    %198 = arith.mulf %197, %196 : vector<8x384xf32>
    %199 = vector.extract_strided_slice %198 {offsets = [0, 0], sizes = [8, 128], strides = [1, 1]} : vector<8x384xf32> to vector<8x128xf32>
    %200 = vector.extract_strided_slice %198 {offsets = [0, 128], sizes = [8, 128], strides = [1, 1]} : vector<8x384xf32> to vector<8x128xf32>
    %201 = vector.extract_strided_slice %198 {offsets = [0, 256], sizes = [8, 128], strides = [1, 1]} : vector<8x384xf32> to vector<8x128xf32>
    %202 = vector.extract_strided_slice %190 {offsets = [0, 384], sizes = [8, 128], strides = [1, 1]} : vector<8x512xf32> to vector<8x128xf32>
    %203 = math.tanh %202 : vector<8x128xf32>
    %204 = arith.mulf %200, %180 : vector<8x128xf32>
    %205 = arith.mulf %199, %203 : vector<8x128xf32>
    %206 = arith.addf %204, %205 : vector<8x128xf32>
    %207 = math.tanh %206 : vector<8x128xf32>
    %208 = arith.mulf %201, %207 : vector<8x128xf32>
    %209 = vector.extract_strided_slice %208 {offsets = [0, 0], sizes = [8, 64], strides = [1, 1]} : vector<8x128xf32> to vector<8x64xf32>
    %c56_87 = arith.constant 56 : index
    %c0_88 = arith.constant 0 : index
    %210 = vector.load %arg7[%c56_87, %c0_88] : memref<64x128xf32, #tpu.memory_space<vmem>>, vector<8x64xf32>
    tpu.vector_store %arg7[%c56_87, %c0_88], %209 {strides = array<i32>} : memref<64x128xf32, #tpu.memory_space<vmem>>, vector<8x64xf32>,
    %211 = vector.extract_strided_slice %208 {offsets = [0, 64], sizes = [8, 64], strides = [1, 1]} : vector<8x128xf32> to vector<8x64xf32>
    %c0_89 = arith.constant 0 : index
    %c64_90 = arith.constant 64 : index
    %212 = vector.load %arg7[%c0_89, %c64_90] : memref<64x128xf32, #tpu.memory_space<vmem>>, vector<8x64xf32>
    tpu.vector_store %arg7[%c0_89, %c64_90], %211 {strides = array<i32>} : memref<64x128xf32, #tpu.memory_space<vmem>>, vector<8x64xf32>,
    %c0_91 = arith.constant 0 : index
    %c0_92 = arith.constant 0 : index
    %213 = vector.load %arg7[%c0_91, %c0_92] : memref<64x128xf32, #tpu.memory_space<vmem>>, vector<64x128xf32>
    %c0_93 = arith.constant 0 : index
    %c0_94 = arith.constant 0 : index
    %214 = vector.load %arg2[%c0_93, %c0_94] : memref<129x512xf32, #tpu.memory_space<vmem>>, vector<128x512xf32>
    %cst_95 = arith.constant dense<0.000000e+00> : vector<64x512xf32>
    %215 = tpu.matmul %213, %214, %cst_95 {dimension_numbers = #tpu.dot_dimension_numbers<[1], [0], [0], [1], [0, 0, 1, 1], [], []>} : vector<64x128xf32>, vector<128x512xf32>, vector<64x512xf32> -> vector<64x512xf32>
    %c128_96 = arith.constant 128 : index
    %c0_97 = arith.constant 0 : index
    %216 = vector.load %arg2[%c128_96, %c0_97] : memref<129x512xf32, #tpu.memory_space<vmem>>, vector<1x512xf32>
    %217 = vector.broadcast %216 : vector<1x512xf32> to vector<64x512xf32>
    %218 = arith.addf %215, %217 : vector<64x512xf32>
    %c0_98 = arith.constant 0 : index
    %c0_99 = arith.constant 0 : index
    %219 = vector.load %arg8[%c0_98, %c0_99] : memref<64x512xf32, #tpu.memory_space<vmem>>, vector<64x512xf32>
    tpu.vector_store %arg8[%c0_98, %c0_99], %218 {strides = array<i32>} : memref<64x512xf32, #tpu.memory_space<vmem>>, vector<64x512xf32>,
    %cst_100 = arith.constant 0.000000e+00 : f32
    %220 = vector.broadcast %cst_100 : f32 to vector<8x64xf32>
    %c0_101 = arith.constant 0 : index
    %c0_102 = arith.constant 0 : index
    %221 = vector.load %arg8[%c0_101, %c0_102] : memref<64x512xf32, #tpu.memory_space<vmem>>, vector<8x256xf32>
    %222 = vector.extract_strided_slice %221 {offsets = [0, 0], sizes = [8, 192], strides = [1, 1]} : vector<8x256xf32> to vector<8x192xf32>
    %cst_103 = arith.constant 5.000000e-01 : f32
    %223 = vector.broadcast %cst_103 : f32 to vector<8x192xf32>
    %224 = arith.mulf %223, %222 : vector<8x192xf32>
    %225 = math.tanh %224 : vector<8x192xf32>
    %cst_104 = arith.constant 1.000000e+00 : f32
    %226 = vector.broadcast %cst_104 : f32 to vector<8x192xf32>
    %227 = arith.addf %226, %225 : vector<8x192xf32>
    %cst_105 = arith.constant 5.000000e-01 : f32
    %228 = vector.broadcast %cst_105 : f32 to vector<8x192xf32>
    %229 = arith.mulf %228, %227 : vector<8x192xf32>
    %230 = vector.extract_strided_slice %221 {offsets = [0, 192], sizes = [8, 64], strides = [1, 1]} : vector<8x256xf32> to vector<8x64xf32>
    %231 = math.tanh %230 : vector<8x64xf32>
    %232 = vector.extract_strided_slice %229 {offsets = [0, 64], sizes = [8, 64], strides = [1, 1]} : vector<8x192xf32> to vector<8x64xf32>
    %233 = arith.mulf %232, %220 : vector<8x64xf32>
    %234 = vector.extract_strided_slice %229 {offsets = [0, 0], sizes = [8, 64], strides = [1, 1]} : vector<8x192xf32> to vector<8x64xf32>
    %235 = arith.mulf %234, %231 : vector<8x64xf32>
    %236 = arith.addf %233, %235 : vector<8x64xf32>
    %237 = vector.extract_strided_slice %229 {offsets = [0, 128], sizes = [8, 64], strides = [1, 1]} : vector<8x192xf32> to vector<8x64xf32>
    %238 = math.tanh %236 : vector<8x64xf32>
    %239 = arith.mulf %237, %238 : vector<8x64xf32>
    %c8_106 = arith.constant 8 : index
    %c0_107 = arith.constant 0 : index
    %240 = vector.load %arg8[%c8_106, %c0_107] : memref<64x512xf32, #tpu.memory_space<vmem>>, vector<8x256xf32>
    %c0_108 = arith.constant 0 : index
    %c0_109 = arith.constant 0 : index
    %241 = vector.load %arg3[%c0_108, %c0_109] : memref<64x256xf32, #tpu.memory_space<vmem>>, vector<64x256xf32>
    %cst_110 = arith.constant dense<0.000000e+00> : vector<8x256xf32>
    %242 = tpu.matmul %239, %241, %cst_110 {dimension_numbers = #tpu.dot_dimension_numbers<[1], [0], [0], [1], [0, 0, 1, 1], [], []>} : vector<8x64xf32>, vector<64x256xf32>, vector<8x256xf32> -> vector<8x256xf32>
    %243 = arith.addf %240, %242 : vector<8x256xf32>
    %244 = vector.extract_strided_slice %243 {offsets = [0, 0], sizes = [8, 192], strides = [1, 1]} : vector<8x256xf32> to vector<8x192xf32>
    %cst_111 = arith.constant 5.000000e-01 : f32
    %245 = vector.broadcast %cst_111 : f32 to vector<8x192xf32>
    %246 = arith.mulf %245, %244 : vector<8x192xf32>
    %247 = math.tanh %246 : vector<8x192xf32>
    %cst_112 = arith.constant 1.000000e+00 : f32
    %248 = vector.broadcast %cst_112 : f32 to vector<8x192xf32>
    %249 = arith.addf %248, %247 : vector<8x192xf32>
    %cst_113 = arith.constant 5.000000e-01 : f32
    %250 = vector.broadcast %cst_113 : f32 to vector<8x192xf32>
    %251 = arith.mulf %250, %249 : vector<8x192xf32>
    %252 = vector.extract_strided_slice %243 {offsets = [0, 192], sizes = [8, 64], strides = [1, 1]} : vector<8x256xf32> to vector<8x64xf32>
    %253 = math.tanh %252 : vector<8x64xf32>
    %254 = vector.extract_strided_slice %251 {offsets = [0, 64], sizes = [8, 64], strides = [1, 1]} : vector<8x192xf32> to vector<8x64xf32>
    %255 = arith.mulf %254, %236 : vector<8x64xf32>
    %256 = vector.extract_strided_slice %251 {offsets = [0, 0], sizes = [8, 64], strides = [1, 1]} : vector<8x192xf32> to vector<8x64xf32>
    %257 = arith.mulf %256, %253 : vector<8x64xf32>
    %258 = arith.addf %255, %257 : vector<8x64xf32>
    %259 = vector.extract_strided_slice %251 {offsets = [0, 128], sizes = [8, 64], strides = [1, 1]} : vector<8x192xf32> to vector<8x64xf32>
    %260 = math.tanh %258 : vector<8x64xf32>
    %261 = arith.mulf %259, %260 : vector<8x64xf32>
    %c16_114 = arith.constant 16 : index
    %c0_115 = arith.constant 0 : index
    %262 = vector.load %arg8[%c16_114, %c0_115] : memref<64x512xf32, #tpu.memory_space<vmem>>, vector<8x256xf32>
    %c0_116 = arith.constant 0 : index
    %c0_117 = arith.constant 0 : index
    %263 = vector.load %arg3[%c0_116, %c0_117] : memref<64x256xf32, #tpu.memory_space<vmem>>, vector<64x256xf32>
    %cst_118 = arith.constant dense<0.000000e+00> : vector<8x256xf32>
    %264 = tpu.matmul %261, %263, %cst_118 {dimension_numbers = #tpu.dot_dimension_numbers<[1], [0], [0], [1], [0, 0, 1, 1], [], []>} : vector<8x64xf32>, vector<64x256xf32>, vector<8x256xf32> -> vector<8x256xf32>
    %265 = arith.addf %262, %264 : vector<8x256xf32>
    %266 = vector.extract_strided_slice %265 {offsets = [0, 0], sizes = [8, 192], strides = [1, 1]} : vector<8x256xf32> to vector<8x192xf32>
    %cst_119 = arith.constant 5.000000e-01 : f32
    %267 = vector.broadcast %cst_119 : f32 to vector<8x192xf32>
    %268 = arith.mulf %267, %266 : vector<8x192xf32>
    %269 = math.tanh %268 : vector<8x192xf32>
    %cst_120 = arith.constant 1.000000e+00 : f32
    %270 = vector.broadcast %cst_120 : f32 to vector<8x192xf32>
    %271 = arith.addf %270, %269 : vector<8x192xf32>
    %cst_121 = arith.constant 5.000000e-01 : f32
    %272 = vector.broadcast %cst_121 : f32 to vector<8x192xf32>
    %273 = arith.mulf %272, %271 : vector<8x192xf32>
    %274 = vector.extract_strided_slice %265 {offsets = [0, 192], sizes = [8, 64], strides = [1, 1]} : vector<8x256xf32> to vector<8x64xf32>
    %275 = math.tanh %274 : vector<8x64xf32>
    %276 = vector.extract_strided_slice %273 {offsets = [0, 64], sizes = [8, 64], strides = [1, 1]} : vector<8x192xf32> to vector<8x64xf32>
    %277 = arith.mulf %276, %258 : vector<8x64xf32>
    %278 = vector.extract_strided_slice %273 {offsets = [0, 0], sizes = [8, 64], strides = [1, 1]} : vector<8x192xf32> to vector<8x64xf32>
    %279 = arith.mulf %278, %275 : vector<8x64xf32>
    %280 = arith.addf %277, %279 : vector<8x64xf32>
    %281 = vector.extract_strided_slice %273 {offsets = [0, 128], sizes = [8, 64], strides = [1, 1]} : vector<8x192xf32> to vector<8x64xf32>
    %282 = math.tanh %280 : vector<8x64xf32>
    %283 = arith.mulf %281, %282 : vector<8x64xf32>
    %c24_122 = arith.constant 24 : index
    %c0_123 = arith.constant 0 : index
    %284 = vector.load %arg8[%c24_122, %c0_123] : memref<64x512xf32, #tpu.memory_space<vmem>>, vector<8x256xf32>
    %c0_124 = arith.constant 0 : index
    %c0_125 = arith.constant 0 : index
    %285 = vector.load %arg3[%c0_124, %c0_125] : memref<64x256xf32, #tpu.memory_space<vmem>>, vector<64x256xf32>
    %cst_126 = arith.constant dense<0.000000e+00> : vector<8x256xf32>
    %286 = tpu.matmul %283, %285, %cst_126 {dimension_numbers = #tpu.dot_dimension_numbers<[1], [0], [0], [1], [0, 0, 1, 1], [], []>} : vector<8x64xf32>, vector<64x256xf32>, vector<8x256xf32> -> vector<8x256xf32>
    %287 = arith.addf %284, %286 : vector<8x256xf32>
    %288 = vector.extract_strided_slice %287 {offsets = [0, 0], sizes = [8, 192], strides = [1, 1]} : vector<8x256xf32> to vector<8x192xf32>
    %cst_127 = arith.constant 5.000000e-01 : f32
    %289 = vector.broadcast %cst_127 : f32 to vector<8x192xf32>
    %290 = arith.mulf %289, %288 : vector<8x192xf32>
    %291 = math.tanh %290 : vector<8x192xf32>
    %cst_128 = arith.constant 1.000000e+00 : f32
    %292 = vector.broadcast %cst_128 : f32 to vector<8x192xf32>
    %293 = arith.addf %292, %291 : vector<8x192xf32>
    %cst_129 = arith.constant 5.000000e-01 : f32
    %294 = vector.broadcast %cst_129 : f32 to vector<8x192xf32>
    %295 = arith.mulf %294, %293 : vector<8x192xf32>
    %296 = vector.extract_strided_slice %287 {offsets = [0, 192], sizes = [8, 64], strides = [1, 1]} : vector<8x256xf32> to vector<8x64xf32>
    %297 = math.tanh %296 : vector<8x64xf32>
    %298 = vector.extract_strided_slice %295 {offsets = [0, 64], sizes = [8, 64], strides = [1, 1]} : vector<8x192xf32> to vector<8x64xf32>
    %299 = arith.mulf %298, %280 : vector<8x64xf32>
    %300 = vector.extract_strided_slice %295 {offsets = [0, 0], sizes = [8, 64], strides = [1, 1]} : vector<8x192xf32> to vector<8x64xf32>
    %301 = arith.mulf %300, %297 : vector<8x64xf32>
    %302 = arith.addf %299, %301 : vector<8x64xf32>
    %303 = vector.extract_strided_slice %295 {offsets = [0, 128], sizes = [8, 64], strides = [1, 1]} : vector<8x192xf32> to vector<8x64xf32>
    %304 = math.tanh %302 : vector<8x64xf32>
    %305 = arith.mulf %303, %304 : vector<8x64xf32>
    %c32_130 = arith.constant 32 : index
    %c0_131 = arith.constant 0 : index
    %306 = vector.load %arg8[%c32_130, %c0_131] : memref<64x512xf32, #tpu.memory_space<vmem>>, vector<8x256xf32>
    %c0_132 = arith.constant 0 : index
    %c0_133 = arith.constant 0 : index
    %307 = vector.load %arg3[%c0_132, %c0_133] : memref<64x256xf32, #tpu.memory_space<vmem>>, vector<64x256xf32>
    %cst_134 = arith.constant dense<0.000000e+00> : vector<8x256xf32>
    %308 = tpu.matmul %305, %307, %cst_134 {dimension_numbers = #tpu.dot_dimension_numbers<[1], [0], [0], [1], [0, 0, 1, 1], [], []>} : vector<8x64xf32>, vector<64x256xf32>, vector<8x256xf32> -> vector<8x256xf32>
    %309 = arith.addf %306, %308 : vector<8x256xf32>
    %310 = vector.extract_strided_slice %309 {offsets = [0, 0], sizes = [8, 192], strides = [1, 1]} : vector<8x256xf32> to vector<8x192xf32>
    %cst_135 = arith.constant 5.000000e-01 : f32
    %311 = vector.broadcast %cst_135 : f32 to vector<8x192xf32>
    %312 = arith.mulf %311, %310 : vector<8x192xf32>
    %313 = math.tanh %312 : vector<8x192xf32>
    %cst_136 = arith.constant 1.000000e+00 : f32
    %314 = vector.broadcast %cst_136 : f32 to vector<8x192xf32>
    %315 = arith.addf %314, %313 : vector<8x192xf32>
    %cst_137 = arith.constant 5.000000e-01 : f32
    %316 = vector.broadcast %cst_137 : f32 to vector<8x192xf32>
    %317 = arith.mulf %316, %315 : vector<8x192xf32>
    %318 = vector.extract_strided_slice %309 {offsets = [0, 192], sizes = [8, 64], strides = [1, 1]} : vector<8x256xf32> to vector<8x64xf32>
    %319 = math.tanh %318 : vector<8x64xf32>
    %320 = vector.extract_strided_slice %317 {offsets = [0, 64], sizes = [8, 64], strides = [1, 1]} : vector<8x192xf32> to vector<8x64xf32>
    %321 = arith.mulf %320, %302 : vector<8x64xf32>
    %322 = vector.extract_strided_slice %317 {offsets = [0, 0], sizes = [8, 64], strides = [1, 1]} : vector<8x192xf32> to vector<8x64xf32>
    %323 = arith.mulf %322, %319 : vector<8x64xf32>
    %324 = arith.addf %321, %323 : vector<8x64xf32>
    %325 = vector.extract_strided_slice %317 {offsets = [0, 128], sizes = [8, 64], strides = [1, 1]} : vector<8x192xf32> to vector<8x64xf32>
    %326 = math.tanh %324 : vector<8x64xf32>
    %327 = arith.mulf %325, %326 : vector<8x64xf32>
    %c40_138 = arith.constant 40 : index
    %c0_139 = arith.constant 0 : index
    %328 = vector.load %arg8[%c40_138, %c0_139] : memref<64x512xf32, #tpu.memory_space<vmem>>, vector<8x256xf32>
    %c0_140 = arith.constant 0 : index
    %c0_141 = arith.constant 0 : index
    %329 = vector.load %arg3[%c0_140, %c0_141] : memref<64x256xf32, #tpu.memory_space<vmem>>, vector<64x256xf32>
    %cst_142 = arith.constant dense<0.000000e+00> : vector<8x256xf32>
    %330 = tpu.matmul %327, %329, %cst_142 {dimension_numbers = #tpu.dot_dimension_numbers<[1], [0], [0], [1], [0, 0, 1, 1], [], []>} : vector<8x64xf32>, vector<64x256xf32>, vector<8x256xf32> -> vector<8x256xf32>
    %331 = arith.addf %328, %330 : vector<8x256xf32>
    %332 = vector.extract_strided_slice %331 {offsets = [0, 0], sizes = [8, 192], strides = [1, 1]} : vector<8x256xf32> to vector<8x192xf32>
    %cst_143 = arith.constant 5.000000e-01 : f32
    %333 = vector.broadcast %cst_143 : f32 to vector<8x192xf32>
    %334 = arith.mulf %333, %332 : vector<8x192xf32>
    %335 = math.tanh %334 : vector<8x192xf32>
    %cst_144 = arith.constant 1.000000e+00 : f32
    %336 = vector.broadcast %cst_144 : f32 to vector<8x192xf32>
    %337 = arith.addf %336, %335 : vector<8x192xf32>
    %cst_145 = arith.constant 5.000000e-01 : f32
    %338 = vector.broadcast %cst_145 : f32 to vector<8x192xf32>
    %339 = arith.mulf %338, %337 : vector<8x192xf32>
    %340 = vector.extract_strided_slice %331 {offsets = [0, 192], sizes = [8, 64], strides = [1, 1]} : vector<8x256xf32> to vector<8x64xf32>
    %341 = math.tanh %340 : vector<8x64xf32>
    %342 = vector.extract_strided_slice %339 {offsets = [0, 64], sizes = [8, 64], strides = [1, 1]} : vector<8x192xf32> to vector<8x64xf32>
    %343 = arith.mulf %342, %324 : vector<8x64xf32>
    %344 = vector.extract_strided_slice %339 {offsets = [0, 0], sizes = [8, 64], strides = [1, 1]} : vector<8x192xf32> to vector<8x64xf32>
    %345 = arith.mulf %344, %341 : vector<8x64xf32>
    %346 = arith.addf %343, %345 : vector<8x64xf32>
    %347 = vector.extract_strided_slice %339 {offsets = [0, 128], sizes = [8, 64], strides = [1, 1]} : vector<8x192xf32> to vector<8x64xf32>
    %348 = math.tanh %346 : vector<8x64xf32>
    %349 = arith.mulf %347, %348 : vector<8x64xf32>
    %c48_146 = arith.constant 48 : index
    %c0_147 = arith.constant 0 : index
    %350 = vector.load %arg8[%c48_146, %c0_147] : memref<64x512xf32, #tpu.memory_space<vmem>>, vector<8x256xf32>
    %c0_148 = arith.constant 0 : index
    %c0_149 = arith.constant 0 : index
    %351 = vector.load %arg3[%c0_148, %c0_149] : memref<64x256xf32, #tpu.memory_space<vmem>>, vector<64x256xf32>
    %cst_150 = arith.constant dense<0.000000e+00> : vector<8x256xf32>
    %352 = tpu.matmul %349, %351, %cst_150 {dimension_numbers = #tpu.dot_dimension_numbers<[1], [0], [0], [1], [0, 0, 1, 1], [], []>} : vector<8x64xf32>, vector<64x256xf32>, vector<8x256xf32> -> vector<8x256xf32>
    %353 = arith.addf %350, %352 : vector<8x256xf32>
    %354 = vector.extract_strided_slice %353 {offsets = [0, 0], sizes = [8, 192], strides = [1, 1]} : vector<8x256xf32> to vector<8x192xf32>
    %cst_151 = arith.constant 5.000000e-01 : f32
    %355 = vector.broadcast %cst_151 : f32 to vector<8x192xf32>
    %356 = arith.mulf %355, %354 : vector<8x192xf32>
    %357 = math.tanh %356 : vector<8x192xf32>
    %cst_152 = arith.constant 1.000000e+00 : f32
    %358 = vector.broadcast %cst_152 : f32 to vector<8x192xf32>
    %359 = arith.addf %358, %357 : vector<8x192xf32>
    %cst_153 = arith.constant 5.000000e-01 : f32
    %360 = vector.broadcast %cst_153 : f32 to vector<8x192xf32>
    %361 = arith.mulf %360, %359 : vector<8x192xf32>
    %362 = vector.extract_strided_slice %353 {offsets = [0, 192], sizes = [8, 64], strides = [1, 1]} : vector<8x256xf32> to vector<8x64xf32>
    %363 = math.tanh %362 : vector<8x64xf32>
    %364 = vector.extract_strided_slice %361 {offsets = [0, 64], sizes = [8, 64], strides = [1, 1]} : vector<8x192xf32> to vector<8x64xf32>
    %365 = arith.mulf %364, %346 : vector<8x64xf32>
    %366 = vector.extract_strided_slice %361 {offsets = [0, 0], sizes = [8, 64], strides = [1, 1]} : vector<8x192xf32> to vector<8x64xf32>
    %367 = arith.mulf %366, %363 : vector<8x64xf32>
    %368 = arith.addf %365, %367 : vector<8x64xf32>
    %369 = vector.extract_strided_slice %361 {offsets = [0, 128], sizes = [8, 64], strides = [1, 1]} : vector<8x192xf32> to vector<8x64xf32>
    %370 = math.tanh %368 : vector<8x64xf32>
    %371 = arith.mulf %369, %370 : vector<8x64xf32>
    %c56_154 = arith.constant 56 : index
    %c0_155 = arith.constant 0 : index
    %372 = vector.load %arg8[%c56_154, %c0_155] : memref<64x512xf32, #tpu.memory_space<vmem>>, vector<8x256xf32>
    %c0_156 = arith.constant 0 : index
    %c0_157 = arith.constant 0 : index
    %373 = vector.load %arg3[%c0_156, %c0_157] : memref<64x256xf32, #tpu.memory_space<vmem>>, vector<64x256xf32>
    %cst_158 = arith.constant dense<0.000000e+00> : vector<8x256xf32>
    %374 = tpu.matmul %371, %373, %cst_158 {dimension_numbers = #tpu.dot_dimension_numbers<[1], [0], [0], [1], [0, 0, 1, 1], [], []>} : vector<8x64xf32>, vector<64x256xf32>, vector<8x256xf32> -> vector<8x256xf32>
    %375 = arith.addf %372, %374 : vector<8x256xf32>
    %376 = vector.extract_strided_slice %375 {offsets = [0, 0], sizes = [8, 192], strides = [1, 1]} : vector<8x256xf32> to vector<8x192xf32>
    %cst_159 = arith.constant 5.000000e-01 : f32
    %377 = vector.broadcast %cst_159 : f32 to vector<8x192xf32>
    %378 = arith.mulf %377, %376 : vector<8x192xf32>
    %379 = math.tanh %378 : vector<8x192xf32>
    %cst_160 = arith.constant 1.000000e+00 : f32
    %380 = vector.broadcast %cst_160 : f32 to vector<8x192xf32>
    %381 = arith.addf %380, %379 : vector<8x192xf32>
    %cst_161 = arith.constant 5.000000e-01 : f32
    %382 = vector.broadcast %cst_161 : f32 to vector<8x192xf32>
    %383 = arith.mulf %382, %381 : vector<8x192xf32>
    %384 = vector.extract_strided_slice %375 {offsets = [0, 192], sizes = [8, 64], strides = [1, 1]} : vector<8x256xf32> to vector<8x64xf32>
    %385 = math.tanh %384 : vector<8x64xf32>
    %386 = vector.extract_strided_slice %383 {offsets = [0, 64], sizes = [8, 64], strides = [1, 1]} : vector<8x192xf32> to vector<8x64xf32>
    %387 = arith.mulf %386, %368 : vector<8x64xf32>
    %388 = vector.extract_strided_slice %383 {offsets = [0, 0], sizes = [8, 64], strides = [1, 1]} : vector<8x192xf32> to vector<8x64xf32>
    %389 = arith.mulf %388, %385 : vector<8x64xf32>
    %390 = arith.addf %387, %389 : vector<8x64xf32>
    %391 = vector.extract_strided_slice %383 {offsets = [0, 128], sizes = [8, 64], strides = [1, 1]} : vector<8x192xf32> to vector<8x64xf32>
    %392 = math.tanh %390 : vector<8x64xf32>
    %393 = arith.mulf %391, %392 : vector<8x64xf32>
    %c56_162 = arith.constant 56 : index
    %c256 = arith.constant 256 : index
    %394 = vector.load %arg8[%c56_162, %c256] : memref<64x512xf32, #tpu.memory_space<vmem>>, vector<8x256xf32>
    %cst_163 = arith.constant 0.000000e+00 : f32
    %395 = vector.broadcast %cst_163 : f32 to vector<8x64xf32>
    %396 = vector.extract_strided_slice %394 {offsets = [0, 0], sizes = [8, 192], strides = [1, 1]} : vector<8x256xf32> to vector<8x192xf32>
    %cst_164 = arith.constant 5.000000e-01 : f32
    %397 = vector.broadcast %cst_164 : f32 to vector<8x192xf32>
    %398 = arith.mulf %397, %396 : vector<8x192xf32>
    %399 = math.tanh %398 : vector<8x192xf32>
    %cst_165 = arith.constant 1.000000e+00 : f32
    %400 = vector.broadcast %cst_165 : f32 to vector<8x192xf32>
    %401 = arith.addf %400, %399 : vector<8x192xf32>
    %cst_166 = arith.constant 5.000000e-01 : f32
    %402 = vector.broadcast %cst_166 : f32 to vector<8x192xf32>
    %403 = arith.mulf %402, %401 : vector<8x192xf32>
    %404 = vector.extract_strided_slice %394 {offsets = [0, 192], sizes = [8, 64], strides = [1, 1]} : vector<8x256xf32> to vector<8x64xf32>
    %405 = math.tanh %404 : vector<8x64xf32>
    %406 = vector.extract_strided_slice %403 {offsets = [0, 64], sizes = [8, 64], strides = [1, 1]} : vector<8x192xf32> to vector<8x64xf32>
    %407 = arith.mulf %406, %395 : vector<8x64xf32>
    %408 = vector.extract_strided_slice %403 {offsets = [0, 0], sizes = [8, 64], strides = [1, 1]} : vector<8x192xf32> to vector<8x64xf32>
    %409 = arith.mulf %408, %405 : vector<8x64xf32>
    %410 = arith.addf %407, %409 : vector<8x64xf32>
    %411 = vector.extract_strided_slice %403 {offsets = [0, 128], sizes = [8, 64], strides = [1, 1]} : vector<8x192xf32> to vector<8x64xf32>
    %412 = math.tanh %410 : vector<8x64xf32>
    %413 = arith.mulf %411, %412 : vector<8x64xf32>
    %c0_167 = arith.constant 0 : index
    %c0_168 = arith.constant 0 : index
    %414 = vector.load %arg4[%c0_167, %c0_168] : memref<259x64xf32, #tpu.memory_space<vmem>>, vector<64x64xf32>
    %cst_169 = arith.constant dense<0.000000e+00> : vector<8x64xf32>
    %415 = tpu.matmul %393, %414, %cst_169 {dimension_numbers = #tpu.dot_dimension_numbers<[1], [0], [0], [1], [0, 0, 1, 1], [], []>} : vector<8x64xf32>, vector<64x64xf32>, vector<8x64xf32> -> vector<8x64xf32>
    %c64_170 = arith.constant 64 : index
    %c0_171 = arith.constant 0 : index
    %416 = vector.load %arg4[%c64_170, %c0_171] : memref<259x64xf32, #tpu.memory_space<vmem>>, vector<64x64xf32>
    %cst_172 = arith.constant dense<0.000000e+00> : vector<8x64xf32>
    %417 = tpu.matmul %413, %416, %cst_172 {dimension_numbers = #tpu.dot_dimension_numbers<[1], [0], [0], [1], [0, 0, 1, 1], [], []>} : vector<8x64xf32>, vector<64x64xf32>, vector<8x64xf32> -> vector<8x64xf32>
    %418 = arith.addf %415, %417 : vector<8x64xf32>
    %c256_173 = arith.constant 256 : index
    %c0_174 = arith.constant 0 : index
    %419 = vector.load %arg4[%c256_173, %c0_174] : memref<259x64xf32, #tpu.memory_space<vmem>>, vector<1x64xf32>
    %420 = vector.broadcast %419 : vector<1x64xf32> to vector<8x64xf32>
    %421 = arith.addf %418, %420 : vector<8x64xf32>
    %cst_175 = arith.constant 0.000000e+00 : f32
    %422 = vector.broadcast %cst_175 : f32 to vector<8x64xf32>
    %423 = arith.maximumf %421, %422 : vector<8x64xf32>
    %c128_176 = arith.constant 128 : index
    %c0_177 = arith.constant 0 : index
    %424 = vector.load %arg4[%c128_176, %c0_177] : memref<259x64xf32, #tpu.memory_space<vmem>>, vector<64x64xf32>
    %cst_178 = arith.constant dense<0.000000e+00> : vector<8x64xf32>
    %425 = tpu.matmul %423, %424, %cst_178 {dimension_numbers = #tpu.dot_dimension_numbers<[1], [0], [0], [1], [0, 0, 1, 1], [], []>} : vector<8x64xf32>, vector<64x64xf32>, vector<8x64xf32> -> vector<8x64xf32>
    %c257 = arith.constant 257 : index
    %c0_179 = arith.constant 0 : index
    %426 = vector.load %arg4[%c257, %c0_179] : memref<259x64xf32, #tpu.memory_space<vmem>>, vector<1x64xf32>
    %427 = vector.broadcast %426 : vector<1x64xf32> to vector<8x64xf32>
    %428 = arith.addf %425, %427 : vector<8x64xf32>
    %cst_180 = arith.constant 0.000000e+00 : f32
    %429 = vector.broadcast %cst_180 : f32 to vector<8x64xf32>
    %430 = arith.maximumf %428, %429 : vector<8x64xf32>
    %c192 = arith.constant 192 : index
    %c0_181 = arith.constant 0 : index
    %431 = vector.load %arg4[%c192, %c0_181] : memref<259x64xf32, #tpu.memory_space<vmem>>, vector<64x64xf32>
    %cst_182 = arith.constant dense<0.000000e+00> : vector<8x64xf32>
    %432 = tpu.matmul %430, %431, %cst_182 {dimension_numbers = #tpu.dot_dimension_numbers<[1], [0], [0], [1], [0, 0, 1, 1], [], []>} : vector<8x64xf32>, vector<64x64xf32>, vector<8x64xf32> -> vector<8x64xf32>
    %c258 = arith.constant 258 : index
    %c0_183 = arith.constant 0 : index
    %433 = vector.load %arg4[%c258, %c0_183] : memref<259x64xf32, #tpu.memory_space<vmem>>, vector<1x64xf32>
    %434 = vector.broadcast %433 : vector<1x64xf32> to vector<8x64xf32>
    %435 = arith.addf %432, %434 : vector<8x64xf32>
    %436 = vector.extract_strided_slice %435 {offsets = [0, 0], sizes = [8, 1], strides = [1, 1]} : vector<8x64xf32> to vector<8x1xf32>
    %c0_184 = arith.constant 0 : index
    %c0_185 = arith.constant 0 : index
    %437 = vector.load %arg5[%c0_184, %c0_185] : memref<8x1xf32, #tpu.memory_space<vmem>>, vector<8x1xf32>
    tpu.vector_store %arg5[%c0_184, %c0_185], %436 {strides = array<i32>} : memref<8x1xf32, #tpu.memory_space<vmem>>, vector<8x1xf32>,
    return
  }
}

</mosaic_0001>

<llo_original>
// kernel: lstm_model_forward.1
$region0: #{lstm_model_forward.1}
  #allocation0 [shape = 'u32[]', space=smem, size = 0x4, offset = 0x4, fixed_abs, tag = 'smem constant byte address 0x4 - core index']
  #allocation1 [shape = 'u32[144,128]{1,0:T(1,128)}', space=vmem, size = 0x12000, scoped, tag = 'internal scratch']
  #allocation2 [shape = 'f32[64,512]{1,0:T(8,128)}', space=vmem, size = 0x20000, scoped, tag = 'scratch operand']
  #allocation3 [shape = 'f32[64,128]{1,0:T(8,128)}', space=vmem, size = 0x8000, scoped, tag = 'scratch operand']
  #allocation4 [shape = 'f32[64,512]{1,0:T(8,128)}', space=vmem, size = 0x20000, scoped, tag = 'scratch operand']
  %s0 = inlined_call_operand.vmem [shape: f32[64,16], index: 0, kind: input, shape index: {}]
  %s1 = inlined_call_operand.vmem [shape: f32[145,512], index: 1, kind: input, shape index: {}]
  %s2 = inlined_call_operand.hbm [shape: f32[129,512], index: 2, kind: input, shape index: {}]
  %s3 = inlined_call_operand.vmem [shape: f32[64,256], index: 3, kind: input, shape index: {}]
  %s4 = inlined_call_operand.vmem [shape: f32[259,64], index: 4, kind: input, shape index: {}]
  %s5 = inlined_call_operand.vmem [shape: f32[8,1], index: 5, kind: output, shape index: {}]
  %s6 = sld [smem:[#allocation0]]
  $region34: #{lstm_model_forward.1} parent=0
    _
  %s8 = ssub.s32 1, %s6
  %s9 = scalar_select 0, %s8, %s6
  $region1: #{lstm_model_forward.1} parent=0
    #allocation5 [shape = 'u8[278528]{0}', space=vmem, size = 0x44000, scoped, tag = 'input window, operand 2, single buffered']
    #allocation6 [shape = 's32[1]{0}', space=sflag, size = 0x4, scoped, tag = 'scoped memory for lstm_model_forward.1']
    %10 = vsyncpa [#allocation6], 0
    // Predicated region
    $region2: #{lstm_model_forward.1} parent=1 // pred_check
      _
    $region3: #{lstm_model_forward.1} parent=1 // pred_check_branch
      %12 = sbr.rel (0) target = $region5
    $region4: #{lstm_model_forward.1} parent=1 // pred_region
      _
    $region5: #{lstm_model_forward.1} parent=1 // pred_fallthru
      _
    // Predicated region
    $region6: #{lstm_model_forward.1} parent=1 // pred_check
      _
    $region7: #{lstm_model_forward.1} parent=1 // pred_check_branch
      %14 = sbr.rel (0) target = $region9
    $region8: #{lstm_model_forward.1} parent=1 // pred_region
      _
    $region9: #{lstm_model_forward.1} parent=1 // pred_fallthru
      _
    // Predicated region
    $region10: #{lstm_model_forward.1} parent=1 // pred_check
      _
    $region11: #{lstm_model_forward.1} parent=1 // pred_check_branch
      %16 = sbr.rel (0) target = $region13
    $region12: #{lstm_model_forward.1} parent=1 // pred_region
      %s18 = ssub.s32 8704, 8704
      %19 = vsyncadd [#allocation6], %s18
      %s20 = sshll.u32 [#allocation5], 4
      %s21 = int_to_ptr.vmem [resolvable:$true] %s20
      %26 = dma.hbm_to_vmem [thread:$0]  %s2, 8704, %s21, [#allocation6], 512, 512, 32
    $region13: #{lstm_model_forward.1} parent=1 // pred_fallthru
      _
    // Predicated region
    $region14: #{lstm_model_forward.1} parent=1 // pred_check
      _
    $region15: #{lstm_model_forward.1} parent=1 // pred_check_branch
      %28 = sbr.rel (0) target = $region17
    $region16: #{lstm_model_forward.1} parent=1 // pred_region
      _
    $region17: #{lstm_model_forward.1} parent=1 // pred_fallthru
      _
    // Predicated region
    $region18: #{lstm_model_forward.1} parent=1 // pred_check
      _
    $region19: #{lstm_model_forward.1} parent=1 // pred_check_branch
      %30 = sbr.rel (0) target = $region21
    $region20: #{lstm_model_forward.1} parent=1 // pred_region
      _
    $region21: #{lstm_model_forward.1} parent=1 // pred_fallthru
      _
    // Predicated region
    $region22: #{lstm_model_forward.1} parent=1 // pred_check
      _
    $region23: #{lstm_model_forward.1} parent=1 // pred_check_branch
      %32 = sbr.rel (0) target = $region25
    $region24: #{lstm_model_forward.1} parent=1 // pred_region
      %33 = dma.done [#allocation6], 8704
    $region25: #{lstm_model_forward.1} parent=1 // pred_fallthru
      _
    %v34 = vld [vmem:[%s0] sm:$0xff]
    %v35 = vld [vmem:[%s0 + $0x8] sm:$0xff]
    %v36 = vld [vmem:[%s0 + $0x10] sm:$0xff]
    %v37 = vld [vmem:[%s0 + $0x18] sm:$0xff]
    %v38 = vld [vmem:[%s0 + $0x20] sm:$0xff]
    %v39 = vld [vmem:[%s0 + $0x28] sm:$0xff]
    %v40 = vld [vmem:[%s0 + $0x30] sm:$0xff]
    %v41 = vld [vmem:[%s0 + $0x38] sm:$0xff]
    %v42 = vld [vmem:[%s1 + $0x200] sm:$0xff]
    %v43 = vld [vmem:[%s1 + $0x208] sm:$0xff]
    %v44 = vld [vmem:[%s1 + $0x210] sm:$0xff]
    %v45 = vld [vmem:[%s1 + $0x218] sm:$0xff]
    %v46 = vld [vmem:[%s1 + $0x220] sm:$0xff]
    %v47 = vld [vmem:[%s1 + $0x228] sm:$0xff]
    %v48 = vld [vmem:[%s1 + $0x230] sm:$0xff]
    %v49 = vld [vmem:[%s1 + $0x238] sm:$0xff]
    %s50 = scalar_lea.vmem %s1, 576
    %v51 = vld [vmem:[%s50] ss:$8 sm:$0xf]
    %v53 = vlaneseq
    %v54 = vshrl.u32 %v53, 7
    %v55 = vsub.s32 0, %v54
    %v56 = vrot.slane %v51, %v55
    %v57 = vlaneseq
    %v58 = vshrl.u32 %v57, 7
    %v59 = vsub.s32 1, %v58
    %v60 = vrot.slane %v51, %v59
    %v61 = vlaneseq
    %v62 = vshrl.u32 %v61, 7
    %v63 = vsub.s32 2, %v62
    %v64 = vrot.slane %v51, %v63
    %v65 = vlaneseq
    %v66 = vshrl.u32 %v65, 7
    %v67 = vsub.s32 3, %v66
    %v68 = vrot.slane %v51, %v67
    %vm73 = vcmask 130048
    %v75 = vsel %vm73, %v34, 0
    %v78 = vsel %vm73, %v35, 0
    %v81 = vsel %vm73, %v36, 0
    %v84 = vsel %vm73, %v37, 0
    %v87 = vsel %vm73, %v38, 0
    %v90 = vsel %vm73, %v39, 0
    %v93 = vsel %vm73, %v40, 0
    %v96 = vsel %vm73, %v41, 0
    %98 = vmatprep.subr.mxu0 0.0
    %99 = vmatpush1.msra.mxu0 0.0
    %100 = vmatprep.subr.mxu0 0.0
    %101 = vmatpush1.msra.mxu0 0.0
    %102 = vmatprep.subr.mxu0 0.0
    %103 = vmatpush1.msra.mxu0 0.0
    %104 = vmatprep.subr.mxu0 0.0
    %105 = vmatpush1.msra.mxu0 0.0
    %106 = vmatprep.subr.mxu0 0.0
    %107 = vmatpush1.msra.mxu0 0.0
    %108 = vmatprep.subr.mxu0 0.0
    %109 = vmatpush1.msra.mxu0 0.0
    %110 = vmatprep.subr.mxu0 0.0
    %111 = vmatpush1.msra.mxu0 0.0
    %112 = vmatprep.subr.mxu0 0.0
    %113 = vmatpush1.msra.mxu0 0.0
    %114 = vmatprep.subr.mxu0 0.0
    %115 = vmatpush1.msra.mxu0 0.0
    %116 = vmatprep.subr.mxu0 0.0
    %117 = vmatpush1.msra.mxu0 0.0
    %118 = vmatprep.subr.mxu0 0.0
    %119 = vmatpush1.msra.mxu0 0.0
    %120 = vmatprep.subr.mxu0 0.0
    %121 = vmatpush1.msra.mxu0 0.0
    %122 = vmatprep.subr.mxu0 0.0
    %123 = vmatpush1.msra.mxu0 0.0
    %124 = vmatprep.subr.mxu0 0.0
    %125 = vmatpush1.msra.mxu0 0.0
    %126 = vmatprep.subr.mxu0 %v47
    %127 = vmatpush1.msra.mxu0 %v46
    %128 = vmatprep.subr.mxu0 %v43
    %129 = vmatpush1.msra.mxu0 %v42
    %130 = vmatprep.subr.mxu0 0.0
    %131 = vmatpush2.msra.mxu0 0.0
    %132 = vmatprep.subr.mxu0 0.0
    %133 = vmatpush2.msra.mxu0 0.0
    %134 = vmatprep.subr.mxu0 0.0
    %135 = vmatpush2.msra.mxu0 0.0
    %136 = vmatprep.subr.mxu0 0.0
    %137 = vmatpush2.msra.mxu0 0.0
    %138 = vmatprep.subr.mxu0 0.0
    %139 = vmatpush2.msra.mxu0 0.0
    %140 = vmatprep.subr.mxu0 0.0
    %141 = vmatpush2.msra.mxu0 0.0
    %142 = vmatprep.subr.mxu0 0.0
    %143 = vmatpush2.msra.mxu0 0.0
    %144 = vmatprep.subr.mxu0 0.0
    %145 = vmatpush2.msra.mxu0 0.0
    %146 = vmatprep.subr.mxu0 0.0
    %147 = vmatpush2.msra.mxu0 0.0
    %148 = vmatprep.subr.mxu0 0.0
    %149 = vmatpush2.msra.mxu0 0.0
    %150 = vmatprep.subr.mxu0 0.0
    %151 = vmatpush2.msra.mxu0 0.0
    %152 = vmatprep.subr.mxu0 0.0
    %153 = vmatpush2.msra.mxu0 0.0
    %154 = vmatprep.subr.mxu0 0.0
    %155 = vmatpush2.msra.mxu0 0.0
    %156 = vmatprep.subr.mxu0 0.0
    %157 = vmatpush2.msra.mxu0 0.0
    %158 = vmatprep.subr.mxu0 0.0
    %159 = vmatpush2.msra.mxu0 0.0
    %160 = vmatprep.subr.mxu0 0.0
    %161 = vmatpush2.msra.mxu0 0.0
    %162 = vmatprep.mubr.f32.mxu0 0.0
    %163 = vmatmul.mubr.f32.gmra.mxu0 %v75
    %v164 = vpop.f32.mrf.mxu0
    %v165 = vadd.f32 %v56, %v164
    %v166 = vpop.f32.mrf.mxu0
    %v167 = vadd.f32 %v60, %v166
    %168 = vmatprep.mubr.f32.mxu0 0.0
    %169 = vmatmul.mubr.f32.gmra.mxu0 %v78
    %v170 = vpop.f32.mrf.mxu0
    %v171 = vadd.f32 %v56, %v170
    %v172 = vpop.f32.mrf.mxu0
    %v173 = vadd.f32 %v60, %v172
    %174 = vmatprep.mubr.f32.mxu0 0.0
    %175 = vmatmul.mubr.f32.gmra.mxu0 %v81
    %v176 = vpop.f32.mrf.mxu0
    %v177 = vadd.f32 %v56, %v176
    %v178 = vpop.f32.mrf.mxu0
    %v179 = vadd.f32 %v60, %v178
    %180 = vmatprep.mubr.f32.mxu0 0.0
    %181 = vmatmul.mubr.f32.gmra.mxu0 %v84
    %v182 = vpop.f32.mrf.mxu0
    %v183 = vadd.f32 %v56, %v182
    %v184 = vpop.f32.mrf.mxu0
    %v185 = vadd.f32 %v60, %v184
    %186 = vmatprep.mubr.f32.mxu0 0.0
    %187 = vmatmul.mubr.f32.gmra.mxu0 %v87
    %v188 = vpop.f32.mrf.mxu0
    %v189 = vadd.f32 %v56, %v188
    %v190 = vpop.f32.mrf.mxu0
    %v191 = vadd.f32 %v60, %v190
    %192 = vmatprep.mubr.f32.mxu0 0.0
    %193 = vmatmul.mubr.f32.gmra.mxu0 %v90
    %v194 = vpop.f32.mrf.mxu0
    %v195 = vadd.f32 %v56, %v194
    %v196 = vpop.f32.mrf.mxu0
    %v197 = vadd.f32 %v60, %v196
    %198 = vmatprep.mubr.f32.mxu0 0.0
    %199 = vmatmul.mubr.f32.gmra.mxu0 %v93
    %v200 = vpop.f32.mrf.mxu0
    %v201 = vadd.f32 %v56, %v200
    %v202 = vpop.f32.mrf.mxu0
    %v203 = vadd.f32 %v60, %v202
    %204 = vmatprep.mubr.f32.mxu0 0.0
    %205 = vmatmul.mubr.f32.gmra.mxu0 %v96
    %v206 = vpop.f32.mrf.mxu0
    %v207 = vadd.f32 %v56, %v206
    %v208 = vpop.f32.mrf.mxu0
    %v209 = vadd.f32 %v60, %v208
    %210 = vdwg.mxu0
    %211 = vmatprep.subr.mxu0 0.0
    %212 = vmatpush1.msra.mxu0 0.0
    %213 = vmatprep.subr.mxu0 0.0
    %214 = vmatpush1.msra.mxu0 0.0
    %215 = vmatprep.subr.mxu0 0.0
    %216 = vmatpush1.msra.mxu0 0.0
    %217 = vmatprep.subr.mxu0 0.0
    %218 = vmatpush1.msra.mxu0 0.0
    %219 = vmatprep.subr.mxu0 0.0
    %220 = vmatpush1.msra.mxu0 0.0
    %221 = vmatprep.subr.mxu0 0.0
    %222 = vmatpush1.msra.mxu0 0.0
    %223 = vmatprep.subr.mxu0 0.0
    %224 = vmatpush1.msra.mxu0 0.0
    %225 = vmatprep.subr.mxu0 0.0
    %226 = vmatpush1.msra.mxu0 0.0
    %227 = vmatprep.subr.mxu0 0.0
    %228 = vmatpush1.msra.mxu0 0.0
    %229 = vmatprep.subr.mxu0 0.0
    %230 = vmatpush1.msra.mxu0 0.0
    %231 = vmatprep.subr.mxu0 0.0
    %232 = vmatpush1.msra.mxu0 0.0
    %233 = vmatprep.subr.mxu0 0.0
    %234 = vmatpush1.msra.mxu0 0.0
    %235 = vmatprep.subr.mxu0 0.0
    %236 = vmatpush1.msra.mxu0 0.0
    %237 = vmatprep.subr.mxu0 0.0
    %238 = vmatpush1.msra.mxu0 0.0
    %239 = vmatprep.subr.mxu0 %v49
    %240 = vmatpush1.msra.mxu0 %v48
    %241 = vmatprep.subr.mxu0 %v45
    %242 = vmatpush1.msra.mxu0 %v44
    %243 = vmatprep.subr.mxu0 0.0
    %244 = vmatpush2.msra.mxu0 0.0
    %245 = vmatprep.subr.mxu0 0.0
    %246 = vmatpush2.msra.mxu0 0.0
    %247 = vmatprep.subr.mxu0 0.0
    %248 = vmatpush2.msra.mxu0 0.0
    %249 = vmatprep.subr.mxu0 0.0
    %250 = vmatpush2.msra.mxu0 0.0
    %251 = vmatprep.subr.mxu0 0.0
    %252 = vmatpush2.msra.mxu0 0.0
    %253 = vmatprep.subr.mxu0 0.0
    %254 = vmatpush2.msra.mxu0 0.0
    %255 = vmatprep.subr.mxu0 0.0
    %256 = vmatpush2.msra.mxu0 0.0
    %257 = vmatprep.subr.mxu0 0.0
    %258 = vmatpush2.msra.mxu0 0.0
    %259 = vmatprep.subr.mxu0 0.0
    %260 = vmatpush2.msra.mxu0 0.0
    %261 = vmatprep.subr.mxu0 0.0
    %262 = vmatpush2.msra.mxu0 0.0
    %263 = vmatprep.subr.mxu0 0.0
    %264 = vmatpush2.msra.mxu0 0.0
    %265 = vmatprep.subr.mxu0 0.0
    %266 = vmatpush2.msra.mxu0 0.0
    %267 = vmatprep.subr.mxu0 0.0
    %268 = vmatpush2.msra.mxu0 0.0
    %269 = vmatprep.subr.mxu0 0.0
    %270 = vmatpush2.msra.mxu0 0.0
    %271 = vmatprep.subr.mxu0 0.0
    %272 = vmatpush2.msra.mxu0 0.0
    %273 = vmatprep.subr.mxu0 0.0
    %274 = vmatpush2.msra.mxu0 0.0
    %275 = vmatprep.mubr.f32.mxu0 0.0
    %276 = vmatmul.mubr.f32.gmra.mxu0 %v75
    %v277 = vpop.f32.mrf.mxu0
    %v278 = vadd.f32 %v64, %v277
    %v279 = vpop.f32.mrf.mxu0
    %v280 = vadd.f32 %v68, %v279
    %281 = vmatprep.mubr.f32.mxu0 0.0
    %282 = vmatmul.mubr.f32.gmra.mxu0 %v78
    %v283 = vpop.f32.mrf.mxu0
    %v284 = vadd.f32 %v64, %v283
    %v285 = vpop.f32.mrf.mxu0
    %v286 = vadd.f32 %v68, %v285
    %287 = vmatprep.mubr.f32.mxu0 0.0
    %288 = vmatmul.mubr.f32.gmra.mxu0 %v81
    %v289 = vpop.f32.mrf.mxu0
    %v290 = vadd.f32 %v64, %v289
    %v291 = vpop.f32.mrf.mxu0
    %v292 = vadd.f32 %v68, %v291
    %293 = vmatprep.mubr.f32.mxu0 0.0
    %294 = vmatmul.mubr.f32.gmra.mxu0 %v84
    %v295 = vpop.f32.mrf.mxu0
    %v296 = vadd.f32 %v64, %v295
    %v297 = vpop.f32.mrf.mxu0
    %v298 = vadd.f32 %v68, %v297
    %299 = vmatprep.mubr.f32.mxu0 0.0
    %300 = vmatmul.mubr.f32.gmra.mxu0 %v87
    %v301 = vpop.f32.mrf.mxu0
    %v302 = vadd.f32 %v64, %v301
    %v303 = vpop.f32.mrf.mxu0
    %v304 = vadd.f32 %v68, %v303
    %305 = vmatprep.mubr.f32.mxu0 0.0
    %306 = vmatmul.mubr.f32.gmra.mxu0 %v90
    %v307 = vpop.f32.mrf.mxu0
    %v308 = vadd.f32 %v64, %v307
    %v309 = vpop.f32.mrf.mxu0
    %v310 = vadd.f32 %v68, %v309
    %311 = vmatprep.mubr.f32.mxu0 0.0
    %312 = vmatmul.mubr.f32.gmra.mxu0 %v93
    %v313 = vpop.f32.mrf.mxu0
    %v314 = vadd.f32 %v64, %v313
    %v315 = vpop.f32.mrf.mxu0
    %v316 = vadd.f32 %v68, %v315
    %317 = vmatprep.mubr.f32.mxu0 0.0
    %318 = vmatmul.mubr.f32.gmra.mxu0 %v96
    %v319 = vpop.f32.mrf.mxu0
    %v320 = vadd.f32 %v64, %v319
    %v321 = vpop.f32.mrf.mxu0
    %v322 = vadd.f32 %v68, %v321
    %323 = vdwg.mxu0
    %324 = vst [vmem:[#allocation2] sm:$0xff] %v165
    %325 = vst [vmem:[#allocation2 + $0x8] sm:$0xff] %v167
    %326 = vst [vmem:[#allocation2 + $0x10] sm:$0xff] %v278
    %327 = vst [vmem:[#allocation2 + $0x18] sm:$0xff] %v280
    %328 = vst [vmem:[#allocation2 + $0x20] sm:$0xff] %v171
    %329 = vst [vmem:[#allocation2 + $0x28] sm:$0xff] %v173
    %330 = vst [vmem:[#allocation2 + $0x30] sm:$0xff] %v284
    %331 = vst [vmem:[#allocation2 + $0x38] sm:$0xff] %v286
    %332 = vst [vmem:[#allocation2 + $0x40] sm:$0xff] %v177
    %333 = vst [vmem:[#allocation2 + $0x48] sm:$0xff] %v179
    %334 = vst [vmem:[#allocation2 + $0x50] sm:$0xff] %v290
    %335 = vst [vmem:[#allocation2 + $0x58] sm:$0xff] %v292
    %336 = vst [vmem:[#allocation2 + $0x60] sm:$0xff] %v183
    %337 = vst [vmem:[#allocation2 + $0x68] sm:$0xff] %v185
    %338 = vst [vmem:[#allocation2 + $0x70] sm:$0xff] %v296
    %339 = vst [vmem:[#allocation2 + $0x78] sm:$0xff] %v298
    %340 = vst [vmem:[#allocation2 + $0x80] sm:$0xff] %v189
    %341 = vst [vmem:[#allocation2 + $0x88] sm:$0xff] %v191
    %342 = vst [vmem:[#allocation2 + $0x90] sm:$0xff] %v302
    %343 = vst [vmem:[#allocation2 + $0x98] sm:$0xff] %v304
    %344 = vst [vmem:[#allocation2 + $0xa0] sm:$0xff] %v195
    %345 = vst [vmem:[#allocation2 + $0xa8] sm:$0xff] %v197
    %346 = vst [vmem:[#allocation2 + $0xb0] sm:$0xff] %v308
    %347 = vst [vmem:[#allocation2 + $0xb8] sm:$0xff] %v310
    %348 = vst [vmem:[#allocation2 + $0xc0] sm:$0xff] %v201
    %349 = vst [vmem:[#allocation2 + $0xc8] sm:$0xff] %v203
    %350 = vst [vmem:[#allocation2 + $0xd0] sm:$0xff] %v314
    %351 = vst [vmem:[#allocation2 + $0xd8] sm:$0xff] %v316
    %352 = vst [vmem:[#allocation2 + $0xe0] sm:$0xff] %v207
    %353 = vst [vmem:[#allocation2 + $0xe8] sm:$0xff] %v209
    %354 = vst [vmem:[#allocation2 + $0xf0] sm:$0xff] %v320
    %355 = vst [vmem:[#allocation2 + $0xf8] sm:$0xff] %v322
    %v356 = vld [vmem:[#allocation2] sm:$0xff]
    %v357 = vld [vmem:[#allocation2 + $0x8] sm:$0xff]
    %v358 = vld [vmem:[#allocation2 + $0x10] sm:$0xff]
    %v359 = vld [vmem:[#allocation2 + $0x18] sm:$0xff]
    %v360 = vmul.f32 %v356, 0.5
    %v361 = vmul.f32 %v357, 0.5
    %v362 = vmul.f32 %v358, 0.5
    %v363 = vtanh.pop %v360
    %v364 = vtanh.pop %v361
    %v365 = vtanh.pop %v362
    %v366 = vadd.f32 %v363, 1.0
    %v367 = vadd.f32 %v364, 1.0
    %v368 = vadd.f32 %v365, 1.0
    %v369 = vmul.f32 %v366, 0.5
    %v370 = vmul.f32 %v367, 0.5
    %v371 = vmul.f32 %v368, 0.5
    %v372 = vtanh.pop %v359
    %v373 = vmul.f32 %v370, 0.0
    %v374 = vmul.f32 %v369, %v372
    %v375 = vadd.f32 %v373, %v374
    %v376 = vtanh.pop %v375
    %v377 = vmul.f32 %v371, %v376
    %vm378 = vcmask 523264
    %379 = vst.msk [vmem:[#allocation3] sm:$0xff] %vm378, %v377
    %vm380 = vcmask 1048064
    %381 = vst.msk [vmem:[#allocation3 + $0x38] sm:$0xff] %vm380, %v377
    %v382 = vld [vmem:[#allocation2 + $0x20] sm:$0xff]
    %v383 = vld [vmem:[#allocation2 + $0x28] sm:$0xff]
    %v384 = vld [vmem:[#allocation2 + $0x30] sm:$0xff]
    %v385 = vld [vmem:[#allocation2 + $0x38] sm:$0xff]
    %v386 = vld [vmem:[%s1] sm:$0xff]
    %v387 = vld [vmem:[%s1 + $0x8] sm:$0xff]
    %v388 = vld [vmem:[%s1 + $0x10] sm:$0xff]
    %v389 = vld [vmem:[%s1 + $0x18] sm:$0xff]
    %v390 = vld [vmem:[%s1 + $0x20] sm:$0xff]
    %v391 = vld [vmem:[%s1 + $0x28] sm:$0xff]
    %v392 = vld [vmem:[%s1 + $0x30] sm:$0xff]
    %v393 = vld [vmem:[%s1 + $0x38] sm:$0xff]
    %v394 = vld [vmem:[%s1 + $0x40] sm:$0xff]
    %v395 = vld [vmem:[%s1 + $0x48] sm:$0xff]
    %v396 = vld [vmem:[%s1 + $0x50] sm:$0xff]
    %v397 = vld [vmem:[%s1 + $0x58] sm:$0xff]
    %v398 = vld [vmem:[%s1 + $0x60] sm:$0xff]
    %v399 = vld [vmem:[%s1 + $0x68] sm:$0xff]
    %v400 = vld [vmem:[%s1 + $0x70] sm:$0xff]
    %v401 = vld [vmem:[%s1 + $0x78] sm:$0xff]
    %v402 = vld [vmem:[%s1 + $0x80] sm:$0xff]
    %v403 = vld [vmem:[%s1 + $0x88] sm:$0xff]
    %v404 = vld [vmem:[%s1 + $0x90] sm:$0xff]
    %v405 = vld [vmem:[%s1 + $0x98] sm:$0xff]
    %v406 = vld [vmem:[%s1 + $0xa0] sm:$0xff]
    %v407 = vld [vmem:[%s1 + $0xa8] sm:$0xff]
    %v408 = vld [vmem:[%s1 + $0xb0] sm:$0xff]
    %v409 = vld [vmem:[%s1 + $0xb8] sm:$0xff]
    %v410 = vld [vmem:[%s1 + $0xc0] sm:$0xff]
    %v411 = vld [vmem:[%s1 + $0xc8] sm:$0xff]
    %v412 = vld [vmem:[%s1 + $0xd0] sm:$0xff]
    %v413 = vld [vmem:[%s1 + $0xd8] sm:$0xff]
    %v414 = vld [vmem:[%s1 + $0xe0] sm:$0xff]
    %v415 = vld [vmem:[%s1 + $0xe8] sm:$0xff]
    %v416 = vld [vmem:[%s1 + $0xf0] sm:$0xff]
    %v417 = vld [vmem:[%s1 + $0xf8] sm:$0xff]
    %v418 = vld [vmem:[%s1 + $0x100] sm:$0xff]
    %v419 = vld [vmem:[%s1 + $0x108] sm:$0xff]
    %v420 = vld [vmem:[%s1 + $0x110] sm:$0xff]
    %v421 = vld [vmem:[%s1 + $0x118] sm:$0xff]
    %v422 = vld [vmem:[%s1 + $0x120] sm:$0xff]
    %v423 = vld [vmem:[%s1 + $0x128] sm:$0xff]
    %v424 = vld [vmem:[%s1 + $0x130] sm:$0xff]
    %v425 = vld [vmem:[%s1 + $0x138] sm:$0xff]
    %v426 = vld [vmem:[%s1 + $0x140] sm:$0xff]
    %v427 = vld [vmem:[%s1 + $0x148] sm:$0xff]
    %v428 = vld [vmem:[%s1 + $0x150] sm:$0xff]
    %v429 = vld [vmem:[%s1 + $0x158] sm:$0xff]
    %v430 = vld [vmem:[%s1 + $0x160] sm:$0xff]
    %v431 = vld [vmem:[%s1 + $0x168] sm:$0xff]
    %v432 = vld [vmem:[%s1 + $0x170] sm:$0xff]
    %v433 = vld [vmem:[%s1 + $0x178] sm:$0xff]
    %v434 = vld [vmem:[%s1 + $0x180] sm:$0xff]
    %v435 = vld [vmem:[%s1 + $0x188] sm:$0xff]
    %v436 = vld [vmem:[%s1 + $0x190] sm:$0xff]
    %v437 = vld [vmem:[%s1 + $0x198] sm:$0xff]
    %v438 = vld [vmem:[%s1 + $0x1a0] sm:$0xff]
    %v439 = vld [vmem:[%s1 + $0x1a8] sm:$0xff]
    %v440 = vld [vmem:[%s1 + $0x1b0] sm:$0xff]
    %v441 = vld [vmem:[%s1 + $0x1b8] sm:$0xff]
    %v442 = vld [vmem:[%s1 + $0x1c0] sm:$0xff]
    %v443 = vld [vmem:[%s1 + $0x1c8] sm:$0xff]
    %v444 = vld [vmem:[%s1 + $0x1d0] sm:$0xff]
    %v445 = vld [vmem:[%s1 + $0x1d8] sm:$0xff]
    %v446 = vld [vmem:[%s1 + $0x1e0] sm:$0xff]
    %v447 = vld [vmem:[%s1 + $0x1e8] sm:$0xff]
    %v448 = vld [vmem:[%s1 + $0x1f0] sm:$0xff]
    %v449 = vld [vmem:[%s1 + $0x1f8] sm:$0xff]
    %450 = vmatprep.subr.mxu0 %v447
    %451 = vmatpush1.msra.mxu0 %v446
    %452 = vmatprep.subr.mxu0 %v443
    %453 = vmatpush1.msra.mxu0 %v442
    %454 = vmatprep.subr.mxu0 %v439
    %455 = vmatpush1.msra.mxu0 %v438
    %456 = vmatprep.subr.mxu0 %v435
    %457 = vmatpush1.msra.mxu0 %v434
    %458 = vmatprep.subr.mxu0 %v431
    %459 = vmatpush1.msra.mxu0 %v430
    %460 = vmatprep.subr.mxu0 %v427
    %461 = vmatpush1.msra.mxu0 %v426
    %462 = vmatprep.subr.mxu0 %v423
    %463 = vmatpush1.msra.mxu0 %v422
    %464 = vmatprep.subr.mxu0 %v419
    %465 = vmatpush1.msra.mxu0 %v418
    %466 = vmatprep.subr.mxu0 %v415
    %467 = vmatpush1.msra.mxu0 %v414
    %468 = vmatprep.subr.mxu0 %v411
    %469 = vmatpush1.msra.mxu0 %v410
    %470 = vmatprep.subr.mxu0 %v407
    %471 = vmatpush1.msra.mxu0 %v406
    %472 = vmatprep.subr.mxu0 %v403
    %473 = vmatpush1.msra.mxu0 %v402
    %474 = vmatprep.subr.mxu0 %v399
    %475 = vmatpush1.msra.mxu0 %v398
    %476 = vmatprep.subr.mxu0 %v395
    %477 = vmatpush1.msra.mxu0 %v394
    %478 = vmatprep.subr.mxu0 %v391
    %479 = vmatpush1.msra.mxu0 %v390
    %480 = vmatprep.subr.mxu0 %v387
    %481 = vmatpush1.msra.mxu0 %v386
    %482 = vmatprep.subr.mxu0 0.0
    %483 = vmatpush2.msra.mxu0 0.0
    %484 = vmatprep.subr.mxu0 0.0
    %485 = vmatpush2.msra.mxu0 0.0
    %486 = vmatprep.subr.mxu0 0.0
    %487 = vmatpush2.msra.mxu0 0.0
    %488 = vmatprep.subr.mxu0 0.0
    %489 = vmatpush2.msra.mxu0 0.0
    %490 = vmatprep.subr.mxu0 0.0
    %491 = vmatpush2.msra.mxu0 0.0
    %492 = vmatprep.subr.mxu0 0.0
    %493 = vmatpush2.msra.mxu0 0.0
    %494 = vmatprep.subr.mxu0 0.0
    %495 = vmatpush2.msra.mxu0 0.0
    %496 = vmatprep.subr.mxu0 0.0
    %497 = vmatpush2.msra.mxu0 0.0
    %498 = vmatprep.subr.mxu0 0.0
    %499 = vmatpush2.msra.mxu0 0.0
    %500 = vmatprep.subr.mxu0 0.0
    %501 = vmatpush2.msra.mxu0 0.0
    %502 = vmatprep.subr.mxu0 0.0
    %503 = vmatpush2.msra.mxu0 0.0
    %504 = vmatprep.subr.mxu0 0.0
    %505 = vmatpush2.msra.mxu0 0.0
    %506 = vmatprep.subr.mxu0 0.0
    %507 = vmatpush2.msra.mxu0 0.0
    %508 = vmatprep.subr.mxu0 0.0
    %509 = vmatpush2.msra.mxu0 0.0
    %510 = vmatprep.subr.mxu0 0.0
    %511 = vmatpush2.msra.mxu0 0.0
    %512 = vmatprep.subr.mxu0 0.0
    %513 = vmatpush2.msra.mxu0 0.0
    %514 = vmatprep.mubr.f32.mxu0 0.0
    %515 = vmatmul.mubr.f32.gmra.mxu0 %v377
    %v516 = vpop.f32.mrf.mxu0
    %v517 = vadd.f32 0.0, %v516
    %v518 = vpop.f32.mrf.mxu0
    %v519 = vadd.f32 0.0, %v518
    %520 = vdwg.mxu0
    %521 = vmatprep.subr.mxu0 %v449
    %522 = vmatpush1.msra.mxu0 %v448
    %523 = vmatprep.subr.mxu0 %v445
    %524 = vmatpush1.msra.mxu0 %v444
    %525 = vmatprep.subr.mxu0 %v441
    %526 = vmatpush1.msra.mxu0 %v440
    %527 = vmatprep.subr.mxu0 %v437
    %528 = vmatpush1.msra.mxu0 %v436
    %529 = vmatprep.subr.mxu0 %v433
    %530 = vmatpush1.msra.mxu0 %v432
    %531 = vmatprep.subr.mxu0 %v429
    %532 = vmatpush1.msra.mxu0 %v428
    %533 = vmatprep.subr.mxu0 %v425
    %534 = vmatpush1.msra.mxu0 %v424
    %535 = vmatprep.subr.mxu0 %v421
    %536 = vmatpush1.msra.mxu0 %v420
    %537 = vmatprep.subr.mxu0 %v417
    %538 = vmatpush1.msra.mxu0 %v416
    %539 = vmatprep.subr.mxu0 %v413
    %540 = vmatpush1.msra.mxu0 %v412
    %541 = vmatprep.subr.mxu0 %v409
    %542 = vmatpush1.msra.mxu0 %v408
    %543 = vmatprep.subr.mxu0 %v405
    %544 = vmatpush1.msra.mxu0 %v404
    %545 = vmatprep.subr.mxu0 %v401
    %546 = vmatpush1.msra.mxu0 %v400
    %547 = vmatprep.subr.mxu0 %v397
    %548 = vmatpush1.msra.mxu0 %v396
    %549 = vmatprep.subr.mxu0 %v393
    %550 = vmatpush1.msra.mxu0 %v392
    %551 = vmatprep.subr.mxu0 %v389
    %552 = vmatpush1.msra.mxu0 %v388
    %553 = vmatprep.subr.mxu0 0.0
    %554 = vmatpush2.msra.mxu0 0.0
    %555 = vmatprep.subr.mxu0 0.0
    %556 = vmatpush2.msra.mxu0 0.0
    %557 = vmatprep.subr.mxu0 0.0
    %558 = vmatpush2.msra.mxu0 0.0
    %559 = vmatprep.subr.mxu0 0.0
    %560 = vmatpush2.msra.mxu0 0.0
    %561 = vmatprep.subr.mxu0 0.0
    %562 = vmatpush2.msra.mxu0 0.0
    %563 = vmatprep.subr.mxu0 0.0
    %564 = vmatpush2.msra.mxu0 0.0
    %565 = vmatprep.subr.mxu0 0.0
    %566 = vmatpush2.msra.mxu0 0.0
    %567 = vmatprep.subr.mxu0 0.0
    %568 = vmatpush2.msra.mxu0 0.0
    %569 = vmatprep.subr.mxu0 0.0
    %570 = vmatpush2.msra.mxu0 0.0
    %571 = vmatprep.subr.mxu0 0.0
    %572 = vmatpush2.msra.mxu0 0.0
    %573 = vmatprep.subr.mxu0 0.0
    %574 = vmatpush2.msra.mxu0 0.0
    %575 = vmatprep.subr.mxu0 0.0
    %576 = vmatpush2.msra.mxu0 0.0
    %577 = vmatprep.subr.mxu0 0.0
    %578 = vmatpush2.msra.mxu0 0.0
    %579 = vmatprep.subr.mxu0 0.0
    %580 = vmatpush2.msra.mxu0 0.0
    %581 = vmatprep.subr.mxu0 0.0
    %582 = vmatpush2.msra.mxu0 0.0
    %583 = vmatprep.subr.mxu0 0.0
    %584 = vmatpush2.msra.mxu0 0.0
    %585 = vmatprep.mubr.f32.mxu0 0.0
    %586 = vmatmul.mubr.f32.gmra.mxu0 %v377
    %v587 = vpop.f32.mrf.mxu0
    %v588 = vadd.f32 0.0, %v587
    %v589 = vpop.f32.mrf.mxu0
    %v590 = vadd.f32 0.0, %v589
    %591 = vdwg.mxu0
    %v592 = vadd.f32 %v382, %v517
    %v593 = vadd.f32 %v383, %v519
    %v594 = vadd.f32 %v384, %v588
    %v595 = vadd.f32 %v385, %v590
    %v596 = vmul.f32 %v592, 0.5
    %v597 = vmul.f32 %v593, 0.5
    %v598 = vmul.f32 %v594, 0.5
    %v599 = vtanh.pop %v596
    %v600 = vtanh.pop %v597
    %v601 = vtanh.pop %v598
    %v602 = vadd.f32 %v599, 1.0
    %v603 = vadd.f32 %v600, 1.0
    %v604 = vadd.f32 %v601, 1.0
    %v605 = vmul.f32 %v602, 0.5
    %v606 = vmul.f32 %v603, 0.5
    %v607 = vmul.f32 %v604, 0.5
    %v608 = vtanh.pop %v595
    %v609 = vmul.f32 %v606, %v375
    %v610 = vmul.f32 %v605, %v608
    %v611 = vadd.f32 %v609, %v610
    %v612 = vtanh.pop %v611
    %v613 = vmul.f32 %v607, %v612
    %614 = vst.msk [vmem:[#allocation3 + $0x8] sm:$0xff] %vm378, %v613
    %615 = vst.msk [vmem:[#allocation3 + $0x30] sm:$0xff] %vm380, %v613
    %v616 = vld [vmem:[#allocation2 + $0x40] sm:$0xff]
    %v617 = vld [vmem:[#allocation2 + $0x48] sm:$0xff]
    %v618 = vld [vmem:[#allocation2 + $0x50] sm:$0xff]
    %v619 = vld [vmem:[#allocation2 + $0x58] sm:$0xff]
    %v620 = vld [vmem:[%s1] sm:$0xff]
    %v621 = vld [vmem:[%s1 + $0x8] sm:$0xff]
    %v622 = vld [vmem:[%s1 + $0x10] sm:$0xff]
    %v623 = vld [vmem:[%s1 + $0x18] sm:$0xff]
    %v624 = vld [vmem:[%s1 + $0x20] sm:$0xff]
    %v625 = vld [vmem:[%s1 + $0x28] sm:$0xff]
    %v626 = vld [vmem:[%s1 + $0x30] sm:$0xff]
    %v627 = vld [vmem:[%s1 + $0x38] sm:$0xff]
    %v628 = vld [vmem:[%s1 + $0x40] sm:$0xff]
    %v629 = vld [vmem:[%s1 + $0x48] sm:$0xff]
    %v630 = vld [vmem:[%s1 + $0x50] sm:$0xff]
    %v631 = vld [vmem:[%s1 + $0x58] sm:$0xff]
    %v632 = vld [vmem:[%s1 + $0x60] sm:$0xff]
    %v633 = vld [vmem:[%s1 + $0x68] sm:$0xff]
    %v634 = vld [vmem:[%s1 + $0x70] sm:$0xff]
    %v635 = vld [vmem:[%s1 + $0x78] sm:$0xff]
    %v636 = vld [vmem:[%s1 + $0x80] sm:$0xff]
    %v637 = vld [vmem:[%s1 + $0x88] sm:$0xff]
    %v638 = vld [vmem:[%s1 + $0x90] sm:$0xff]
    %v639 = vld [vmem:[%s1 + $0x98] sm:$0xff]
    %v640 = vld [vmem:[%s1 + $0xa0] sm:$0xff]
    %v641 = vld [vmem:[%s1 + $0xa8] sm:$0xff]
    %v642 = vld [vmem:[%s1 + $0xb0] sm:$0xff]
    %v643 = vld [vmem:[%s1 + $0xb8] sm:$0xff]
    %v644 = vld [vmem:[%s1 + $0xc0] sm:$0xff]
    %v645 = vld [vmem:[%s1 + $0xc8] sm:$0xff]
    %v646 = vld [vmem:[%s1 + $0xd0] sm:$0xff]
    %v647 = vld [vmem:[%s1 + $0xd8] sm:$0xff]
    %v648 = vld [vmem:[%s1 + $0xe0] sm:$0xff]
    %v649 = vld [vmem:[%s1 + $0xe8] sm:$0xff]
    %v650 = vld [vmem:[%s1 + $0xf0] sm:$0xff]
    %v651 = vld [vmem:[%s1 + $0xf8] sm:$0xff]
    %v652 = vld [vmem:[%s1 + $0x100] sm:$0xff]
    %v653 = vld [vmem:[%s1 + $0x108] sm:$0xff]
    %v654 = vld [vmem:[%s1 + $0x110] sm:$0xff]
    %v655 = vld [vmem:[%s1 + $0x118] sm:$0xff]
    %v656 = vld [vmem:[%s1 + $0x120] sm:$0xff]
    %v657 = vld [vmem:[%s1 + $0x128] sm:$0xff]
    %v658 = vld [vmem:[%s1 + $0x130] sm:$0xff]
    %v659 = vld [vmem:[%s1 + $0x138] sm:$0xff]
    %v660 = vld [vmem:[%s1 + $0x140] sm:$0xff]
    %v661 = vld [vmem:[%s1 + $0x148] sm:$0xff]
    %v662 = vld [vmem:[%s1 + $0x150] sm:$0xff]
    %v663 = vld [vmem:[%s1 + $0x158] sm:$0xff]
    %v664 = vld [vmem:[%s1 + $0x160] sm:$0xff]
    %v665 = vld [vmem:[%s1 + $0x168] sm:$0xff]
    %v666 = vld [vmem:[%s1 + $0x170] sm:$0xff]
    %v667 = vld [vmem:[%s1 + $0x178] sm:$0xff]
    %v668 = vld [vmem:[%s1 + $0x180] sm:$0xff]
    %v669 = vld [vmem:[%s1 + $0x188] sm:$0xff]
    %v670 = vld [vmem:[%s1 + $0x190] sm:$0xff]
    %v671 = vld [vmem:[%s1 + $0x198] sm:$0xff]
    %v672 = vld [vmem:[%s1 + $0x1a0] sm:$0xff]
    %v673 = vld [vmem:[%s1 + $0x1a8] sm:$0xff]
    %v674 = vld [vmem:[%s1 + $0x1b0] sm:$0xff]
    %v675 = vld [vmem:[%s1 + $0x1b8] sm:$0xff]
    %v676 = vld [vmem:[%s1 + $0x1c0] sm:$0xff]
    %v677 = vld [vmem:[%s1 + $0x1c8] sm:$0xff]
    %v678 = vld [vmem:[%s1 + $0x1d0] sm:$0xff]
    %v679 = vld [vmem:[%s1 + $0x1d8] sm:$0xff]
    %v680 = vld [vmem:[%s1 + $0x1e0] sm:$0xff]
    %v681 = vld [vmem:[%s1 + $0x1e8] sm:$0xff]
    %v682 = vld [vmem:[%s1 + $0x1f0] sm:$0xff]
    %v683 = vld [vmem:[%s1 + $0x1f8] sm:$0xff]
    %684 = vmatprep.subr.mxu0 %v681
    %685 = vmatpush1.msra.mxu0 %v680
    %686 = vmatprep.subr.mxu0 %v677
    %687 = vmatpush1.msra.mxu0 %v676
    %688 = vmatprep.subr.mxu0 %v673
    %689 = vmatpush1.msra.mxu0 %v672
    %690 = vmatprep.subr.mxu0 %v669
    %691 = vmatpush1.msra.mxu0 %v668
    %692 = vmatprep.subr.mxu0 %v665
    %693 = vmatpush1.msra.mxu0 %v664
    %694 = vmatprep.subr.mxu0 %v661
    %695 = vmatpush1.msra.mxu0 %v660
    %696 = vmatprep.subr.mxu0 %v657
    %697 = vmatpush1.msra.mxu0 %v656
    %698 = vmatprep.subr.mxu0 %v653
    %699 = vmatpush1.msra.mxu0 %v652
    %700 = vmatprep.subr.mxu0 %v649
    %701 = vmatpush1.msra.mxu0 %v648
    %702 = vmatprep.subr.mxu0 %v645
    %703 = vmatpush1.msra.mxu0 %v644
    %704 = vmatprep.subr.mxu0 %v641
    %705 = vmatpush1.msra.mxu0 %v640
    %706 = vmatprep.subr.mxu0 %v637
    %707 = vmatpush1.msra.mxu0 %v636
    %708 = vmatprep.subr.mxu0 %v633
    %709 = vmatpush1.msra.mxu0 %v632
    %710 = vmatprep.subr.mxu0 %v629
    %711 = vmatpush1.msra.mxu0 %v628
    %712 = vmatprep.subr.mxu0 %v625
    %713 = vmatpush1.msra.mxu0 %v624
    %714 = vmatprep.subr.mxu0 %v621
    %715 = vmatpush1.msra.mxu0 %v620
    %716 = vmatprep.subr.mxu0 0.0
    %717 = vmatpush2.msra.mxu0 0.0
    %718 = vmatprep.subr.mxu0 0.0
    %719 = vmatpush2.msra.mxu0 0.0
    %720 = vmatprep.subr.mxu0 0.0
    %721 = vmatpush2.msra.mxu0 0.0
    %722 = vmatprep.subr.mxu0 0.0
    %723 = vmatpush2.msra.mxu0 0.0
    %724 = vmatprep.subr.mxu0 0.0
    %725 = vmatpush2.msra.mxu0 0.0
    %726 = vmatprep.subr.mxu0 0.0
    %727 = vmatpush2.msra.mxu0 0.0
    %728 = vmatprep.subr.mxu0 0.0
    %729 = vmatpush2.msra.mxu0 0.0
    %730 = vmatprep.subr.mxu0 0.0
    %731 = vmatpush2.msra.mxu0 0.0
    %732 = vmatprep.subr.mxu0 0.0
    %733 = vmatpush2.msra.mxu0 0.0
    %734 = vmatprep.subr.mxu0 0.0
    %735 = vmatpush2.msra.mxu0 0.0
    %736 = vmatprep.subr.mxu0 0.0
    %737 = vmatpush2.msra.mxu0 0.0
    %738 = vmatprep.subr.mxu0 0.0
    %739 = vmatpush2.msra.mxu0 0.0
    %740 = vmatprep.subr.mxu0 0.0
    %741 = vmatpush2.msra.mxu0 0.0
    %742 = vmatprep.subr.mxu0 0.0
    %743 = vmatpush2.msra.mxu0 0.0
    %744 = vmatprep.subr.mxu0 0.0
    %745 = vmatpush2.msra.mxu0 0.0
    %746 = vmatprep.subr.mxu0 0.0
    %747 = vmatpush2.msra.mxu0 0.0
    %748 = vmatprep.mubr.f32.mxu0 0.0
    %749 = vmatmul.mubr.f32.gmra.mxu0 %v613
    %v750 = vpop.f32.mrf.mxu0
    %v751 = vadd.f32 0.0, %v750
    %v752 = vpop.f32.mrf.mxu0
    %v753 = vadd.f32 0.0, %v752
    %754 = vdwg.mxu0
    %755 = vmatprep.subr.mxu0 %v683
    %756 = vmatpush1.msra.mxu0 %v682
    %757 = vmatprep.subr.mxu0 %v679
    %758 = vmatpush1.msra.mxu0 %v678
    %759 = vmatprep.subr.mxu0 %v675
    %760 = vmatpush1.msra.mxu0 %v674
    %761 = vmatprep.subr.mxu0 %v671
    %762 = vmatpush1.msra.mxu0 %v670
    %763 = vmatprep.subr.mxu0 %v667
    %764 = vmatpush1.msra.mxu0 %v666
    %765 = vmatprep.subr.mxu0 %v663
    %766 = vmatpush1.msra.mxu0 %v662
    %767 = vmatprep.subr.mxu0 %v659
    %768 = vmatpush1.msra.mxu0 %v658
    %769 = vmatprep.subr.mxu0 %v655
    %770 = vmatpush1.msra.mxu0 %v654
    %771 = vmatprep.subr.mxu0 %v651
    %772 = vmatpush1.msra.mxu0 %v650
    %773 = vmatprep.subr.mxu0 %v647
    %774 = vmatpush1.msra.mxu0 %v646
    %775 = vmatprep.subr.mxu0 %v643
    %776 = vmatpush1.msra.mxu0 %v642
    %777 = vmatprep.subr.mxu0 %v639
    %778 = vmatpush1.msra.mxu0 %v638
    %779 = vmatprep.subr.mxu0 %v635
    %780 = vmatpush1.msra.mxu0 %v634
    %781 = vmatprep.subr.mxu0 %v631
    %782 = vmatpush1.msra.mxu0 %v630
    %783 = vmatprep.subr.mxu0 %v627
    %784 = vmatpush1.msra.mxu0 %v626
    %785 = vmatprep.subr.mxu0 %v623
    %786 = vmatpush1.msra.mxu0 %v622
    %787 = vmatprep.subr.mxu0 0.0
    %788 = vmatpush2.msra.mxu0 0.0
    %789 = vmatprep.subr.mxu0 0.0
    %790 = vmatpush2.msra.mxu0 0.0
    %791 = vmatprep.subr.mxu0 0.0
    %792 = vmatpush2.msra.mxu0 0.0
    %793 = vmatprep.subr.mxu0 0.0
    %794 = vmatpush2.msra.mxu0 0.0
    %795 = vmatprep.subr.mxu0 0.0
    %796 = vmatpush2.msra.mxu0 0.0
    %797 = vmatprep.subr.mxu0 0.0
    %798 = vmatpush2.msra.mxu0 0.0
    %799 = vmatprep.subr.mxu0 0.0
    %800 = vmatpush2.msra.mxu0 0.0
    %801 = vmatprep.subr.mxu0 0.0
    %802 = vmatpush2.msra.mxu0 0.0
    %803 = vmatprep.subr.mxu0 0.0
    %804 = vmatpush2.msra.mxu0 0.0
    %805 = vmatprep.subr.mxu0 0.0
    %806 = vmatpush2.msra.mxu0 0.0
    %807 = vmatprep.subr.mxu0 0.0
    %808 = vmatpush2.msra.mxu0 0.0
    %809 = vmatprep.subr.mxu0 0.0
    %810 = vmatpush2.msra.mxu0 0.0
    %811 = vmatprep.subr.mxu0 0.0
    %812 = vmatpush2.msra.mxu0 0.0
    %813 = vmatprep.subr.mxu0 0.0
    %814 = vmatpush2.msra.mxu0 0.0
    %815 = vmatprep.subr.mxu0 0.0
    %816 = vmatpush2.msra.mxu0 0.0
    %817 = vmatprep.subr.mxu0 0.0
    %818 = vmatpush2.msra.mxu0 0.0
    %819 = vmatprep.mubr.f32.mxu0 0.0
    %820 = vmatmul.mubr.f32.gmra.mxu0 %v613
    %v821 = vpop.f32.mrf.mxu0
    %v822 = vadd.f32 0.0, %v821
    %v823 = vpop.f32.mrf.mxu0
    %v824 = vadd.f32 0.0, %v823
    %825 = vdwg.mxu0
    %v826 = vadd.f32 %v616, %v751
    %v827 = vadd.f32 %v617, %v753
    %v828 = vadd.f32 %v618, %v822
    %v829 = vadd.f32 %v619, %v824
    %v830 = vmul.f32 %v826, 0.5
    %v831 = vmul.f32 %v827, 0.5
    %v832 = vmul.f32 %v828, 0.5
    %v833 = vtanh.pop %v830
    %v834 = vtanh.pop %v831
    %v835 = vtanh.pop %v832
    %v836 = vadd.f32 %v833, 1.0
    %v837 = vadd.f32 %v834, 1.0
    %v838 = vadd.f32 %v835, 1.0
    %v839 = vmul.f32 %v836, 0.5
    %v840 = vmul.f32 %v837, 0.5
    %v841 = vmul.f32 %v838, 0.5
    %v842 = vtanh.pop %v829
    %v843 = vmul.f32 %v840, %v611
    %v844 = vmul.f32 %v839, %v842
    %v845 = vadd.f32 %v843, %v844
    %v846 = vtanh.pop %v845
    %v847 = vmul.f32 %v841, %v846
    %848 = vst.msk [vmem:[#allocation3 + $0x10] sm:$0xff] %vm378, %v847
    %849 = vst.msk [vmem:[#allocation3 + $0x28] sm:$0xff] %vm380, %v847
    %v850 = vld [vmem:[#allocation2 + $0x60] sm:$0xff]
    %v851 = vld [vmem:[#allocation2 + $0x68] sm:$0xff]
    %v852 = vld [vmem:[#allocation2 + $0x70] sm:$0xff]
    %v853 = vld [vmem:[#allocation2 + $0x78] sm:$0xff]
    %v854 = vld [vmem:[%s1] sm:$0xff]
    %v855 = vld [vmem:[%s1 + $0x8] sm:$0xff]
    %v856 = vld [vmem:[%s1 + $0x10] sm:$0xff]
    %v857 = vld [vmem:[%s1 + $0x18] sm:$0xff]
    %v858 = vld [vmem:[%s1 + $0x20] sm:$0xff]
    %v859 = vld [vmem:[%s1 + $0x28] sm:$0xff]
    %v860 = vld [vmem:[%s1 + $0x30] sm:$0xff]
    %v861 = vld [vmem:[%s1 + $0x38] sm:$0xff]
    %v862 = vld [vmem:[%s1 + $0x40] sm:$0xff]
    %v863 = vld [vmem:[%s1 + $0x48] sm:$0xff]
    %v864 = vld [vmem:[%s1 + $0x50] sm:$0xff]
    %v865 = vld [vmem:[%s1 + $0x58] sm:$0xff]
    %v866 = vld [vmem:[%s1 + $0x60] sm:$0xff]
    %v867 = vld [vmem:[%s1 + $0x68] sm:$0xff]
    %v868 = vld [vmem:[%s1 + $0x70] sm:$0xff]
    %v869 = vld [vmem:[%s1 + $0x78] sm:$0xff]
    %v870 = vld [vmem:[%s1 + $0x80] sm:$0xff]
    %v871 = vld [vmem:[%s1 + $0x88] sm:$0xff]
    %v872 = vld [vmem:[%s1 + $0x90] sm:$0xff]
    %v873 = vld [vmem:[%s1 + $0x98] sm:$0xff]
    %v874 = vld [vmem:[%s1 + $0xa0] sm:$0xff]
    %v875 = vld [vmem:[%s1 + $0xa8] sm:$0xff]
    %v876 = vld [vmem:[%s1 + $0xb0] sm:$0xff]
    %v877 = vld [vmem:[%s1 + $0xb8] sm:$0xff]
    %v878 = vld [vmem:[%s1 + $0xc0] sm:$0xff]
    %v879 = vld [vmem:[%s1 + $0xc8] sm:$0xff]
    %v880 = vld [vmem:[%s1 + $0xd0] sm:$0xff]
    %v881 = vld [vmem:[%s1 + $0xd8] sm:$0xff]
    %v882 = vld [vmem:[%s1 + $0xe0] sm:$0xff]
    %v883 = vld [vmem:[%s1 + $0xe8] sm:$0xff]
    %v884 = vld [vmem:[%s1 + $0xf0] sm:$0xff]
    %v885 = vld [vmem:[%s1 + $0xf8] sm:$0xff]
    %v886 = vld [vmem:[%s1 + $0x100] sm:$0xff]
    %v887 = vld [vmem:[%s1 + $0x108] sm:$0xff]
    %v888 = vld [vmem:[%s1 + $0x110] sm:$0xff]
    %v889 = vld [vmem:[%s1 + $0x118] sm:$0xff]
    %v890 = vld [vmem:[%s1 + $0x120] sm:$0xff]
    %v891 = vld [vmem:[%s1 + $0x128] sm:$0xff]
    %v892 = vld [vmem:[%s1 + $0x130] sm:$0xff]
    %v893 = vld [vmem:[%s1 + $0x138] sm:$0xff]
    %v894 = vld [vmem:[%s1 + $0x140] sm:$0xff]
    %v895 = vld [vmem:[%s1 + $0x148] sm:$0xff]
    %v896 = vld [vmem:[%s1 + $0x150] sm:$0xff]
    %v897 = vld [vmem:[%s1 + $0x158] sm:$0xff]
    %v898 = vld [vmem:[%s1 + $0x160] sm:$0xff]
    %v899 = vld [vmem:[%s1 + $0x168] sm:$0xff]
    %v900 = vld [vmem:[%s1 + $0x170] sm:$0xff]
    %v901 = vld [vmem:[%s1 + $0x178] sm:$0xff]
    %v902 = vld [vmem:[%s1 + $0x180] sm:$0xff]
    %v903 = vld [vmem:[%s1 + $0x188] sm:$0xff]
    %v904 = vld [vmem:[%s1 + $0x190] sm:$0xff]
    %v905 = vld [vmem:[%s1 + $0x198] sm:$0xff]
    %v906 = vld [vmem:[%s1 + $0x1a0] sm:$0xff]
    %v907 = vld [vmem:[%s1 + $0x1a8] sm:$0xff]
    %v908 = vld [vmem:[%s1 + $0x1b0] sm:$0xff]
    %v909 = vld [vmem:[%s1 + $0x1b8] sm:$0xff]
    %v910 = vld [vmem:[%s1 + $0x1c0] sm:$0xff]
    %v911 = vld [vmem:[%s1 + $0x1c8] sm:$0xff]
    %v912 = vld [vmem:[%s1 + $0x1d0] sm:$0xff]
    %v913 = vld [vmem:[%s1 + $0x1d8] sm:$0xff]
    %v914 = vld [vmem:[%s1 + $0x1e0] sm:$0xff]
    %v915 = vld [vmem:[%s1 + $0x1e8] sm:$0xff]
    %v916 = vld [vmem:[%s1 + $0x1f0] sm:$0xff]
    %v917 = vld [vmem:[%s1 + $0x1f8] sm:$0xff]
    %918 = vmatprep.subr.mxu0 %v915
    %919 = vmatpush1.msra.mxu0 %v914
    %920 = vmatprep.subr.mxu0 %v911
    %921 = vmatpush1.msra.mxu0 %v910
    %922 = vmatprep.subr.mxu0 %v907
    %923 = vmatpush1.msra.mxu0 %v906
    %924 = vmatprep.subr.mxu0 %v903
    %925 = vmatpush1.msra.mxu0 %v902
    %926 = vmatprep.subr.mxu0 %v899
    %927 = vmatpush1.msra.mxu0 %v898
    %928 = vmatprep.subr.mxu0 %v895
    %929 = vmatpush1.msra.mxu0 %v894
    %930 = vmatprep.subr.mxu0 %v891
    %931 = vmatpush1.msra.mxu0 %v890
    %932 = vmatprep.subr.mxu0 %v887
    %933 = vmatpush1.msra.mxu0 %v886
    %934 = vmatprep.subr.mxu0 %v883
    %935 = vmatpush1.msra.mxu0 %v882
    %936 = vmatprep.subr.mxu0 %v879
    %937 = vmatpush1.msra.mxu0 %v878
    %938 = vmatprep.subr.mxu0 %v875
    %939 = vmatpush1.msra.mxu0 %v874
    %940 = vmatprep.subr.mxu0 %v871
    %941 = vmatpush1.msra.mxu0 %v870
    %942 = vmatprep.subr.mxu0 %v867
    %943 = vmatpush1.msra.mxu0 %v866
    %944 = vmatprep.subr.mxu0 %v863
    %945 = vmatpush1.msra.mxu0 %v862
    %946 = vmatprep.subr.mxu0 %v859
    %947 = vmatpush1.msra.mxu0 %v858
    %948 = vmatprep.subr.mxu0 %v855
    %949 = vmatpush1.msra.mxu0 %v854
    %950 = vmatprep.subr.mxu0 0.0
    %951 = vmatpush2.msra.mxu0 0.0
    %952 = vmatprep.subr.mxu0 0.0
    %953 = vmatpush2.msra.mxu0 0.0
    %954 = vmatprep.subr.mxu0 0.0
    %955 = vmatpush2.msra.mxu0 0.0
    %956 = vmatprep.subr.mxu0 0.0
    %957 = vmatpush2.msra.mxu0 0.0
    %958 = vmatprep.subr.mxu0 0.0
    %959 = vmatpush2.msra.mxu0 0.0
    %960 = vmatprep.subr.mxu0 0.0
    %961 = vmatpush2.msra.mxu0 0.0
    %962 = vmatprep.subr.mxu0 0.0
    %963 = vmatpush2.msra.mxu0 0.0
    %964 = vmatprep.subr.mxu0 0.0
    %965 = vmatpush2.msra.mxu0 0.0
    %966 = vmatprep.subr.mxu0 0.0
    %967 = vmatpush2.msra.mxu0 0.0
    %968 = vmatprep.subr.mxu0 0.0
    %969 = vmatpush2.msra.mxu0 0.0
    %970 = vmatprep.subr.mxu0 0.0
    %971 = vmatpush2.msra.mxu0 0.0
    %972 = vmatprep.subr.mxu0 0.0
    %973 = vmatpush2.msra.mxu0 0.0
    %974 = vmatprep.subr.mxu0 0.0
    %975 = vmatpush2.msra.mxu0 0.0
    %976 = vmatprep.subr.mxu0 0.0
    %977 = vmatpush2.msra.mxu0 0.0
    %978 = vmatprep.subr.mxu0 0.0
    %979 = vmatpush2.msra.mxu0 0.0
    %980 = vmatprep.subr.mxu0 0.0
    %981 = vmatpush2.msra.mxu0 0.0
    %982 = vmatprep.mubr.f32.mxu0 0.0
    %983 = vmatmul.mubr.f32.gmra.mxu0 %v847
    %v984 = vpop.f32.mrf.mxu0
    %v985 = vadd.f32 0.0, %v984
    %v986 = vpop.f32.mrf.mxu0
    %v987 = vadd.f32 0.0, %v986
    %988 = vdwg.mxu0
    %989 = vmatprep.subr.mxu0 %v917
    %990 = vmatpush1.msra.mxu0 %v916
    %991 = vmatprep.subr.mxu0 %v913
    %992 = vmatpush1.msra.mxu0 %v912
    %993 = vmatprep.subr.mxu0 %v909
    %994 = vmatpush1.msra.mxu0 %v908
    %995 = vmatprep.subr.mxu0 %v905
    %996 = vmatpush1.msra.mxu0 %v904
    %997 = vmatprep.subr.mxu0 %v901
    %998 = vmatpush1.msra.mxu0 %v900
    %999 = vmatprep.subr.mxu0 %v897
    %1000 = vmatpush1.msra.mxu0 %v896
    %1001 = vmatprep.subr.mxu0 %v893
    %1002 = vmatpush1.msra.mxu0 %v892
    %1003 = vmatprep.subr.mxu0 %v889
    %1004 = vmatpush1.msra.mxu0 %v888
    %1005 = vmatprep.subr.mxu0 %v885
    %1006 = vmatpush1.msra.mxu0 %v884
    %1007 = vmatprep.subr.mxu0 %v881
    %1008 = vmatpush1.msra.mxu0 %v880
    %1009 = vmatprep.subr.mxu0 %v877
    %1010 = vmatpush1.msra.mxu0 %v876
    %1011 = vmatprep.subr.mxu0 %v873
    %1012 = vmatpush1.msra.mxu0 %v872
    %1013 = vmatprep.subr.mxu0 %v869
    %1014 = vmatpush1.msra.mxu0 %v868
    %1015 = vmatprep.subr.mxu0 %v865
    %1016 = vmatpush1.msra.mxu0 %v864
    %1017 = vmatprep.subr.mxu0 %v861
    %1018 = vmatpush1.msra.mxu0 %v860
    %1019 = vmatprep.subr.mxu0 %v857
    %1020 = vmatpush1.msra.mxu0 %v856
    %1021 = vmatprep.subr.mxu0 0.0
    %1022 = vmatpush2.msra.mxu0 0.0
    %1023 = vmatprep.subr.mxu0 0.0
    %1024 = vmatpush2.msra.mxu0 0.0
    %1025 = vmatprep.subr.mxu0 0.0
    %1026 = vmatpush2.msra.mxu0 0.0
    %1027 = vmatprep.subr.mxu0 0.0
    %1028 = vmatpush2.msra.mxu0 0.0
    %1029 = vmatprep.subr.mxu0 0.0
    %1030 = vmatpush2.msra.mxu0 0.0
    %1031 = vmatprep.subr.mxu0 0.0
    %1032 = vmatpush2.msra.mxu0 0.0
    %1033 = vmatprep.subr.mxu0 0.0
    %1034 = vmatpush2.msra.mxu0 0.0
    %1035 = vmatprep.subr.mxu0 0.0
    %1036 = vmatpush2.msra.mxu0 0.0
    %1037 = vmatprep.subr.mxu0 0.0
    %1038 = vmatpush2.msra.mxu0 0.0
    %1039 = vmatprep.subr.mxu0 0.0
    %1040 = vmatpush2.msra.mxu0 0.0
    %1041 = vmatprep.subr.mxu0 0.0
    %1042 = vmatpush2.msra.mxu0 0.0
    %1043 = vmatprep.subr.mxu0 0.0
    %1044 = vmatpush2.msra.mxu0 0.0
    %1045 = vmatprep.subr.mxu0 0.0
    %1046 = vmatpush2.msra.mxu0 0.0
    %1047 = vmatprep.subr.mxu0 0.0
    %1048 = vmatpush2.msra.mxu0 0.0
    %1049 = vmatprep.subr.mxu0 0.0
    %1050 = vmatpush2.msra.mxu0 0.0
    %1051 = vmatprep.subr.mxu0 0.0
    %1052 = vmatpush2.msra.mxu0 0.0
    %1053 = vmatprep.mubr.f32.mxu0 0.0
    %1054 = vmatmul.mubr.f32.gmra.mxu0 %v847
    %v1055 = vpop.f32.mrf.mxu0
    %v1056 = vadd.f32 0.0, %v1055
    %v1057 = vpop.f32.mrf.mxu0
    %v1058 = vadd.f32 0.0, %v1057
    %1059 = vdwg.mxu0
    %v1060 = vadd.f32 %v850, %v985
    %v1061 = vadd.f32 %v851, %v987
    %v1062 = vadd.f32 %v852, %v1056
    %v1063 = vadd.f32 %v853, %v1058
    %v1064 = vmul.f32 %v1060, 0.5
    %v1065 = vmul.f32 %v1061, 0.5
    %v1066 = vmul.f32 %v1062, 0.5
    %v1067 = vtanh.pop %v1064
    %v1068 = vtanh.pop %v1065
    %v1069 = vtanh.pop %v1066
    %v1070 = vadd.f32 %v1067, 1.0
    %v1071 = vadd.f32 %v1068, 1.0
    %v1072 = vadd.f32 %v1069, 1.0
    %v1073 = vmul.f32 %v1070, 0.5
    %v1074 = vmul.f32 %v1071, 0.5
    %v1075 = vmul.f32 %v1072, 0.5
    %v1076 = vtanh.pop %v1063
    %v1077 = vmul.f32 %v1074, %v845
    %v1078 = vmul.f32 %v1073, %v1076
    %v1079 = vadd.f32 %v1077, %v1078
    %v1080 = vtanh.pop %v1079
    %v1081 = vmul.f32 %v1075, %v1080
    %1082 = vst.msk [vmem:[#allocation3 + $0x18] sm:$0xff] %vm378, %v1081
    %1083 = vst.msk [vmem:[#allocation3 + $0x20] sm:$0xff] %vm380, %v1081
    %v1084 = vld [vmem:[#allocation2 + $0x80] sm:$0xff]
    %v1085 = vld [vmem:[#allocation2 + $0x88] sm:$0xff]
    %v1086 = vld [vmem:[#allocation2 + $0x90] sm:$0xff]
    %v1087 = vld [vmem:[#allocation2 + $0x98] sm:$0xff]
    %v1088 = vld [vmem:[%s1] sm:$0xff]
    %v1089 = vld [vmem:[%s1 + $0x8] sm:$0xff]
    %v1090 = vld [vmem:[%s1 + $0x10] sm:$0xff]
    %v1091 = vld [vmem:[%s1 + $0x18] sm:$0xff]
    %v1092 = vld [vmem:[%s1 + $0x20] sm:$0xff]
    %v1093 = vld [vmem:[%s1 + $0x28] sm:$0xff]
    %v1094 = vld [vmem:[%s1 + $0x30] sm:$0xff]
    %v1095 = vld [vmem:[%s1 + $0x38] sm:$0xff]
    %v1096 = vld [vmem:[%s1 + $0x40] sm:$0xff]
    %v1097 = vld [vmem:[%s1 + $0x48] sm:$0xff]
    %v1098 = vld [vmem:[%s1 + $0x50] sm:$0xff]
    %v1099 = vld [vmem:[%s1 + $0x58] sm:$0xff]
    %v1100 = vld [vmem:[%s1 + $0x60] sm:$0xff]
    %v1101 = vld [vmem:[%s1 + $0x68] sm:$0xff]
    %v1102 = vld [vmem:[%s1 + $0x70] sm:$0xff]
    %v1103 = vld [vmem:[%s1 + $0x78] sm:$0xff]
    %v1104 = vld [vmem:[%s1 + $0x80] sm:$0xff]
    %v1105 = vld [vmem:[%s1 + $0x88] sm:$0xff]
    %v1106 = vld [vmem:[%s1 + $0x90] sm:$0xff]
    %v1107 = vld [vmem:[%s1 + $0x98] sm:$0xff]
    %v1108 = vld [vmem:[%s1 + $0xa0] sm:$0xff]
    %v1109 = vld [vmem:[%s1 + $0xa8] sm:$0xff]
    %v1110 = vld [vmem:[%s1 + $0xb0] sm:$0xff]
    %v1111 = vld [vmem:[%s1 + $0xb8] sm:$0xff]
    %v1112 = vld [vmem:[%s1 + $0xc0] sm:$0xff]
    %v1113 = vld [vmem:[%s1 + $0xc8] sm:$0xff]
    %v1114 = vld [vmem:[%s1 + $0xd0] sm:$0xff]
    %v1115 = vld [vmem:[%s1 + $0xd8] sm:$0xff]
    %v1116 = vld [vmem:[%s1 + $0xe0] sm:$0xff]
    %v1117 = vld [vmem:[%s1 + $0xe8] sm:$0xff]
    %v1118 = vld [vmem:[%s1 + $0xf0] sm:$0xff]
    %v1119 = vld [vmem:[%s1 + $0xf8] sm:$0xff]
    %v1120 = vld [vmem:[%s1 + $0x100] sm:$0xff]
    %v1121 = vld [vmem:[%s1 + $0x108] sm:$0xff]
    %v1122 = vld [vmem:[%s1 + $0x110] sm:$0xff]
    %v1123 = vld [vmem:[%s1 + $0x118] sm:$0xff]
    %v1124 = vld [vmem:[%s1 + $0x120] sm:$0xff]
    %v1125 = vld [vmem:[%s1 + $0x128] sm:$0xff]
    %v1126 = vld [vmem:[%s1 + $0x130] sm:$0xff]
    %v1127 = vld [vmem:[%s1 + $0x138] sm:$0xff]
    %v1128 = vld [vmem:[%s1 + $0x140] sm:$0xff]
    %v1129 = vld [vmem:[%s1 + $0x148] sm:$0xff]
    %v1130 = vld [vmem:[%s1 + $0x150] sm:$0xff]
    %v1131 = vld [vmem:[%s1 + $0x158] sm:$0xff]
    %v1132 = vld [vmem:[%s1 + $0x160] sm:$0xff]
    %v1133 = vld [vmem:[%s1 + $0x168] sm:$0xff]
    %v1134 = vld [vmem:[%s1 + $0x170] sm:$0xff]
    %v1135 = vld [vmem:[%s1 + $0x178] sm:$0xff]
    %v1136 = vld [vmem:[%s1 + $0x180] sm:$0xff]
    %v1137 = vld [vmem:[%s1 + $0x188] sm:$0xff]
    %v1138 = vld [vmem:[%s1 + $0x190] sm:$0xff]
    %v1139 = vld [vmem:[%s1 + $0x198] sm:$0xff]
    %v1140 = vld [vmem:[%s1 + $0x1a0] sm:$0xff]
    %v1141 = vld [vmem:[%s1 + $0x1a8] sm:$0xff]
    %v1142 = vld [vmem:[%s1 + $0x1b0] sm:$0xff]
    %v1143 = vld [vmem:[%s1 + $0x1b8] sm:$0xff]
    %v1144 = vld [vmem:[%s1 + $0x1c0] sm:$0xff]
    %v1145 = vld [vmem:[%s1 + $0x1c8] sm:$0xff]
    %v1146 = vld [vmem:[%s1 + $0x1d0] sm:$0xff]
    %v1147 = vld [vmem:[%s1 + $0x1d8] sm:$0xff]
    %v1148 = vld [vmem:[%s1 + $0x1e0] sm:$0xff]
    %v1149 = vld [vmem:[%s1 + $0x1e8] sm:$0xff]
    %v1150 = vld [vmem:[%s1 + $0x1f0] sm:$0xff]
    %v1151 = vld [vmem:[%s1 + $0x1f8] sm:$0xff]
    %1152 = vmatprep.subr.mxu0 %v1149
    %1153 = vmatpush1.msra.mxu0 %v1148
    %1154 = vmatprep.subr.mxu0 %v1145
    %1155 = vmatpush1.msra.mxu0 %v1144
    %1156 = vmatprep.subr.mxu0 %v1141
    %1157 = vmatpush1.msra.mxu0 %v1140
    %1158 = vmatprep.subr.mxu0 %v1137
    %1159 = vmatpush1.msra.mxu0 %v1136
    %1160 = vmatprep.subr.mxu0 %v1133
    %1161 = vmatpush1.msra.mxu0 %v1132
    %1162 = vmatprep.subr.mxu0 %v1129
    %1163 = vmatpush1.msra.mxu0 %v1128
    %1164 = vmatprep.subr.mxu0 %v1125
    %1165 = vmatpush1.msra.mxu0 %v1124
    %1166 = vmatprep.subr.mxu0 %v1121
    %1167 = vmatpush1.msra.mxu0 %v1120
    %1168 = vmatprep.subr.mxu0 %v1117
    %1169 = vmatpush1.msra.mxu0 %v1116
    %1170 = vmatprep.subr.mxu0 %v1113
    %1171 = vmatpush1.msra.mxu0 %v1112
    %1172 = vmatprep.subr.mxu0 %v1109
    %1173 = vmatpush1.msra.mxu0 %v1108
    %1174 = vmatprep.subr.mxu0 %v1105
    %1175 = vmatpush1.msra.mxu0 %v1104
    %1176 = vmatprep.subr.mxu0 %v1101
    %1177 = vmatpush1.msra.mxu0 %v1100
    %1178 = vmatprep.subr.mxu0 %v1097
    %1179 = vmatpush1.msra.mxu0 %v1096
    %1180 = vmatprep.subr.mxu0 %v1093
    %1181 = vmatpush1.msra.mxu0 %v1092
    %1182 = vmatprep.subr.mxu0 %v1089
    %1183 = vmatpush1.msra.mxu0 %v1088
    %1184 = vmatprep.subr.mxu0 0.0
    %1185 = vmatpush2.msra.mxu0 0.0
    %1186 = vmatprep.subr.mxu0 0.0
    %1187 = vmatpush2.msra.mxu0 0.0
    %1188 = vmatprep.subr.mxu0 0.0
    %1189 = vmatpush2.msra.mxu0 0.0
    %1190 = vmatprep.subr.mxu0 0.0
    %1191 = vmatpush2.msra.mxu0 0.0
    %1192 = vmatprep.subr.mxu0 0.0
    %1193 = vmatpush2.msra.mxu0 0.0
    %1194 = vmatprep.subr.mxu0 0.0
    %1195 = vmatpush2.msra.mxu0 0.0
    %1196 = vmatprep.subr.mxu0 0.0
    %1197 = vmatpush2.msra.mxu0 0.0
    %1198 = vmatprep.subr.mxu0 0.0
    %1199 = vmatpush2.msra.mxu0 0.0
    %1200 = vmatprep.subr.mxu0 0.0
    %1201 = vmatpush2.msra.mxu0 0.0
    %1202 = vmatprep.subr.mxu0 0.0
    %1203 = vmatpush2.msra.mxu0 0.0
    %1204 = vmatprep.subr.mxu0 0.0
    %1205 = vmatpush2.msra.mxu0 0.0
    %1206 = vmatprep.subr.mxu0 0.0
    %1207 = vmatpush2.msra.mxu0 0.0
    %1208 = vmatprep.subr.mxu0 0.0
    %1209 = vmatpush2.msra.mxu0 0.0
    %1210 = vmatprep.subr.mxu0 0.0
    %1211 = vmatpush2.msra.mxu0 0.0
    %1212 = vmatprep.subr.mxu0 0.0
    %1213 = vmatpush2.msra.mxu0 0.0
    %1214 = vmatprep.subr.mxu0 0.0
    %1215 = vmatpush2.msra.mxu0 0.0
    %1216 = vmatprep.mubr.f32.mxu0 0.0
    %1217 = vmatmul.mubr.f32.gmra.mxu0 %v1081
    %v1218 = vpop.f32.mrf.mxu0
    %v1219 = vadd.f32 0.0, %v1218
    %v1220 = vpop.f32.mrf.mxu0
    %v1221 = vadd.f32 0.0, %v1220
    %1222 = vdwg.mxu0
    %1223 = vmatprep.subr.mxu0 %v1151
    %1224 = vmatpush1.msra.mxu0 %v1150
    %1225 = vmatprep.subr.mxu0 %v1147
    %1226 = vmatpush1.msra.mxu0 %v1146
    %1227 = vmatprep.subr.mxu0 %v1143
    %1228 = vmatpush1.msra.mxu0 %v1142
    %1229 = vmatprep.subr.mxu0 %v1139
    %1230 = vmatpush1.msra.mxu0 %v1138
    %1231 = vmatprep.subr.mxu0 %v1135
    %1232 = vmatpush1.msra.mxu0 %v1134
    %1233 = vmatprep.subr.mxu0 %v1131
    %1234 = vmatpush1.msra.mxu0 %v1130
    %1235 = vmatprep.subr.mxu0 %v1127
    %1236 = vmatpush1.msra.mxu0 %v1126
    %1237 = vmatprep.subr.mxu0 %v1123
    %1238 = vmatpush1.msra.mxu0 %v1122
    %1239 = vmatprep.subr.mxu0 %v1119
    %1240 = vmatpush1.msra.mxu0 %v1118
    %1241 = vmatprep.subr.mxu0 %v1115
    %1242 = vmatpush1.msra.mxu0 %v1114
    %1243 = vmatprep.subr.mxu0 %v1111
    %1244 = vmatpush1.msra.mxu0 %v1110
    %1245 = vmatprep.subr.mxu0 %v1107
    %1246 = vmatpush1.msra.mxu0 %v1106
    %1247 = vmatprep.subr.mxu0 %v1103
    %1248 = vmatpush1.msra.mxu0 %v1102
    %1249 = vmatprep.subr.mxu0 %v1099
    %1250 = vmatpush1.msra.mxu0 %v1098
    %1251 = vmatprep.subr.mxu0 %v1095
    %1252 = vmatpush1.msra.mxu0 %v1094
    %1253 = vmatprep.subr.mxu0 %v1091
    %1254 = vmatpush1.msra.mxu0 %v1090
    %1255 = vmatprep.subr.mxu0 0.0
    %1256 = vmatpush2.msra.mxu0 0.0
    %1257 = vmatprep.subr.mxu0 0.0
    %1258 = vmatpush2.msra.mxu0 0.0
    %1259 = vmatprep.subr.mxu0 0.0
    %1260 = vmatpush2.msra.mxu0 0.0
    %1261 = vmatprep.subr.mxu0 0.0
    %1262 = vmatpush2.msra.mxu0 0.0
    %1263 = vmatprep.subr.mxu0 0.0
    %1264 = vmatpush2.msra.mxu0 0.0
    %1265 = vmatprep.subr.mxu0 0.0
    %1266 = vmatpush2.msra.mxu0 0.0
    %1267 = vmatprep.subr.mxu0 0.0
    %1268 = vmatpush2.msra.mxu0 0.0
    %1269 = vmatprep.subr.mxu0 0.0
    %1270 = vmatpush2.msra.mxu0 0.0
    %1271 = vmatprep.subr.mxu0 0.0
    %1272 = vmatpush2.msra.mxu0 0.0
    %1273 = vmatprep.subr.mxu0 0.0
    %1274 = vmatpush2.msra.mxu0 0.0
    %1275 = vmatprep.subr.mxu0 0.0
    %1276 = vmatpush2.msra.mxu0 0.0
    %1277 = vmatprep.subr.mxu0 0.0
    %1278 = vmatpush2.msra.mxu0 0.0
    %1279 = vmatprep.subr.mxu0 0.0
    %1280 = vmatpush2.msra.mxu0 0.0
    %1281 = vmatprep.subr.mxu0 0.0
    %1282 = vmatpush2.msra.mxu0 0.0
    %1283 = vmatprep.subr.mxu0 0.0
    %1284 = vmatpush2.msra.mxu0 0.0
    %1285 = vmatprep.subr.mxu0 0.0
    %1286 = vmatpush2.msra.mxu0 0.0
    %1287 = vmatprep.mubr.f32.mxu0 0.0
    %1288 = vmatmul.mubr.f32.gmra.mxu0 %v1081
    %v1289 = vpop.f32.mrf.mxu0
    %v1290 = vadd.f32 0.0, %v1289
    %v1291 = vpop.f32.mrf.mxu0
    %v1292 = vadd.f32 0.0, %v1291
    %1293 = vdwg.mxu0
    %v1294 = vadd.f32 %v1084, %v1219
    %v1295 = vadd.f32 %v1085, %v1221
    %v1296 = vadd.f32 %v1086, %v1290
    %v1297 = vadd.f32 %v1087, %v1292
    %v1298 = vmul.f32 %v1294, 0.5
    %v1299 = vmul.f32 %v1295, 0.5
    %v1300 = vmul.f32 %v1296, 0.5
    %v1301 = vtanh.pop %v1298
    %v1302 = vtanh.pop %v1299
    %v1303 = vtanh.pop %v1300
    %v1304 = vadd.f32 %v1301, 1.0
    %v1305 = vadd.f32 %v1302, 1.0
    %v1306 = vadd.f32 %v1303, 1.0
    %v1307 = vmul.f32 %v1304, 0.5
    %v1308 = vmul.f32 %v1305, 0.5
    %v1309 = vmul.f32 %v1306, 0.5
    %v1310 = vtanh.pop %v1297
    %v1311 = vmul.f32 %v1308, %v1079
    %v1312 = vmul.f32 %v1307, %v1310
    %v1313 = vadd.f32 %v1311, %v1312
    %v1314 = vtanh.pop %v1313
    %v1315 = vmul.f32 %v1309, %v1314
    %1316 = vst.msk [vmem:[#allocation3 + $0x20] sm:$0xff] %vm378, %v1315
    %1317 = vst.msk [vmem:[#allocation3 + $0x18] sm:$0xff] %vm380, %v1315
    %v1318 = vld [vmem:[#allocation2 + $0xa0] sm:$0xff]
    %v1319 = vld [vmem:[#allocation2 + $0xa8] sm:$0xff]
    %v1320 = vld [vmem:[#allocation2 + $0xb0] sm:$0xff]
    %v1321 = vld [vmem:[#allocation2 + $0xb8] sm:$0xff]
    %v1322 = vld [vmem:[%s1] sm:$0xff]
    %v1323 = vld [vmem:[%s1 + $0x8] sm:$0xff]
    %v1324 = vld [vmem:[%s1 + $0x10] sm:$0xff]
    %v1325 = vld [vmem:[%s1 + $0x18] sm:$0xff]
    %v1326 = vld [vmem:[%s1 + $0x20] sm:$0xff]
    %v1327 = vld [vmem:[%s1 + $0x28] sm:$0xff]
    %v1328 = vld [vmem:[%s1 + $0x30] sm:$0xff]
    %v1329 = vld [vmem:[%s1 + $0x38] sm:$0xff]
    %v1330 = vld [vmem:[%s1 + $0x40] sm:$0xff]
    %v1331 = vld [vmem:[%s1 + $0x48] sm:$0xff]
    %v1332 = vld [vmem:[%s1 + $0x50] sm:$0xff]
    %v1333 = vld [vmem:[%s1 + $0x58] sm:$0xff]
    %v1334 = vld [vmem:[%s1 + $0x60] sm:$0xff]
    %v1335 = vld [vmem:[%s1 + $0x68] sm:$0xff]
    %v1336 = vld [vmem:[%s1 + $0x70] sm:$0xff]
    %v1337 = vld [vmem:[%s1 + $0x78] sm:$0xff]
    %v1338 = vld [vmem:[%s1 + $0x80] sm:$0xff]
    %v1339 = vld [vmem:[%s1 + $0x88] sm:$0xff]
    %v1340 = vld [vmem:[%s1 + $0x90] sm:$0xff]
    %v1341 = vld [vmem:[%s1 + $0x98] sm:$0xff]
    %v1342 = vld [vmem:[%s1 + $0xa0] sm:$0xff]
    %v1343 = vld [vmem:[%s1 + $0xa8] sm:$0xff]
    %v1344 = vld [vmem:[%s1 + $0xb0] sm:$0xff]
    %v1345 = vld [vmem:[%s1 + $0xb8] sm:$0xff]
    %v1346 = vld [vmem:[%s1 + $0xc0] sm:$0xff]
    %v1347 = vld [vmem:[%s1 + $0xc8] sm:$0xff]
    %v1348 = vld [vmem:[%s1 + $0xd0] sm:$0xff]
    %v1349 = vld [vmem:[%s1 + $0xd8] sm:$0xff]
    %v1350 = vld [vmem:[%s1 + $0xe0] sm:$0xff]
    %v1351 = vld [vmem:[%s1 + $0xe8] sm:$0xff]
    %v1352 = vld [vmem:[%s1 + $0xf0] sm:$0xff]
    %v1353 = vld [vmem:[%s1 + $0xf8] sm:$0xff]
    %v1354 = vld [vmem:[%s1 + $0x100] sm:$0xff]
    %v1355 = vld [vmem:[%s1 + $0x108] sm:$0xff]
    %v1356 = vld [vmem:[%s1 + $0x110] sm:$0xff]
    %v1357 = vld [vmem:[%s1 + $0x118] sm:$0xff]
    %v1358 = vld [vmem:[%s1 + $0x120] sm:$0xff]
    %v1359 = vld [vmem:[%s1 + $0x128] sm:$0xff]
    %v1360 = vld [vmem:[%s1 + $0x130] sm:$0xff]
    %v1361 = vld [vmem:[%s1 + $0x138] sm:$0xff]
    %v1362 = vld [vmem:[%s1 + $0x140] sm:$0xff]
    %v1363 = vld [vmem:[%s1 + $0x148] sm:$0xff]
    %v1364 = vld [vmem:[%s1 + $0x150] sm:$0xff]
    %v1365 = vld [vmem:[%s1 + $0x158] sm:$0xff]
    %v1366 = vld [vmem:[%s1 + $0x160] sm:$0xff]
    %v1367 = vld [vmem:[%s1 + $0x168] sm:$0xff]
    %v1368 = vld [vmem:[%s1 + $0x170] sm:$0xff]
    %v1369 = vld [vmem:[%s1 + $0x178] sm:$0xff]
    %v1370 = vld [vmem:[%s1 + $0x180] sm:$0xff]
    %v1371 = vld [vmem:[%s1 + $0x188] sm:$0xff]
    %v1372 = vld [vmem:[%s1 + $0x190] sm:$0xff]
    %v1373 = vld [vmem:[%s1 + $0x198] sm:$0xff]
    %v1374 = vld [vmem:[%s1 + $0x1a0] sm:$0xff]
    %v1375 = vld [vmem:[%s1 + $0x1a8] sm:$0xff]
    %v1376 = vld [vmem:[%s1 + $0x1b0] sm:$0xff]
    %v1377 = vld [vmem:[%s1 + $0x1b8] sm:$0xff]
    %v1378 = vld [vmem:[%s1 + $0x1c0] sm:$0xff]
    %v1379 = vld [vmem:[%s1 + $0x1c8] sm:$0xff]
    %v1380 = vld [vmem:[%s1 + $0x1d0] sm:$0xff]
    %v1381 = vld [vmem:[%s1 + $0x1d8] sm:$0xff]
    %v1382 = vld [vmem:[%s1 + $0x1e0] sm:$0xff]
    %v1383 = vld [vmem:[%s1 + $0x1e8] sm:$0xff]
    %v1384 = vld [vmem:[%s1 + $0x1f0] sm:$0xff]
    %v1385 = vld [vmem:[%s1 + $0x1f8] sm:$0xff]
    %1386 = vmatprep.subr.mxu0 %v1383
    %1387 = vmatpush1.msra.mxu0 %v1382
    %1388 = vmatprep.subr.mxu0 %v1379
    %1389 = vmatpush1.msra.mxu0 %v1378
    %1390 = vmatprep.subr.mxu0 %v1375
    %1391 = vmatpush1.msra.mxu0 %v1374
    %1392 = vmatprep.subr.mxu0 %v1371
    %1393 = vmatpush1.msra.mxu0 %v1370
    %1394 = vmatprep.subr.mxu0 %v1367
    %1395 = vmatpush1.msra.mxu0 %v1366
    %1396 = vmatprep.subr.mxu0 %v1363
    %1397 = vmatpush1.msra.mxu0 %v1362
    %1398 = vmatprep.subr.mxu0 %v1359
    %1399 = vmatpush1.msra.mxu0 %v1358
    %1400 = vmatprep.subr.mxu0 %v1355
    %1401 = vmatpush1.msra.mxu0 %v1354
    %1402 = vmatprep.subr.mxu0 %v1351
    %1403 = vmatpush1.msra.mxu0 %v1350
    %1404 = vmatprep.subr.mxu0 %v1347
    %1405 = vmatpush1.msra.mxu0 %v1346
    %1406 = vmatprep.subr.mxu0 %v1343
    %1407 = vmatpush1.msra.mxu0 %v1342
    %1408 = vmatprep.subr.mxu0 %v1339
    %1409 = vmatpush1.msra.mxu0 %v1338
    %1410 = vmatprep.subr.mxu0 %v1335
    %1411 = vmatpush1.msra.mxu0 %v1334
    %1412 = vmatprep.subr.mxu0 %v1331
    %1413 = vmatpush1.msra.mxu0 %v1330
    %1414 = vmatprep.subr.mxu0 %v1327
    %1415 = vmatpush1.msra.mxu0 %v1326
    %1416 = vmatprep.subr.mxu0 %v1323
    %1417 = vmatpush1.msra.mxu0 %v1322
    %1418 = vmatprep.subr.mxu0 0.0
    %1419 = vmatpush2.msra.mxu0 0.0
    %1420 = vmatprep.subr.mxu0 0.0
    %1421 = vmatpush2.msra.mxu0 0.0
    %1422 = vmatprep.subr.mxu0 0.0
    %1423 = vmatpush2.msra.mxu0 0.0
    %1424 = vmatprep.subr.mxu0 0.0
    %1425 = vmatpush2.msra.mxu0 0.0
    %1426 = vmatprep.subr.mxu0 0.0
    %1427 = vmatpush2.msra.mxu0 0.0
    %1428 = vmatprep.subr.mxu0 0.0
    %1429 = vmatpush2.msra.mxu0 0.0
    %1430 = vmatprep.subr.mxu0 0.0
    %1431 = vmatpush2.msra.mxu0 0.0
    %1432 = vmatprep.subr.mxu0 0.0
    %1433 = vmatpush2.msra.mxu0 0.0
    %1434 = vmatprep.subr.mxu0 0.0
    %1435 = vmatpush2.msra.mxu0 0.0
    %1436 = vmatprep.subr.mxu0 0.0
    %1437 = vmatpush2.msra.mxu0 0.0
    %1438 = vmatprep.subr.mxu0 0.0
    %1439 = vmatpush2.msra.mxu0 0.0
    %1440 = vmatprep.subr.mxu0 0.0
    %1441 = vmatpush2.msra.mxu0 0.0
    %1442 = vmatprep.subr.mxu0 0.0
    %1443 = vmatpush2.msra.mxu0 0.0
    %1444 = vmatprep.subr.mxu0 0.0
    %1445 = vmatpush2.msra.mxu0 0.0
    %1446 = vmatprep.subr.mxu0 0.0
    %1447 = vmatpush2.msra.mxu0 0.0
    %1448 = vmatprep.subr.mxu0 0.0
    %1449 = vmatpush2.msra.mxu0 0.0
    %1450 = vmatprep.mubr.f32.mxu0 0.0
    %1451 = vmatmul.mubr.f32.gmra.mxu0 %v1315
    %v1452 = vpop.f32.mrf.mxu0
    %v1453 = vadd.f32 0.0, %v1452
    %v1454 = vpop.f32.mrf.mxu0
    %v1455 = vadd.f32 0.0, %v1454
    %1456 = vdwg.mxu0
    %1457 = vmatprep.subr.mxu0 %v1385
    %1458 = vmatpush1.msra.mxu0 %v1384
    %1459 = vmatprep.subr.mxu0 %v1381
    %1460 = vmatpush1.msra.mxu0 %v1380
    %1461 = vmatprep.subr.mxu0 %v1377
    %1462 = vmatpush1.msra.mxu0 %v1376
    %1463 = vmatprep.subr.mxu0 %v1373
    %1464 = vmatpush1.msra.mxu0 %v1372
    %1465 = vmatprep.subr.mxu0 %v1369
    %1466 = vmatpush1.msra.mxu0 %v1368
    %1467 = vmatprep.subr.mxu0 %v1365
    %1468 = vmatpush1.msra.mxu0 %v1364
    %1469 = vmatprep.subr.mxu0 %v1361
    %1470 = vmatpush1.msra.mxu0 %v1360
    %1471 = vmatprep.subr.mxu0 %v1357
    %1472 = vmatpush1.msra.mxu0 %v1356
    %1473 = vmatprep.subr.mxu0 %v1353
    %1474 = vmatpush1.msra.mxu0 %v1352
    %1475 = vmatprep.subr.mxu0 %v1349
    %1476 = vmatpush1.msra.mxu0 %v1348
    %1477 = vmatprep.subr.mxu0 %v1345
    %1478 = vmatpush1.msra.mxu0 %v1344
    %1479 = vmatprep.subr.mxu0 %v1341
    %1480 = vmatpush1.msra.mxu0 %v1340
    %1481 = vmatprep.subr.mxu0 %v1337
    %1482 = vmatpush1.msra.mxu0 %v1336
    %1483 = vmatprep.subr.mxu0 %v1333
    %1484 = vmatpush1.msra.mxu0 %v1332
    %1485 = vmatprep.subr.mxu0 %v1329
    %1486 = vmatpush1.msra.mxu0 %v1328
    %1487 = vmatprep.subr.mxu0 %v1325
    %1488 = vmatpush1.msra.mxu0 %v1324
    %1489 = vmatprep.subr.mxu0 0.0
    %1490 = vmatpush2.msra.mxu0 0.0
    %1491 = vmatprep.subr.mxu0 0.0
    %1492 = vmatpush2.msra.mxu0 0.0
    %1493 = vmatprep.subr.mxu0 0.0
    %1494 = vmatpush2.msra.mxu0 0.0
    %1495 = vmatprep.subr.mxu0 0.0
    %1496 = vmatpush2.msra.mxu0 0.0
    %1497 = vmatprep.subr.mxu0 0.0
    %1498 = vmatpush2.msra.mxu0 0.0
    %1499 = vmatprep.subr.mxu0 0.0
    %1500 = vmatpush2.msra.mxu0 0.0
    %1501 = vmatprep.subr.mxu0 0.0
    %1502 = vmatpush2.msra.mxu0 0.0
    %1503 = vmatprep.subr.mxu0 0.0
    %1504 = vmatpush2.msra.mxu0 0.0
    %1505 = vmatprep.subr.mxu0 0.0
    %1506 = vmatpush2.msra.mxu0 0.0
    %1507 = vmatprep.subr.mxu0 0.0
    %1508 = vmatpush2.msra.mxu0 0.0
    %1509 = vmatprep.subr.mxu0 0.0
    %1510 = vmatpush2.msra.mxu0 0.0
    %1511 = vmatprep.subr.mxu0 0.0
    %1512 = vmatpush2.msra.mxu0 0.0
    %1513 = vmatprep.subr.mxu0 0.0
    %1514 = vmatpush2.msra.mxu0 0.0
    %1515 = vmatprep.subr.mxu0 0.0
    %1516 = vmatpush2.msra.mxu0 0.0
    %1517 = vmatprep.subr.mxu0 0.0
    %1518 = vmatpush2.msra.mxu0 0.0
    %1519 = vmatprep.subr.mxu0 0.0
    %1520 = vmatpush2.msra.mxu0 0.0
    %1521 = vmatprep.mubr.f32.mxu0 0.0
    %1522 = vmatmul.mubr.f32.gmra.mxu0 %v1315
    %v1523 = vpop.f32.mrf.mxu0
    %v1524 = vadd.f32 0.0, %v1523
    %v1525 = vpop.f32.mrf.mxu0
    %v1526 = vadd.f32 0.0, %v1525
    %1527 = vdwg.mxu0
    %v1528 = vadd.f32 %v1318, %v1453
    %v1529 = vadd.f32 %v1319, %v1455
    %v1530 = vadd.f32 %v1320, %v1524
    %v1531 = vadd.f32 %v1321, %v1526
    %v1532 = vmul.f32 %v1528, 0.5
    %v1533 = vmul.f32 %v1529, 0.5
    %v1534 = vmul.f32 %v1530, 0.5
    %v1535 = vtanh.pop %v1532
    %v1536 = vtanh.pop %v1533
    %v1537 = vtanh.pop %v1534
    %v1538 = vadd.f32 %v1535, 1.0
    %v1539 = vadd.f32 %v1536, 1.0
    %v1540 = vadd.f32 %v1537, 1.0
    %v1541 = vmul.f32 %v1538, 0.5
    %v1542 = vmul.f32 %v1539, 0.5
    %v1543 = vmul.f32 %v1540, 0.5
    %v1544 = vtanh.pop %v1531
    %v1545 = vmul.f32 %v1542, %v1313
    %v1546 = vmul.f32 %v1541, %v1544
    %v1547 = vadd.f32 %v1545, %v1546
    %v1548 = vtanh.pop %v1547
    %v1549 = vmul.f32 %v1543, %v1548
    %1550 = vst.msk [vmem:[#allocation3 + $0x28] sm:$0xff] %vm378, %v1549
    %1551 = vst.msk [vmem:[#allocation3 + $0x10] sm:$0xff] %vm380, %v1549
    %v1552 = vld [vmem:[#allocation2 + $0xc0] sm:$0xff]
    %v1553 = vld [vmem:[#allocation2 + $0xc8] sm:$0xff]
    %v1554 = vld [vmem:[#allocation2 + $0xd0] sm:$0xff]
    %v1555 = vld [vmem:[#allocation2 + $0xd8] sm:$0xff]
    %v1556 = vld [vmem:[%s1] sm:$0xff]
    %v1557 = vld [vmem:[%s1 + $0x8] sm:$0xff]
    %v1558 = vld [vmem:[%s1 + $0x10] sm:$0xff]
    %v1559 = vld [vmem:[%s1 + $0x18] sm:$0xff]
    %v1560 = vld [vmem:[%s1 + $0x20] sm:$0xff]
    %v1561 = vld [vmem:[%s1 + $0x28] sm:$0xff]
    %v1562 = vld [vmem:[%s1 + $0x30] sm:$0xff]
    %v1563 = vld [vmem:[%s1 + $0x38] sm:$0xff]
    %v1564 = vld [vmem:[%s1 + $0x40] sm:$0xff]
    %v1565 = vld [vmem:[%s1 + $0x48] sm:$0xff]
    %v1566 = vld [vmem:[%s1 + $0x50] sm:$0xff]
    %v1567 = vld [vmem:[%s1 + $0x58] sm:$0xff]
    %v1568 = vld [vmem:[%s1 + $0x60] sm:$0xff]
    %v1569 = vld [vmem:[%s1 + $0x68] sm:$0xff]
    %v1570 = vld [vmem:[%s1 + $0x70] sm:$0xff]
    %v1571 = vld [vmem:[%s1 + $0x78] sm:$0xff]
    %v1572 = vld [vmem:[%s1 + $0x80] sm:$0xff]
    %v1573 = vld [vmem:[%s1 + $0x88] sm:$0xff]
    %v1574 = vld [vmem:[%s1 + $0x90] sm:$0xff]
    %v1575 = vld [vmem:[%s1 + $0x98] sm:$0xff]
    %v1576 = vld [vmem:[%s1 + $0xa0] sm:$0xff]
    %v1577 = vld [vmem:[%s1 + $0xa8] sm:$0xff]
    %v1578 = vld [vmem:[%s1 + $0xb0] sm:$0xff]
    %v1579 = vld [vmem:[%s1 + $0xb8] sm:$0xff]
    %v1580 = vld [vmem:[%s1 + $0xc0] sm:$0xff]
    %v1581 = vld [vmem:[%s1 + $0xc8] sm:$0xff]
    %v1582 = vld [vmem:[%s1 + $0xd0] sm:$0xff]
    %v1583 = vld [vmem:[%s1 + $0xd8] sm:$0xff]
    %v1584 = vld [vmem:[%s1 + $0xe0] sm:$0xff]
    %v1585 = vld [vmem:[%s1 + $0xe8] sm:$0xff]
    %v1586 = vld [vmem:[%s1 + $0xf0] sm:$0xff]
    %v1587 = vld [vmem:[%s1 + $0xf8] sm:$0xff]
    %v1588 = vld [vmem:[%s1 + $0x100] sm:$0xff]
    %v1589 = vld [vmem:[%s1 + $0x108] sm:$0xff]
    %v1590 = vld [vmem:[%s1 + $0x110] sm:$0xff]
    %v1591 = vld [vmem:[%s1 + $0x118] sm:$0xff]
    %v1592 = vld [vmem:[%s1 + $0x120] sm:$0xff]
    %v1593 = vld [vmem:[%s1 + $0x128] sm:$0xff]
    %v1594 = vld [vmem:[%s1 + $0x130] sm:$0xff]
    %v1595 = vld [vmem:[%s1 + $0x138] sm:$0xff]
    %v1596 = vld [vmem:[%s1 + $0x140] sm:$0xff]
    %v1597 = vld [vmem:[%s1 + $0x148] sm:$0xff]
    %v1598 = vld [vmem:[%s1 + $0x150] sm:$0xff]
    %v1599 = vld [vmem:[%s1 + $0x158] sm:$0xff]
    %v1600 = vld [vmem:[%s1 + $0x160] sm:$0xff]
    %v1601 = vld [vmem:[%s1 + $0x168] sm:$0xff]
    %v1602 = vld [vmem:[%s1 + $0x170] sm:$0xff]
    %v1603 = vld [vmem:[%s1 + $0x178] sm:$0xff]
    %v1604 = vld [vmem:[%s1 + $0x180] sm:$0xff]
    %v1605 = vld [vmem:[%s1 + $0x188] sm:$0xff]
    %v1606 = vld [vmem:[%s1 + $0x190] sm:$0xff]
    %v1607 = vld [vmem:[%s1 + $0x198] sm:$0xff]
    %v1608 = vld [vmem:[%s1 + $0x1a0] sm:$0xff]
    %v1609 = vld [vmem:[%s1 + $0x1a8] sm:$0xff]
    %v1610 = vld [vmem:[%s1 + $0x1b0] sm:$0xff]
    %v1611 = vld [vmem:[%s1 + $0x1b8] sm:$0xff]
    %v1612 = vld [vmem:[%s1 + $0x1c0] sm:$0xff]
    %v1613 = vld [vmem:[%s1 + $0x1c8] sm:$0xff]
    %v1614 = vld [vmem:[%s1 + $0x1d0] sm:$0xff]
    %v1615 = vld [vmem:[%s1 + $0x1d8] sm:$0xff]
    %v1616 = vld [vmem:[%s1 + $0x1e0] sm:$0xff]
    %v1617 = vld [vmem:[%s1 + $0x1e8] sm:$0xff]
    %v1618 = vld [vmem:[%s1 + $0x1f0] sm:$0xff]
    %v1619 = vld [vmem:[%s1 + $0x1f8] sm:$0xff]
    %1620 = vmatprep.subr.mxu0 %v1617
    %1621 = vmatpush1.msra.mxu0 %v1616
    %1622 = vmatprep.subr.mxu0 %v1613
    %1623 = vmatpush1.msra.mxu0 %v1612
    %1624 = vmatprep.subr.mxu0 %v1609
    %1625 = vmatpush1.msra.mxu0 %v1608
    %1626 = vmatprep.subr.mxu0 %v1605
    %1627 = vmatpush1.msra.mxu0 %v1604
    %1628 = vmatprep.subr.mxu0 %v1601
    %1629 = vmatpush1.msra.mxu0 %v1600
    %1630 = vmatprep.subr.mxu0 %v1597
    %1631 = vmatpush1.msra.mxu0 %v1596
    %1632 = vmatprep.subr.mxu0 %v1593
    %1633 = vmatpush1.msra.mxu0 %v1592
    %1634 = vmatprep.subr.mxu0 %v1589
    %1635 = vmatpush1.msra.mxu0 %v1588
    %1636 = vmatprep.subr.mxu0 %v1585
    %1637 = vmatpush1.msra.mxu0 %v1584
    %1638 = vmatprep.subr.mxu0 %v1581
    %1639 = vmatpush1.msra.mxu0 %v1580
    %1640 = vmatprep.subr.mxu0 %v1577
    %1641 = vmatpush1.msra.mxu0 %v1576
    %1642 = vmatprep.subr.mxu0 %v1573
    %1643 = vmatpush1.msra.mxu0 %v1572
    %1644 = vmatprep.subr.mxu0 %v1569
    %1645 = vmatpush1.msra.mxu0 %v1568
    %1646 = vmatprep.subr.mxu0 %v1565
    %1647 = vmatpush1.msra.mxu0 %v1564
    %1648 = vmatprep.subr.mxu0 %v1561
    %1649 = vmatpush1.msra.mxu0 %v1560
    %1650 = vmatprep.subr.mxu0 %v1557
    %1651 = vmatpush1.msra.mxu0 %v1556
    %1652 = vmatprep.subr.mxu0 0.0
    %1653 = vmatpush2.msra.mxu0 0.0
    %1654 = vmatprep.subr.mxu0 0.0
    %1655 = vmatpush2.msra.mxu0 0.0
    %1656 = vmatprep.subr.mxu0 0.0
    %1657 = vmatpush2.msra.mxu0 0.0
    %1658 = vmatprep.subr.mxu0 0.0
    %1659 = vmatpush2.msra.mxu0 0.0
    %1660 = vmatprep.subr.mxu0 0.0
    %1661 = vmatpush2.msra.mxu0 0.0
    %1662 = vmatprep.subr.mxu0 0.0
    %1663 = vmatpush2.msra.mxu0 0.0
    %1664 = vmatprep.subr.mxu0 0.0
    %1665 = vmatpush2.msra.mxu0 0.0
    %1666 = vmatprep.subr.mxu0 0.0
    %1667 = vmatpush2.msra.mxu0 0.0
    %1668 = vmatprep.subr.mxu0 0.0
    %1669 = vmatpush2.msra.mxu0 0.0
    %1670 = vmatprep.subr.mxu0 0.0
    %1671 = vmatpush2.msra.mxu0 0.0
    %1672 = vmatprep.subr.mxu0 0.0
    %1673 = vmatpush2.msra.mxu0 0.0
    %1674 = vmatprep.subr.mxu0 0.0
    %1675 = vmatpush2.msra.mxu0 0.0
    %1676 = vmatprep.subr.mxu0 0.0
    %1677 = vmatpush2.msra.mxu0 0.0
    %1678 = vmatprep.subr.mxu0 0.0
    %1679 = vmatpush2.msra.mxu0 0.0
    %1680 = vmatprep.subr.mxu0 0.0
    %1681 = vmatpush2.msra.mxu0 0.0
    %1682 = vmatprep.subr.mxu0 0.0
    %1683 = vmatpush2.msra.mxu0 0.0
    %1684 = vmatprep.mubr.f32.mxu0 0.0
    %1685 = vmatmul.mubr.f32.gmra.mxu0 %v1549
    %v1686 = vpop.f32.mrf.mxu0
    %v1687 = vadd.f32 0.0, %v1686
    %v1688 = vpop.f32.mrf.mxu0
    %v1689 = vadd.f32 0.0, %v1688
    %1690 = vdwg.mxu0
    %1691 = vmatprep.subr.mxu0 %v1619
    %1692 = vmatpush1.msra.mxu0 %v1618
    %1693 = vmatprep.subr.mxu0 %v1615
    %1694 = vmatpush1.msra.mxu0 %v1614
    %1695 = vmatprep.subr.mxu0 %v1611
    %1696 = vmatpush1.msra.mxu0 %v1610
    %1697 = vmatprep.subr.mxu0 %v1607
    %1698 = vmatpush1.msra.mxu0 %v1606
    %1699 = vmatprep.subr.mxu0 %v1603
    %1700 = vmatpush1.msra.mxu0 %v1602
    %1701 = vmatprep.subr.mxu0 %v1599
    %1702 = vmatpush1.msra.mxu0 %v1598
    %1703 = vmatprep.subr.mxu0 %v1595
    %1704 = vmatpush1.msra.mxu0 %v1594
    %1705 = vmatprep.subr.mxu0 %v1591
    %1706 = vmatpush1.msra.mxu0 %v1590
    %1707 = vmatprep.subr.mxu0 %v1587
    %1708 = vmatpush1.msra.mxu0 %v1586
    %1709 = vmatprep.subr.mxu0 %v1583
    %1710 = vmatpush1.msra.mxu0 %v1582
    %1711 = vmatprep.subr.mxu0 %v1579
    %1712 = vmatpush1.msra.mxu0 %v1578
    %1713 = vmatprep.subr.mxu0 %v1575
    %1714 = vmatpush1.msra.mxu0 %v1574
    %1715 = vmatprep.subr.mxu0 %v1571
    %1716 = vmatpush1.msra.mxu0 %v1570
    %1717 = vmatprep.subr.mxu0 %v1567
    %1718 = vmatpush1.msra.mxu0 %v1566
    %1719 = vmatprep.subr.mxu0 %v1563
    %1720 = vmatpush1.msra.mxu0 %v1562
    %1721 = vmatprep.subr.mxu0 %v1559
    %1722 = vmatpush1.msra.mxu0 %v1558
    %1723 = vmatprep.subr.mxu0 0.0
    %1724 = vmatpush2.msra.mxu0 0.0
    %1725 = vmatprep.subr.mxu0 0.0
    %1726 = vmatpush2.msra.mxu0 0.0
    %1727 = vmatprep.subr.mxu0 0.0
    %1728 = vmatpush2.msra.mxu0 0.0
    %1729 = vmatprep.subr.mxu0 0.0
    %1730 = vmatpush2.msra.mxu0 0.0
    %1731 = vmatprep.subr.mxu0 0.0
    %1732 = vmatpush2.msra.mxu0 0.0
    %1733 = vmatprep.subr.mxu0 0.0
    %1734 = vmatpush2.msra.mxu0 0.0
    %1735 = vmatprep.subr.mxu0 0.0
    %1736 = vmatpush2.msra.mxu0 0.0
    %1737 = vmatprep.subr.mxu0 0.0
    %1738 = vmatpush2.msra.mxu0 0.0
    %1739 = vmatprep.subr.mxu0 0.0
    %1740 = vmatpush2.msra.mxu0 0.0
    %1741 = vmatprep.subr.mxu0 0.0
    %1742 = vmatpush2.msra.mxu0 0.0
    %1743 = vmatprep.subr.mxu0 0.0
    %1744 = vmatpush2.msra.mxu0 0.0
    %1745 = vmatprep.subr.mxu0 0.0
    %1746 = vmatpush2.msra.mxu0 0.0
    %1747 = vmatprep.subr.mxu0 0.0
    %1748 = vmatpush2.msra.mxu0 0.0
    %1749 = vmatprep.subr.mxu0 0.0
    %1750 = vmatpush2.msra.mxu0 0.0
    %1751 = vmatprep.subr.mxu0 0.0
    %1752 = vmatpush2.msra.mxu0 0.0
    %1753 = vmatprep.subr.mxu0 0.0
    %1754 = vmatpush2.msra.mxu0 0.0
    %1755 = vmatprep.mubr.f32.mxu0 0.0
    %1756 = vmatmul.mubr.f32.gmra.mxu0 %v1549
    %v1757 = vpop.f32.mrf.mxu0
    %v1758 = vadd.f32 0.0, %v1757
    %v1759 = vpop.f32.mrf.mxu0
    %v1760 = vadd.f32 0.0, %v1759
    %1761 = vdwg.mxu0
    %v1762 = vadd.f32 %v1552, %v1687
    %v1763 = vadd.f32 %v1553, %v1689
    %v1764 = vadd.f32 %v1554, %v1758
    %v1765 = vadd.f32 %v1555, %v1760
    %v1766 = vmul.f32 %v1762, 0.5
    %v1767 = vmul.f32 %v1763, 0.5
    %v1768 = vmul.f32 %v1764, 0.5
    %v1769 = vtanh.pop %v1766
    %v1770 = vtanh.pop %v1767
    %v1771 = vtanh.pop %v1768
    %v1772 = vadd.f32 %v1769, 1.0
    %v1773 = vadd.f32 %v1770, 1.0
    %v1774 = vadd.f32 %v1771, 1.0
    %v1775 = vmul.f32 %v1772, 0.5
    %v1776 = vmul.f32 %v1773, 0.5
    %v1777 = vmul.f32 %v1774, 0.5
    %v1778 = vtanh.pop %v1765
    %v1779 = vmul.f32 %v1776, %v1547
    %v1780 = vmul.f32 %v1775, %v1778
    %v1781 = vadd.f32 %v1779, %v1780
    %v1782 = vtanh.pop %v1781
    %v1783 = vmul.f32 %v1777, %v1782
    %1784 = vst.msk [vmem:[#allocation3 + $0x30] sm:$0xff] %vm378, %v1783
    %1785 = vst.msk [vmem:[#allocation3 + $0x8] sm:$0xff] %vm380, %v1783
    %v1786 = vld [vmem:[#allocation2 + $0xe0] sm:$0xff]
    %v1787 = vld [vmem:[#allocation2 + $0xe8] sm:$0xff]
    %v1788 = vld [vmem:[#allocation2 + $0xf0] sm:$0xff]
    %v1789 = vld [vmem:[#allocation2 + $0xf8] sm:$0xff]
    %v1790 = vld [vmem:[%s1] sm:$0xff]
    %v1791 = vld [vmem:[%s1 + $0x8] sm:$0xff]
    %v1792 = vld [vmem:[%s1 + $0x10] sm:$0xff]
    %v1793 = vld [vmem:[%s1 + $0x18] sm:$0xff]
    %v1794 = vld [vmem:[%s1 + $0x20] sm:$0xff]
    %v1795 = vld [vmem:[%s1 + $0x28] sm:$0xff]
    %v1796 = vld [vmem:[%s1 + $0x30] sm:$0xff]
    %v1797 = vld [vmem:[%s1 + $0x38] sm:$0xff]
    %v1798 = vld [vmem:[%s1 + $0x40] sm:$0xff]
    %v1799 = vld [vmem:[%s1 + $0x48] sm:$0xff]
    %v1800 = vld [vmem:[%s1 + $0x50] sm:$0xff]
    %v1801 = vld [vmem:[%s1 + $0x58] sm:$0xff]
    %v1802 = vld [vmem:[%s1 + $0x60] sm:$0xff]
    %v1803 = vld [vmem:[%s1 + $0x68] sm:$0xff]
    %v1804 = vld [vmem:[%s1 + $0x70] sm:$0xff]
    %v1805 = vld [vmem:[%s1 + $0x78] sm:$0xff]
    %v1806 = vld [vmem:[%s1 + $0x80] sm:$0xff]
    %v1807 = vld [vmem:[%s1 + $0x88] sm:$0xff]
    %v1808 = vld [vmem:[%s1 + $0x90] sm:$0xff]
    %v1809 = vld [vmem:[%s1 + $0x98] sm:$0xff]
    %v1810 = vld [vmem:[%s1 + $0xa0] sm:$0xff]
    %v1811 = vld [vmem:[%s1 + $0xa8] sm:$0xff]
    %v1812 = vld [vmem:[%s1 + $0xb0] sm:$0xff]
    %v1813 = vld [vmem:[%s1 + $0xb8] sm:$0xff]
    %v1814 = vld [vmem:[%s1 + $0xc0] sm:$0xff]
    %v1815 = vld [vmem:[%s1 + $0xc8] sm:$0xff]
    %v1816 = vld [vmem:[%s1 + $0xd0] sm:$0xff]
    %v1817 = vld [vmem:[%s1 + $0xd8] sm:$0xff]
    %v1818 = vld [vmem:[%s1 + $0xe0] sm:$0xff]
    %v1819 = vld [vmem:[%s1 + $0xe8] sm:$0xff]
    %v1820 = vld [vmem:[%s1 + $0xf0] sm:$0xff]
    %v1821 = vld [vmem:[%s1 + $0xf8] sm:$0xff]
    %v1822 = vld [vmem:[%s1 + $0x100] sm:$0xff]
    %v1823 = vld [vmem:[%s1 + $0x108] sm:$0xff]
    %v1824 = vld [vmem:[%s1 + $0x110] sm:$0xff]
    %v1825 = vld [vmem:[%s1 + $0x118] sm:$0xff]
    %v1826 = vld [vmem:[%s1 + $0x120] sm:$0xff]
    %v1827 = vld [vmem:[%s1 + $0x128] sm:$0xff]
    %v1828 = vld [vmem:[%s1 + $0x130] sm:$0xff]
    %v1829 = vld [vmem:[%s1 + $0x138] sm:$0xff]
    %v1830 = vld [vmem:[%s1 + $0x140] sm:$0xff]
    %v1831 = vld [vmem:[%s1 + $0x148] sm:$0xff]
    %v1832 = vld [vmem:[%s1 + $0x150] sm:$0xff]
    %v1833 = vld [vmem:[%s1 + $0x158] sm:$0xff]
    %v1834 = vld [vmem:[%s1 + $0x160] sm:$0xff]
    %v1835 = vld [vmem:[%s1 + $0x168] sm:$0xff]
    %v1836 = vld [vmem:[%s1 + $0x170] sm:$0xff]
    %v1837 = vld [vmem:[%s1 + $0x178] sm:$0xff]
    %v1838 = vld [vmem:[%s1 + $0x180] sm:$0xff]
    %v1839 = vld [vmem:[%s1 + $0x188] sm:$0xff]
    %v1840 = vld [vmem:[%s1 + $0x190] sm:$0xff]
    %v1841 = vld [vmem:[%s1 + $0x198] sm:$0xff]
    %v1842 = vld [vmem:[%s1 + $0x1a0] sm:$0xff]
    %v1843 = vld [vmem:[%s1 + $0x1a8] sm:$0xff]
    %v1844 = vld [vmem:[%s1 + $0x1b0] sm:$0xff]
    %v1845 = vld [vmem:[%s1 + $0x1b8] sm:$0xff]
    %v1846 = vld [vmem:[%s1 + $0x1c0] sm:$0xff]
    %v1847 = vld [vmem:[%s1 + $0x1c8] sm:$0xff]
    %v1848 = vld [vmem:[%s1 + $0x1d0] sm:$0xff]
    %v1849 = vld [vmem:[%s1 + $0x1d8] sm:$0xff]
    %v1850 = vld [vmem:[%s1 + $0x1e0] sm:$0xff]
    %v1851 = vld [vmem:[%s1 + $0x1e8] sm:$0xff]
    %v1852 = vld [vmem:[%s1 + $0x1f0] sm:$0xff]
    %v1853 = vld [vmem:[%s1 + $0x1f8] sm:$0xff]
    %1854 = vmatprep.subr.mxu0 %v1851
    %1855 = vmatpush1.msra.mxu0 %v1850
    %1856 = vmatprep.subr.mxu0 %v1847
    %1857 = vmatpush1.msra.mxu0 %v1846
    %1858 = vmatprep.subr.mxu0 %v1843
    %1859 = vmatpush1.msra.mxu0 %v1842
    %1860 = vmatprep.subr.mxu0 %v1839
    %1861 = vmatpush1.msra.mxu0 %v1838
    %1862 = vmatprep.subr.mxu0 %v1835
    %1863 = vmatpush1.msra.mxu0 %v1834
    %1864 = vmatprep.subr.mxu0 %v1831
    %1865 = vmatpush1.msra.mxu0 %v1830
    %1866 = vmatprep.subr.mxu0 %v1827
    %1867 = vmatpush1.msra.mxu0 %v1826
    %1868 = vmatprep.subr.mxu0 %v1823
    %1869 = vmatpush1.msra.mxu0 %v1822
    %1870 = vmatprep.subr.mxu0 %v1819
    %1871 = vmatpush1.msra.mxu0 %v1818
    %1872 = vmatprep.subr.mxu0 %v1815
    %1873 = vmatpush1.msra.mxu0 %v1814
    %1874 = vmatprep.subr.mxu0 %v1811
    %1875 = vmatpush1.msra.mxu0 %v1810
    %1876 = vmatprep.subr.mxu0 %v1807
    %1877 = vmatpush1.msra.mxu0 %v1806
    %1878 = vmatprep.subr.mxu0 %v1803
    %1879 = vmatpush1.msra.mxu0 %v1802
    %1880 = vmatprep.subr.mxu0 %v1799
    %1881 = vmatpush1.msra.mxu0 %v1798
    %1882 = vmatprep.subr.mxu0 %v1795
    %1883 = vmatpush1.msra.mxu0 %v1794
    %1884 = vmatprep.subr.mxu0 %v1791
    %1885 = vmatpush1.msra.mxu0 %v1790
    %1886 = vmatprep.subr.mxu0 0.0
    %1887 = vmatpush2.msra.mxu0 0.0
    %1888 = vmatprep.subr.mxu0 0.0
    %1889 = vmatpush2.msra.mxu0 0.0
    %1890 = vmatprep.subr.mxu0 0.0
    %1891 = vmatpush2.msra.mxu0 0.0
    %1892 = vmatprep.subr.mxu0 0.0
    %1893 = vmatpush2.msra.mxu0 0.0
    %1894 = vmatprep.subr.mxu0 0.0
    %1895 = vmatpush2.msra.mxu0 0.0
    %1896 = vmatprep.subr.mxu0 0.0
    %1897 = vmatpush2.msra.mxu0 0.0
    %1898 = vmatprep.subr.mxu0 0.0
    %1899 = vmatpush2.msra.mxu0 0.0
    %1900 = vmatprep.subr.mxu0 0.0
    %1901 = vmatpush2.msra.mxu0 0.0
    %1902 = vmatprep.subr.mxu0 0.0
    %1903 = vmatpush2.msra.mxu0 0.0
    %1904 = vmatprep.subr.mxu0 0.0
    %1905 = vmatpush2.msra.mxu0 0.0
    %1906 = vmatprep.subr.mxu0 0.0
    %1907 = vmatpush2.msra.mxu0 0.0
    %1908 = vmatprep.subr.mxu0 0.0
    %1909 = vmatpush2.msra.mxu0 0.0
    %1910 = vmatprep.subr.mxu0 0.0
    %1911 = vmatpush2.msra.mxu0 0.0
    %1912 = vmatprep.subr.mxu0 0.0
    %1913 = vmatpush2.msra.mxu0 0.0
    %1914 = vmatprep.subr.mxu0 0.0
    %1915 = vmatpush2.msra.mxu0 0.0
    %1916 = vmatprep.subr.mxu0 0.0
    %1917 = vmatpush2.msra.mxu0 0.0
    %1918 = vmatprep.mubr.f32.mxu0 0.0
    %1919 = vmatmul.mubr.f32.gmra.mxu0 %v1783
    %v1920 = vpop.f32.mrf.mxu0
    %v1921 = vadd.f32 0.0, %v1920
    %v1922 = vpop.f32.mrf.mxu0
    %v1923 = vadd.f32 0.0, %v1922
    %1924 = vdwg.mxu0
    %1925 = vmatprep.subr.mxu0 %v1853
    %1926 = vmatpush1.msra.mxu0 %v1852
    %1927 = vmatprep.subr.mxu0 %v1849
    %1928 = vmatpush1.msra.mxu0 %v1848
    %1929 = vmatprep.subr.mxu0 %v1845
    %1930 = vmatpush1.msra.mxu0 %v1844
    %1931 = vmatprep.subr.mxu0 %v1841
    %1932 = vmatpush1.msra.mxu0 %v1840
    %1933 = vmatprep.subr.mxu0 %v1837
    %1934 = vmatpush1.msra.mxu0 %v1836
    %1935 = vmatprep.subr.mxu0 %v1833
    %1936 = vmatpush1.msra.mxu0 %v1832
    %1937 = vmatprep.subr.mxu0 %v1829
    %1938 = vmatpush1.msra.mxu0 %v1828
    %1939 = vmatprep.subr.mxu0 %v1825
    %1940 = vmatpush1.msra.mxu0 %v1824
    %1941 = vmatprep.subr.mxu0 %v1821
    %1942 = vmatpush1.msra.mxu0 %v1820
    %1943 = vmatprep.subr.mxu0 %v1817
    %1944 = vmatpush1.msra.mxu0 %v1816
    %1945 = vmatprep.subr.mxu0 %v1813
    %1946 = vmatpush1.msra.mxu0 %v1812
    %1947 = vmatprep.subr.mxu0 %v1809
    %1948 = vmatpush1.msra.mxu0 %v1808
    %1949 = vmatprep.subr.mxu0 %v1805
    %1950 = vmatpush1.msra.mxu0 %v1804
    %1951 = vmatprep.subr.mxu0 %v1801
    %1952 = vmatpush1.msra.mxu0 %v1800
    %1953 = vmatprep.subr.mxu0 %v1797
    %1954 = vmatpush1.msra.mxu0 %v1796
    %1955 = vmatprep.subr.mxu0 %v1793
    %1956 = vmatpush1.msra.mxu0 %v1792
    %1957 = vmatprep.subr.mxu0 0.0
    %1958 = vmatpush2.msra.mxu0 0.0
    %1959 = vmatprep.subr.mxu0 0.0
    %1960 = vmatpush2.msra.mxu0 0.0
    %1961 = vmatprep.subr.mxu0 0.0
    %1962 = vmatpush2.msra.mxu0 0.0
    %1963 = vmatprep.subr.mxu0 0.0
    %1964 = vmatpush2.msra.mxu0 0.0
    %1965 = vmatprep.subr.mxu0 0.0
    %1966 = vmatpush2.msra.mxu0 0.0
    %1967 = vmatprep.subr.mxu0 0.0
    %1968 = vmatpush2.msra.mxu0 0.0
    %1969 = vmatprep.subr.mxu0 0.0
    %1970 = vmatpush2.msra.mxu0 0.0
    %1971 = vmatprep.subr.mxu0 0.0
    %1972 = vmatpush2.msra.mxu0 0.0
    %1973 = vmatprep.subr.mxu0 0.0
    %1974 = vmatpush2.msra.mxu0 0.0
    %1975 = vmatprep.subr.mxu0 0.0
    %1976 = vmatpush2.msra.mxu0 0.0
    %1977 = vmatprep.subr.mxu0 0.0
    %1978 = vmatpush2.msra.mxu0 0.0
    %1979 = vmatprep.subr.mxu0 0.0
    %1980 = vmatpush2.msra.mxu0 0.0
    %1981 = vmatprep.subr.mxu0 0.0
    %1982 = vmatpush2.msra.mxu0 0.0
    %1983 = vmatprep.subr.mxu0 0.0
    %1984 = vmatpush2.msra.mxu0 0.0
    %1985 = vmatprep.subr.mxu0 0.0
    %1986 = vmatpush2.msra.mxu0 0.0
    %1987 = vmatprep.subr.mxu0 0.0
    %1988 = vmatpush2.msra.mxu0 0.0
    %1989 = vmatprep.mubr.f32.mxu0 0.0
    %1990 = vmatmul.mubr.f32.gmra.mxu0 %v1783
    %v1991 = vpop.f32.mrf.mxu0
    %v1992 = vadd.f32 0.0, %v1991
    %v1993 = vpop.f32.mrf.mxu0
    %v1994 = vadd.f32 0.0, %v1993
    %1995 = vdwg.mxu0
    %v1996 = vadd.f32 %v1786, %v1921
    %v1997 = vadd.f32 %v1787, %v1923
    %v1998 = vadd.f32 %v1788, %v1992
    %v1999 = vadd.f32 %v1789, %v1994
    %v2000 = vmul.f32 %v1996, 0.5
    %v2001 = vmul.f32 %v1997, 0.5
    %v2002 = vmul.f32 %v1998, 0.5
    %v2003 = vtanh.pop %v2000
    %v2004 = vtanh.pop %v2001
    %v2005 = vtanh.pop %v2002
    %v2006 = vadd.f32 %v2003, 1.0
    %v2007 = vadd.f32 %v2004, 1.0
    %v2008 = vadd.f32 %v2005, 1.0
    %v2009 = vmul.f32 %v2006, 0.5
    %v2010 = vmul.f32 %v2007, 0.5
    %v2011 = vmul.f32 %v2008, 0.5
    %v2012 = vtanh.pop %v1999
    %v2013 = vmul.f32 %v2010, %v1781
    %v2014 = vmul.f32 %v2009, %v2012
    %v2015 = vadd.f32 %v2013, %v2014
    %v2016 = vtanh.pop %v2015
    %v2017 = vmul.f32 %v2011, %v2016
    %2018 = vst.msk [vmem:[#allocation3 + $0x38] sm:$0xff] %vm378, %v2017
    %2019 = vst.msk [vmem:[#allocation3] sm:$0xff] %vm380, %v2017
    %v2020 = vld [vmem:[#allocation3] sm:$0xff]
    %v2021 = vld [vmem:[#allocation3 + $0x8] sm:$0xff]
    %v2022 = vld [vmem:[#allocation3 + $0x10] sm:$0xff]
    %v2023 = vld [vmem:[#allocation3 + $0x18] sm:$0xff]
    %v2024 = vld [vmem:[#allocation3 + $0x20] sm:$0xff]
    %v2025 = vld [vmem:[#allocation3 + $0x28] sm:$0xff]
    %v2026 = vld [vmem:[#allocation3 + $0x30] sm:$0xff]
    %v2027 = vld [vmem:[#allocation3 + $0x38] sm:$0xff]
    %v2028 = vld [vmem:[#allocation5] sm:$0xff]
    %v2029 = vld [vmem:[#allocation5 + $0x8] sm:$0xff]
    %v2030 = vld [vmem:[#allocation5 + $0x10] sm:$0xff]
    %v2031 = vld [vmem:[#allocation5 + $0x18] sm:$0xff]
    %v2032 = vld [vmem:[#allocation5 + $0x20] sm:$0xff]
    %v2033 = vld [vmem:[#allocation5 + $0x28] sm:$0xff]
    %v2034 = vld [vmem:[#allocation5 + $0x30] sm:$0xff]
    %v2035 = vld [vmem:[#allocation5 + $0x38] sm:$0xff]
    %v2036 = vld [vmem:[#allocation5 + $0x40] sm:$0xff]
    %v2037 = vld [vmem:[#allocation5 + $0x48] sm:$0xff]
    %v2038 = vld [vmem:[#allocation5 + $0x50] sm:$0xff]
    %v2039 = vld [vmem:[#allocation5 + $0x58] sm:$0xff]
    %v2040 = vld [vmem:[#allocation5 + $0x60] sm:$0xff]
    %v2041 = vld [vmem:[#allocation5 + $0x68] sm:$0xff]
    %v2042 = vld [vmem:[#allocation5 + $0x70] sm:$0xff]
    %v2043 = vld [vmem:[#allocation5 + $0x78] sm:$0xff]
    %v2044 = vld [vmem:[#allocation5 + $0x80] sm:$0xff]
    %v2045 = vld [vmem:[#allocation5 + $0x88] sm:$0xff]
    %v2046 = vld [vmem:[#allocation5 + $0x90] sm:$0xff]
    %v2047 = vld [vmem:[#allocation5 + $0x98] sm:$0xff]
    %v2048 = vld [vmem:[#allocation5 + $0xa0] sm:$0xff]
    %v2049 = vld [vmem:[#allocation5 + $0xa8] sm:$0xff]
    %v2050 = vld [vmem:[#allocation5 + $0xb0] sm:$0xff]
    %v2051 = vld [vmem:[#allocation5 + $0xb8] sm:$0xff]
    %v2052 = vld [vmem:[#allocation5 + $0xc0] sm:$0xff]
    %v2053 = vld [vmem:[#allocation5 + $0xc8] sm:$0xff]
    %v2054 = vld [vmem:[#allocation5 + $0xd0] sm:$0xff]
    %v2055 = vld [vmem:[#allocation5 + $0xd8] sm:$0xff]
    %v2056 = vld [vmem:[#allocation5 + $0xe0] sm:$0xff]
    %v2057 = vld [vmem:[#allocation5 + $0xe8] sm:$0xff]
    %v2058 = vld [vmem:[#allocation5 + $0xf0] sm:$0xff]
    %v2059 = vld [vmem:[#allocation5 + $0xf8] sm:$0xff]
    %v2060 = vld [vmem:[#allocation5 + $0x100] sm:$0xff]
    %v2061 = vld [vmem:[#allocation5 + $0x108] sm:$0xff]
    %v2062 = vld [vmem:[#allocation5 + $0x110] sm:$0xff]
    %v2063 = vld [vmem:[#allocation5 + $0x118] sm:$0xff]
    %v2064 = vld [vmem:[#allocation5 + $0x120] sm:$0xff]
    %v2065 = vld [vmem:[#allocation5 + $0x128] sm:$0xff]
    %v2066 = vld [vmem:[#allocation5 + $0x130] sm:$0xff]
    %v2067 = vld [vmem:[#allocation5 + $0x138] sm:$0xff]
    %v2068 = vld [vmem:[#allocation5 + $0x140] sm:$0xff]
    %v2069 = vld [vmem:[#allocation5 + $0x148] sm:$0xff]
    %v2070 = vld [vmem:[#allocation5 + $0x150] sm:$0xff]
    %v2071 = vld [vmem:[#allocation5 + $0x158] sm:$0xff]
    %v2072 = vld [vmem:[#allocation5 + $0x160] sm:$0xff]
    %v2073 = vld [vmem:[#allocation5 + $0x168] sm:$0xff]
    %v2074 = vld [vmem:[#allocation5 + $0x170] sm:$0xff]
    %v2075 = vld [vmem:[#allocation5 + $0x178] sm:$0xff]
    %v2076 = vld [vmem:[#allocation5 + $0x180] sm:$0xff]
    %v2077 = vld [vmem:[#allocation5 + $0x188] sm:$0xff]
    %v2078 = vld [vmem:[#allocation5 + $0x190] sm:$0xff]
    %v2079 = vld [vmem:[#allocation5 + $0x198] sm:$0xff]
    %v2080 = vld [vmem:[#allocation5 + $0x1a0] sm:$0xff]
    %v2081 = vld [vmem:[#allocation5 + $0x1a8] sm:$0xff]
    %v2082 = vld [vmem:[#allocation5 + $0x1b0] sm:$0xff]
    %v2083 = vld [vmem:[#allocation5 + $0x1b8] sm:$0xff]
    %v2084 = vld [vmem:[#allocation5 + $0x1c0] sm:$0xff]
    %v2085 = vld [vmem:[#allocation5 + $0x1c8] sm:$0xff]
    %v2086 = vld [vmem:[#allocation5 + $0x1d0] sm:$0xff]
    %v2087 = vld [vmem:[#allocation5 + $0x1d8] sm:$0xff]
    %v2088 = vld [vmem:[#allocation5 + $0x1e0] sm:$0xff]
    %v2089 = vld [vmem:[#allocation5 + $0x1e8] sm:$0xff]
    %v2090 = vld [vmem:[#allocation5 + $0x1f0] sm:$0xff]
    %v2091 = vld [vmem:[#allocation5 + $0x1f8] sm:$0xff]
    %s2092 = scalar_lea.vmem [#allocation5], 512
    %v2093 = vld [vmem:[%s2092] ss:$8 sm:$0xf]
    %v2095 = vlaneseq
    %v2096 = vshrl.u32 %v2095, 7
    %v2097 = vsub.s32 0, %v2096
    %v2098 = vrot.slane %v2093, %v2097
    %v2099 = vlaneseq
    %v2100 = vshrl.u32 %v2099, 7
    %v2101 = vsub.s32 1, %v2100
    %v2102 = vrot.slane %v2093, %v2101
    %v2103 = vlaneseq
    %v2104 = vshrl.u32 %v2103, 7
    %v2105 = vsub.s32 2, %v2104
    %v2106 = vrot.slane %v2093, %v2105
    %v2107 = vlaneseq
    %v2108 = vshrl.u32 %v2107, 7
    %v2109 = vsub.s32 3, %v2108
    %v2110 = vrot.slane %v2093, %v2109
    %2115 = vmatprep.subr.mxu0 %v2089
    %2116 = vmatpush1.msra.mxu0 %v2088
    %2117 = vmatprep.subr.mxu0 %v2085
    %2118 = vmatpush1.msra.mxu0 %v2084
    %2119 = vmatprep.subr.mxu0 %v2081
    %2120 = vmatpush1.msra.mxu0 %v2080
    %2121 = vmatprep.subr.mxu0 %v2077
    %2122 = vmatpush1.msra.mxu0 %v2076
    %2123 = vmatprep.subr.mxu0 %v2073
    %2124 = vmatpush1.msra.mxu0 %v2072
    %2125 = vmatprep.subr.mxu0 %v2069
    %2126 = vmatpush1.msra.mxu0 %v2068
    %2127 = vmatprep.subr.mxu0 %v2065
    %2128 = vmatpush1.msra.mxu0 %v2064
    %2129 = vmatprep.subr.mxu0 %v2061
    %2130 = vmatpush1.msra.mxu0 %v2060
    %2131 = vmatprep.subr.mxu0 %v2057
    %2132 = vmatpush1.msra.mxu0 %v2056
    %2133 = vmatprep.subr.mxu0 %v2053
    %2134 = vmatpush1.msra.mxu0 %v2052
    %2135 = vmatprep.subr.mxu0 %v2049
    %2136 = vmatpush1.msra.mxu0 %v2048
    %2137 = vmatprep.subr.mxu0 %v2045
    %2138 = vmatpush1.msra.mxu0 %v2044
    %2139 = vmatprep.subr.mxu0 %v2041
    %2140 = vmatpush1.msra.mxu0 %v2040
    %2141 = vmatprep.subr.mxu0 %v2037
    %2142 = vmatpush1.msra.mxu0 %v2036
    %2143 = vmatprep.subr.mxu0 %v2033
    %2144 = vmatpush1.msra.mxu0 %v2032
    %2145 = vmatprep.subr.mxu0 %v2029
    %2146 = vmatpush1.msra.mxu0 %v2028
    %2147 = vmatprep.subr.mxu0 0.0
    %2148 = vmatpush2.msra.mxu0 0.0
    %2149 = vmatprep.subr.mxu0 0.0
    %2150 = vmatpush2.msra.mxu0 0.0
    %2151 = vmatprep.subr.mxu0 0.0
    %2152 = vmatpush2.msra.mxu0 0.0
    %2153 = vmatprep.subr.mxu0 0.0
    %2154 = vmatpush2.msra.mxu0 0.0
    %2155 = vmatprep.subr.mxu0 0.0
    %2156 = vmatpush2.msra.mxu0 0.0
    %2157 = vmatprep.subr.mxu0 0.0
    %2158 = vmatpush2.msra.mxu0 0.0
    %2159 = vmatprep.subr.mxu0 0.0
    %2160 = vmatpush2.msra.mxu0 0.0
    %2161 = vmatprep.subr.mxu0 0.0
    %2162 = vmatpush2.msra.mxu0 0.0
    %2163 = vmatprep.subr.mxu0 0.0
    %2164 = vmatpush2.msra.mxu0 0.0
    %2165 = vmatprep.subr.mxu0 0.0
    %2166 = vmatpush2.msra.mxu0 0.0
    %2167 = vmatprep.subr.mxu0 0.0
    %2168 = vmatpush2.msra.mxu0 0.0
    %2169 = vmatprep.subr.mxu0 0.0
    %2170 = vmatpush2.msra.mxu0 0.0
    %2171 = vmatprep.subr.mxu0 0.0
    %2172 = vmatpush2.msra.mxu0 0.0
    %2173 = vmatprep.subr.mxu0 0.0
    %2174 = vmatpush2.msra.mxu0 0.0
    %2175 = vmatprep.subr.mxu0 0.0
    %2176 = vmatpush2.msra.mxu0 0.0
    %2177 = vmatprep.subr.mxu0 0.0
    %2178 = vmatpush2.msra.mxu0 0.0
    %2179 = vmatprep.mubr.f32.mxu0 0.0
    %2180 = vmatmul.mubr.f32.gmra.mxu0 %v2020
    %v2181 = vpop.f32.mrf.mxu0
    %v2182 = vadd.f32 %v2098, %v2181
    %v2183 = vpop.f32.mrf.mxu0
    %v2184 = vadd.f32 %v2102, %v2183
    %2185 = vmatprep.mubr.f32.mxu0 0.0
    %2186 = vmatmul.mubr.f32.gmra.mxu0 %v2021
    %v2187 = vpop.f32.mrf.mxu0
    %v2188 = vadd.f32 %v2098, %v2187
    %v2189 = vpop.f32.mrf.mxu0
    %v2190 = vadd.f32 %v2102, %v2189
    %2191 = vmatprep.mubr.f32.mxu0 0.0
    %2192 = vmatmul.mubr.f32.gmra.mxu0 %v2022
    %v2193 = vpop.f32.mrf.mxu0
    %v2194 = vadd.f32 %v2098, %v2193
    %v2195 = vpop.f32.mrf.mxu0
    %v2196 = vadd.f32 %v2102, %v2195
    %2197 = vmatprep.mubr.f32.mxu0 0.0
    %2198 = vmatmul.mubr.f32.gmra.mxu0 %v2023
    %v2199 = vpop.f32.mrf.mxu0
    %v2200 = vadd.f32 %v2098, %v2199
    %v2201 = vpop.f32.mrf.mxu0
    %v2202 = vadd.f32 %v2102, %v2201
    %2203 = vmatprep.mubr.f32.mxu0 0.0
    %2204 = vmatmul.mubr.f32.gmra.mxu0 %v2024
    %v2205 = vpop.f32.mrf.mxu0
    %v2206 = vadd.f32 %v2098, %v2205
    %v2207 = vpop.f32.mrf.mxu0
    %v2208 = vadd.f32 %v2102, %v2207
    %2209 = vmatprep.mubr.f32.mxu0 0.0
    %2210 = vmatmul.mubr.f32.gmra.mxu0 %v2025
    %v2211 = vpop.f32.mrf.mxu0
    %v2212 = vadd.f32 %v2098, %v2211
    %v2213 = vpop.f32.mrf.mxu0
    %v2214 = vadd.f32 %v2102, %v2213
    %2215 = vmatprep.mubr.f32.mxu0 0.0
    %2216 = vmatmul.mubr.f32.gmra.mxu0 %v2026
    %v2217 = vpop.f32.mrf.mxu0
    %v2218 = vadd.f32 %v2098, %v2217
    %v2219 = vpop.f32.mrf.mxu0
    %v2220 = vadd.f32 %v2102, %v2219
    %2221 = vmatprep.mubr.f32.mxu0 0.0
    %2222 = vmatmul.mubr.f32.gmra.mxu0 %v2027
    %v2223 = vpop.f32.mrf.mxu0
    %v2224 = vadd.f32 %v2098, %v2223
    %v2225 = vpop.f32.mrf.mxu0
    %v2226 = vadd.f32 %v2102, %v2225
    %2227 = vdwg.mxu0
    %2228 = vmatprep.subr.mxu0 %v2091
    %2229 = vmatpush1.msra.mxu0 %v2090
    %2230 = vmatprep.subr.mxu0 %v2087
    %2231 = vmatpush1.msra.mxu0 %v2086
    %2232 = vmatprep.subr.mxu0 %v2083
    %2233 = vmatpush1.msra.mxu0 %v2082
    %2234 = vmatprep.subr.mxu0 %v2079
    %2235 = vmatpush1.msra.mxu0 %v2078
    %2236 = vmatprep.subr.mxu0 %v2075
    %2237 = vmatpush1.msra.mxu0 %v2074
    %2238 = vmatprep.subr.mxu0 %v2071
    %2239 = vmatpush1.msra.mxu0 %v2070
    %2240 = vmatprep.subr.mxu0 %v2067
    %2241 = vmatpush1.msra.mxu0 %v2066
    %2242 = vmatprep.subr.mxu0 %v2063
    %2243 = vmatpush1.msra.mxu0 %v2062
    %2244 = vmatprep.subr.mxu0 %v2059
    %2245 = vmatpush1.msra.mxu0 %v2058
    %2246 = vmatprep.subr.mxu0 %v2055
    %2247 = vmatpush1.msra.mxu0 %v2054
    %2248 = vmatprep.subr.mxu0 %v2051
    %2249 = vmatpush1.msra.mxu0 %v2050
    %2250 = vmatprep.subr.mxu0 %v2047
    %2251 = vmatpush1.msra.mxu0 %v2046
    %2252 = vmatprep.subr.mxu0 %v2043
    %2253 = vmatpush1.msra.mxu0 %v2042
    %2254 = vmatprep.subr.mxu0 %v2039
    %2255 = vmatpush1.msra.mxu0 %v2038
    %2256 = vmatprep.subr.mxu0 %v2035
    %2257 = vmatpush1.msra.mxu0 %v2034
    %2258 = vmatprep.subr.mxu0 %v2031
    %2259 = vmatpush1.msra.mxu0 %v2030
    %2260 = vmatprep.subr.mxu0 0.0
    %2261 = vmatpush2.msra.mxu0 0.0
    %2262 = vmatprep.subr.mxu0 0.0
    %2263 = vmatpush2.msra.mxu0 0.0
    %2264 = vmatprep.subr.mxu0 0.0
    %2265 = vmatpush2.msra.mxu0 0.0
    %2266 = vmatprep.subr.mxu0 0.0
    %2267 = vmatpush2.msra.mxu0 0.0
    %2268 = vmatprep.subr.mxu0 0.0
    %2269 = vmatpush2.msra.mxu0 0.0
    %2270 = vmatprep.subr.mxu0 0.0
    %2271 = vmatpush2.msra.mxu0 0.0
    %2272 = vmatprep.subr.mxu0 0.0
    %2273 = vmatpush2.msra.mxu0 0.0
    %2274 = vmatprep.subr.mxu0 0.0
    %2275 = vmatpush2.msra.mxu0 0.0
    %2276 = vmatprep.subr.mxu0 0.0
    %2277 = vmatpush2.msra.mxu0 0.0
    %2278 = vmatprep.subr.mxu0 0.0
    %2279 = vmatpush2.msra.mxu0 0.0
    %2280 = vmatprep.subr.mxu0 0.0
    %2281 = vmatpush2.msra.mxu0 0.0
    %2282 = vmatprep.subr.mxu0 0.0
    %2283 = vmatpush2.msra.mxu0 0.0
    %2284 = vmatprep.subr.mxu0 0.0
    %2285 = vmatpush2.msra.mxu0 0.0
    %2286 = vmatprep.subr.mxu0 0.0
    %2287 = vmatpush2.msra.mxu0 0.0
    %2288 = vmatprep.subr.mxu0 0.0
    %2289 = vmatpush2.msra.mxu0 0.0
    %2290 = vmatprep.subr.mxu0 0.0
    %2291 = vmatpush2.msra.mxu0 0.0
    %2292 = vmatprep.mubr.f32.mxu0 0.0
    %2293 = vmatmul.mubr.f32.gmra.mxu0 %v2020
    %v2294 = vpop.f32.mrf.mxu0
    %v2295 = vadd.f32 %v2106, %v2294
    %v2296 = vpop.f32.mrf.mxu0
    %v2297 = vadd.f32 %v2110, %v2296
    %2298 = vmatprep.mubr.f32.mxu0 0.0
    %2299 = vmatmul.mubr.f32.gmra.mxu0 %v2021
    %v2300 = vpop.f32.mrf.mxu0
    %v2301 = vadd.f32 %v2106, %v2300
    %v2302 = vpop.f32.mrf.mxu0
    %v2303 = vadd.f32 %v2110, %v2302
    %2304 = vmatprep.mubr.f32.mxu0 0.0
    %2305 = vmatmul.mubr.f32.gmra.mxu0 %v2022
    %v2306 = vpop.f32.mrf.mxu0
    %v2307 = vadd.f32 %v2106, %v2306
    %v2308 = vpop.f32.mrf.mxu0
    %v2309 = vadd.f32 %v2110, %v2308
    %2310 = vmatprep.mubr.f32.mxu0 0.0
    %2311 = vmatmul.mubr.f32.gmra.mxu0 %v2023
    %v2312 = vpop.f32.mrf.mxu0
    %v2313 = vadd.f32 %v2106, %v2312
    %v2314 = vpop.f32.mrf.mxu0
    %v2315 = vadd.f32 %v2110, %v2314
    %2316 = vmatprep.mubr.f32.mxu0 0.0
    %2317 = vmatmul.mubr.f32.gmra.mxu0 %v2024
    %v2318 = vpop.f32.mrf.mxu0
    %v2319 = vadd.f32 %v2106, %v2318
    %v2320 = vpop.f32.mrf.mxu0
    %v2321 = vadd.f32 %v2110, %v2320
    %2322 = vmatprep.mubr.f32.mxu0 0.0
    %2323 = vmatmul.mubr.f32.gmra.mxu0 %v2025
    %v2324 = vpop.f32.mrf.mxu0
    %v2325 = vadd.f32 %v2106, %v2324
    %v2326 = vpop.f32.mrf.mxu0
    %v2327 = vadd.f32 %v2110, %v2326
    %2328 = vmatprep.mubr.f32.mxu0 0.0
    %2329 = vmatmul.mubr.f32.gmra.mxu0 %v2026
    %v2330 = vpop.f32.mrf.mxu0
    %v2331 = vadd.f32 %v2106, %v2330
    %v2332 = vpop.f32.mrf.mxu0
    %v2333 = vadd.f32 %v2110, %v2332
    %2334 = vmatprep.mubr.f32.mxu0 0.0
    %2335 = vmatmul.mubr.f32.gmra.mxu0 %v2027
    %v2336 = vpop.f32.mrf.mxu0
    %v2337 = vadd.f32 %v2106, %v2336
    %v2338 = vpop.f32.mrf.mxu0
    %v2339 = vadd.f32 %v2110, %v2338
    %2340 = vdwg.mxu0
    %2341 = vst [vmem:[#allocation4] sm:$0xff] %v2182
    %2342 = vst [vmem:[#allocation4 + $0x8] sm:$0xff] %v2184
    %2343 = vst [vmem:[#allocation4 + $0x10] sm:$0xff] %v2295
    %2344 = vst [vmem:[#allocation4 + $0x18] sm:$0xff] %v2297
    %2345 = vst [vmem:[#allocation4 + $0x20] sm:$0xff] %v2188
    %2346 = vst [vmem:[#allocation4 + $0x28] sm:$0xff] %v2190
    %2347 = vst [vmem:[#allocation4 + $0x30] sm:$0xff] %v2301
    %2348 = vst [vmem:[#allocation4 + $0x38] sm:$0xff] %v2303
    %2349 = vst [vmem:[#allocation4 + $0x40] sm:$0xff] %v2194
    %2350 = vst [vmem:[#allocation4 + $0x48] sm:$0xff] %v2196
    %2351 = vst [vmem:[#allocation4 + $0x50] sm:$0xff] %v2307
    %2352 = vst [vmem:[#allocation4 + $0x58] sm:$0xff] %v2309
    %2353 = vst [vmem:[#allocation4 + $0x60] sm:$0xff] %v2200
    %2354 = vst [vmem:[#allocation4 + $0x68] sm:$0xff] %v2202
    %2355 = vst [vmem:[#allocation4 + $0x70] sm:$0xff] %v2313
    %2356 = vst [vmem:[#allocation4 + $0x78] sm:$0xff] %v2315
    %2357 = vst [vmem:[#allocation4 + $0x80] sm:$0xff] %v2206
    %2358 = vst [vmem:[#allocation4 + $0x88] sm:$0xff] %v2208
    %2359 = vst [vmem:[#allocation4 + $0x90] sm:$0xff] %v2319
    %2360 = vst [vmem:[#allocation4 + $0x98] sm:$0xff] %v2321
    %2361 = vst [vmem:[#allocation4 + $0xa0] sm:$0xff] %v2212
    %2362 = vst [vmem:[#allocation4 + $0xa8] sm:$0xff] %v2214
    %2363 = vst [vmem:[#allocation4 + $0xb0] sm:$0xff] %v2325
    %2364 = vst [vmem:[#allocation4 + $0xb8] sm:$0xff] %v2327
    %2365 = vst [vmem:[#allocation4 + $0xc0] sm:$0xff] %v2218
    %2366 = vst [vmem:[#allocation4 + $0xc8] sm:$0xff] %v2220
    %2367 = vst [vmem:[#allocation4 + $0xd0] sm:$0xff] %v2331
    %2368 = vst [vmem:[#allocation4 + $0xd8] sm:$0xff] %v2333
    %2369 = vst [vmem:[#allocation4 + $0xe0] sm:$0xff] %v2224
    %2370 = vst [vmem:[#allocation4 + $0xe8] sm:$0xff] %v2226
    %2371 = vst [vmem:[#allocation4 + $0xf0] sm:$0xff] %v2337
    %2372 = vst [vmem:[#allocation4 + $0xf8] sm:$0xff] %v2339
    %v2373 = vld [vmem:[#allocation4] sm:$0xff]
    %v2374 = vld [vmem:[#allocation4 + $0x8] sm:$0xff]
    %v2375 = vmul.f32 %v2373, 0.5
    %v2376 = vmul.f32 %v2374, 0.5
    %v2377 = vtanh.pop %v2375
    %v2378 = vtanh.pop %v2376
    %v2379 = vadd.f32 %v2377, 1.0
    %v2380 = vadd.f32 %v2378, 1.0
    %v2381 = vmul.f32 %v2379, 0.5
    %v2382 = vmul.f32 %v2380, 0.5
    %v2383 = vtanh.pop %v2374
    %v2384 = vmul.f32 %v2381, 0.0
    %2386 = vrot.lane.b32.xlu0 %v2383, 64
    %v2387 = vpop.permute.xlu0 %2386
    %v2389 = vmul.f32 %v2381, %v2387
    %2391 = vrot.lane.b32.xlu0 %v2389, 64
    %v2392 = vpop.permute.xlu0 %2391
    %v2394 = vadd.f32 %v2384, %v2392
    %v2395 = vtanh.pop %v2394
    %2397 = vrot.lane.b32.xlu0 %v2395, 64
    %v2398 = vpop.permute.xlu0 %2397
    %v2400 = vmul.f32 %v2382, %v2398
    %v2401 = vld [vmem:[#allocation4 + $0x20] sm:$0xff]
    %v2402 = vld [vmem:[#allocation4 + $0x28] sm:$0xff]
    %v2403 = vld [vmem:[%s3] sm:$0xff]
    %v2404 = vld [vmem:[%s3 + $0x8] sm:$0xff]
    %v2405 = vld [vmem:[%s3 + $0x10] sm:$0xff]
    %v2406 = vld [vmem:[%s3 + $0x18] sm:$0xff]
    %v2407 = vld [vmem:[%s3 + $0x20] sm:$0xff]
    %v2408 = vld [vmem:[%s3 + $0x28] sm:$0xff]
    %v2409 = vld [vmem:[%s3 + $0x30] sm:$0xff]
    %v2410 = vld [vmem:[%s3 + $0x38] sm:$0xff]
    %v2411 = vld [vmem:[%s3 + $0x40] sm:$0xff]
    %v2412 = vld [vmem:[%s3 + $0x48] sm:$0xff]
    %v2413 = vld [vmem:[%s3 + $0x50] sm:$0xff]
    %v2414 = vld [vmem:[%s3 + $0x58] sm:$0xff]
    %v2415 = vld [vmem:[%s3 + $0x60] sm:$0xff]
    %v2416 = vld [vmem:[%s3 + $0x68] sm:$0xff]
    %v2417 = vld [vmem:[%s3 + $0x70] sm:$0xff]
    %v2418 = vld [vmem:[%s3 + $0x78] sm:$0xff]
    %v2420 = vsel %vm378, %v2400, 0
    %2422 = vmatprep.subr.mxu0 0.0
    %2423 = vmatpush1.msra.mxu0 0.0
    %2424 = vmatprep.subr.mxu0 0.0
    %2425 = vmatpush1.msra.mxu0 0.0
    %2426 = vmatprep.subr.mxu0 0.0
    %2427 = vmatpush1.msra.mxu0 0.0
    %2428 = vmatprep.subr.mxu0 0.0
    %2429 = vmatpush1.msra.mxu0 0.0
    %2430 = vmatprep.subr.mxu0 0.0
    %2431 = vmatpush1.msra.mxu0 0.0
    %2432 = vmatprep.subr.mxu0 0.0
    %2433 = vmatpush1.msra.mxu0 0.0
    %2434 = vmatprep.subr.mxu0 0.0
    %2435 = vmatpush1.msra.mxu0 0.0
    %2436 = vmatprep.subr.mxu0 0.0
    %2437 = vmatpush1.msra.mxu0 0.0
    %2438 = vmatprep.subr.mxu0 %v2418
    %2439 = vmatpush1.msra.mxu0 %v2417
    %2440 = vmatprep.subr.mxu0 %v2416
    %2441 = vmatpush1.msra.mxu0 %v2415
    %2442 = vmatprep.subr.mxu0 %v2414
    %2443 = vmatpush1.msra.mxu0 %v2413
    %2444 = vmatprep.subr.mxu0 %v2412
    %2445 = vmatpush1.msra.mxu0 %v2411
    %2446 = vmatprep.subr.mxu0 %v2410
    %2447 = vmatpush1.msra.mxu0 %v2409
    %2448 = vmatprep.subr.mxu0 %v2408
    %2449 = vmatpush1.msra.mxu0 %v2407
    %2450 = vmatprep.subr.mxu0 %v2406
    %2451 = vmatpush1.msra.mxu0 %v2405
    %2452 = vmatprep.subr.mxu0 %v2404
    %2453 = vmatpush1.msra.mxu0 %v2403
    %2454 = vmatprep.subr.mxu0 0.0
    %2455 = vmatpush2.msra.mxu0 0.0
    %2456 = vmatprep.subr.mxu0 0.0
    %2457 = vmatpush2.msra.mxu0 0.0
    %2458 = vmatprep.subr.mxu0 0.0
    %2459 = vmatpush2.msra.mxu0 0.0
    %2460 = vmatprep.subr.mxu0 0.0
    %2461 = vmatpush2.msra.mxu0 0.0
    %2462 = vmatprep.subr.mxu0 0.0
    %2463 = vmatpush2.msra.mxu0 0.0
    %2464 = vmatprep.subr.mxu0 0.0
    %2465 = vmatpush2.msra.mxu0 0.0
    %2466 = vmatprep.subr.mxu0 0.0
    %2467 = vmatpush2.msra.mxu0 0.0
    %2468 = vmatprep.subr.mxu0 0.0
    %2469 = vmatpush2.msra.mxu0 0.0
    %2470 = vmatprep.subr.mxu0 0.0
    %2471 = vmatpush2.msra.mxu0 0.0
    %2472 = vmatprep.subr.mxu0 0.0
    %2473 = vmatpush2.msra.mxu0 0.0
    %2474 = vmatprep.subr.mxu0 0.0
    %2475 = vmatpush2.msra.mxu0 0.0
    %2476 = vmatprep.subr.mxu0 0.0
    %2477 = vmatpush2.msra.mxu0 0.0
    %2478 = vmatprep.subr.mxu0 0.0
    %2479 = vmatpush2.msra.mxu0 0.0
    %2480 = vmatprep.subr.mxu0 0.0
    %2481 = vmatpush2.msra.mxu0 0.0
    %2482 = vmatprep.subr.mxu0 0.0
    %2483 = vmatpush2.msra.mxu0 0.0
    %2484 = vmatprep.subr.mxu0 0.0
    %2485 = vmatpush2.msra.mxu0 0.0
    %2486 = vmatprep.mubr.f32.mxu0 0.0
    %2487 = vmatmul.mubr.f32.gmra.mxu0 %v2420
    %v2488 = vpop.f32.mrf.mxu0
    %v2489 = vadd.f32 0.0, %v2488
    %v2490 = vpop.f32.mrf.mxu0
    %v2491 = vadd.f32 0.0, %v2490
    %2492 = vdwg.mxu0
    %v2493 = vadd.f32 %v2401, %v2489
    %v2494 = vadd.f32 %v2402, %v2491
    %v2495 = vmul.f32 %v2493, 0.5
    %v2496 = vmul.f32 %v2494, 0.5
    %v2497 = vtanh.pop %v2495
    %v2498 = vtanh.pop %v2496
    %v2499 = vadd.f32 %v2497, 1.0
    %v2500 = vadd.f32 %v2498, 1.0
    %v2501 = vmul.f32 %v2499, 0.5
    %v2502 = vmul.f32 %v2500, 0.5
    %v2503 = vtanh.pop %v2494
    %v2504 = vmul.f32 %v2501, %v2394
    %2506 = vrot.lane.b32.xlu0 %v2503, 64
    %v2507 = vpop.permute.xlu0 %2506
    %v2509 = vmul.f32 %v2501, %v2507
    %2511 = vrot.lane.b32.xlu0 %v2509, 64
    %v2512 = vpop.permute.xlu0 %2511
    %v2514 = vadd.f32 %v2504, %v2512
    %v2515 = vtanh.pop %v2514
    %2517 = vrot.lane.b32.xlu0 %v2515, 64
    %v2518 = vpop.permute.xlu0 %2517
    %v2520 = vmul.f32 %v2502, %v2518
    %v2521 = vld [vmem:[#allocation4 + $0x40] sm:$0xff]
    %v2522 = vld [vmem:[#allocation4 + $0x48] sm:$0xff]
    %v2524 = vsel %vm378, %v2520, 0
    %2526 = vmatprep.subr.mxu0 0.0
    %2527 = vmatpush1.msra.mxu0 0.0
    %2528 = vmatprep.subr.mxu0 0.0
    %2529 = vmatpush1.msra.mxu0 0.0
    %2530 = vmatprep.subr.mxu0 0.0
    %2531 = vmatpush1.msra.mxu0 0.0
    %2532 = vmatprep.subr.mxu0 0.0
    %2533 = vmatpush1.msra.mxu0 0.0
    %2534 = vmatprep.subr.mxu0 0.0
    %2535 = vmatpush1.msra.mxu0 0.0
    %2536 = vmatprep.subr.mxu0 0.0
    %2537 = vmatpush1.msra.mxu0 0.0
    %2538 = vmatprep.subr.mxu0 0.0
    %2539 = vmatpush1.msra.mxu0 0.0
    %2540 = vmatprep.subr.mxu0 0.0
    %2541 = vmatpush1.msra.mxu0 0.0
    %2542 = vmatprep.subr.mxu0 %v2418
    %2543 = vmatpush1.msra.mxu0 %v2417
    %2544 = vmatprep.subr.mxu0 %v2416
    %2545 = vmatpush1.msra.mxu0 %v2415
    %2546 = vmatprep.subr.mxu0 %v2414
    %2547 = vmatpush1.msra.mxu0 %v2413
    %2548 = vmatprep.subr.mxu0 %v2412
    %2549 = vmatpush1.msra.mxu0 %v2411
    %2550 = vmatprep.subr.mxu0 %v2410
    %2551 = vmatpush1.msra.mxu0 %v2409
    %2552 = vmatprep.subr.mxu0 %v2408
    %2553 = vmatpush1.msra.mxu0 %v2407
    %2554 = vmatprep.subr.mxu0 %v2406
    %2555 = vmatpush1.msra.mxu0 %v2405
    %2556 = vmatprep.subr.mxu0 %v2404
    %2557 = vmatpush1.msra.mxu0 %v2403
    %2558 = vmatprep.subr.mxu0 0.0
    %2559 = vmatpush2.msra.mxu0 0.0
    %2560 = vmatprep.subr.mxu0 0.0
    %2561 = vmatpush2.msra.mxu0 0.0
    %2562 = vmatprep.subr.mxu0 0.0
    %2563 = vmatpush2.msra.mxu0 0.0
    %2564 = vmatprep.subr.mxu0 0.0
    %2565 = vmatpush2.msra.mxu0 0.0
    %2566 = vmatprep.subr.mxu0 0.0
    %2567 = vmatpush2.msra.mxu0 0.0
    %2568 = vmatprep.subr.mxu0 0.0
    %2569 = vmatpush2.msra.mxu0 0.0
    %2570 = vmatprep.subr.mxu0 0.0
    %2571 = vmatpush2.msra.mxu0 0.0
    %2572 = vmatprep.subr.mxu0 0.0
    %2573 = vmatpush2.msra.mxu0 0.0
    %2574 = vmatprep.subr.mxu0 0.0
    %2575 = vmatpush2.msra.mxu0 0.0
    %2576 = vmatprep.subr.mxu0 0.0
    %2577 = vmatpush2.msra.mxu0 0.0
    %2578 = vmatprep.subr.mxu0 0.0
    %2579 = vmatpush2.msra.mxu0 0.0
    %2580 = vmatprep.subr.mxu0 0.0
    %2581 = vmatpush2.msra.mxu0 0.0
    %2582 = vmatprep.subr.mxu0 0.0
    %2583 = vmatpush2.msra.mxu0 0.0
    %2584 = vmatprep.subr.mxu0 0.0
    %2585 = vmatpush2.msra.mxu0 0.0
    %2586 = vmatprep.subr.mxu0 0.0
    %2587 = vmatpush2.msra.mxu0 0.0
    %2588 = vmatprep.subr.mxu0 0.0
    %2589 = vmatpush2.msra.mxu0 0.0
    %2590 = vmatprep.mubr.f32.mxu0 0.0
    %2591 = vmatmul.mubr.f32.gmra.mxu0 %v2524
    %v2592 = vpop.f32.mrf.mxu0
    %v2593 = vadd.f32 0.0, %v2592
    %v2594 = vpop.f32.mrf.mxu0
    %v2595 = vadd.f32 0.0, %v2594
    %2596 = vdwg.mxu0
    %v2597 = vadd.f32 %v2521, %v2593
    %v2598 = vadd.f32 %v2522, %v2595
    %v2599 = vmul.f32 %v2597, 0.5
    %v2600 = vmul.f32 %v2598, 0.5
    %v2601 = vtanh.pop %v2599
    %v2602 = vtanh.pop %v2600
    %v2603 = vadd.f32 %v2601, 1.0
    %v2604 = vadd.f32 %v2602, 1.0
    %v2605 = vmul.f32 %v2603, 0.5
    %v2606 = vmul.f32 %v2604, 0.5
    %v2607 = vtanh.pop %v2598
    %v2608 = vmul.f32 %v2605, %v2514
    %2610 = vrot.lane.b32.xlu0 %v2607, 64
    %v2611 = vpop.permute.xlu0 %2610
    %v2613 = vmul.f32 %v2605, %v2611
    %2615 = vrot.lane.b32.xlu0 %v2613, 64
    %v2616 = vpop.permute.xlu0 %2615
    %v2618 = vadd.f32 %v2608, %v2616
    %v2619 = vtanh.pop %v2618
    %2621 = vrot.lane.b32.xlu0 %v2619, 64
    %v2622 = vpop.permute.xlu0 %2621
    %v2624 = vmul.f32 %v2606, %v2622
    %v2625 = vld [vmem:[#allocation4 + $0x60] sm:$0xff]
    %v2626 = vld [vmem:[#allocation4 + $0x68] sm:$0xff]
    %v2628 = vsel %vm378, %v2624, 0
    %2630 = vmatprep.subr.mxu0 0.0
    %2631 = vmatpush1.msra.mxu0 0.0
    %2632 = vmatprep.subr.mxu0 0.0
    %2633 = vmatpush1.msra.mxu0 0.0
    %2634 = vmatprep.subr.mxu0 0.0
    %2635 = vmatpush1.msra.mxu0 0.0
    %2636 = vmatprep.subr.mxu0 0.0
    %2637 = vmatpush1.msra.mxu0 0.0
    %2638 = vmatprep.subr.mxu0 0.0
    %2639 = vmatpush1.msra.mxu0 0.0
    %2640 = vmatprep.subr.mxu0 0.0
    %2641 = vmatpush1.msra.mxu0 0.0
    %2642 = vmatprep.subr.mxu0 0.0
    %2643 = vmatpush1.msra.mxu0 0.0
    %2644 = vmatprep.subr.mxu0 0.0
    %2645 = vmatpush1.msra.mxu0 0.0
    %2646 = vmatprep.subr.mxu0 %v2418
    %2647 = vmatpush1.msra.mxu0 %v2417
    %2648 = vmatprep.subr.mxu0 %v2416
    %2649 = vmatpush1.msra.mxu0 %v2415
    %2650 = vmatprep.subr.mxu0 %v2414
    %2651 = vmatpush1.msra.mxu0 %v2413
    %2652 = vmatprep.subr.mxu0 %v2412
    %2653 = vmatpush1.msra.mxu0 %v2411
    %2654 = vmatprep.subr.mxu0 %v2410
    %2655 = vmatpush1.msra.mxu0 %v2409
    %2656 = vmatprep.subr.mxu0 %v2408
    %2657 = vmatpush1.msra.mxu0 %v2407
    %2658 = vmatprep.subr.mxu0 %v2406
    %2659 = vmatpush1.msra.mxu0 %v2405
    %2660 = vmatprep.subr.mxu0 %v2404
    %2661 = vmatpush1.msra.mxu0 %v2403
    %2662 = vmatprep.subr.mxu0 0.0
    %2663 = vmatpush2.msra.mxu0 0.0
    %2664 = vmatprep.subr.mxu0 0.0
    %2665 = vmatpush2.msra.mxu0 0.0
    %2666 = vmatprep.subr.mxu0 0.0
    %2667 = vmatpush2.msra.mxu0 0.0
    %2668 = vmatprep.subr.mxu0 0.0
    %2669 = vmatpush2.msra.mxu0 0.0
    %2670 = vmatprep.subr.mxu0 0.0
    %2671 = vmatpush2.msra.mxu0 0.0
    %2672 = vmatprep.subr.mxu0 0.0
    %2673 = vmatpush2.msra.mxu0 0.0
    %2674 = vmatprep.subr.mxu0 0.0
    %2675 = vmatpush2.msra.mxu0 0.0
    %2676 = vmatprep.subr.mxu0 0.0
    %2677 = vmatpush2.msra.mxu0 0.0
    %2678 = vmatprep.subr.mxu0 0.0
    %2679 = vmatpush2.msra.mxu0 0.0
    %2680 = vmatprep.subr.mxu0 0.0
    %2681 = vmatpush2.msra.mxu0 0.0
    %2682 = vmatprep.subr.mxu0 0.0
    %2683 = vmatpush2.msra.mxu0 0.0
    %2684 = vmatprep.subr.mxu0 0.0
    %2685 = vmatpush2.msra.mxu0 0.0
    %2686 = vmatprep.subr.mxu0 0.0
    %2687 = vmatpush2.msra.mxu0 0.0
    %2688 = vmatprep.subr.mxu0 0.0
    %2689 = vmatpush2.msra.mxu0 0.0
    %2690 = vmatprep.subr.mxu0 0.0
    %2691 = vmatpush2.msra.mxu0 0.0
    %2692 = vmatprep.subr.mxu0 0.0
    %2693 = vmatpush2.msra.mxu0 0.0
    %2694 = vmatprep.mubr.f32.mxu0 0.0
    %2695 = vmatmul.mubr.f32.gmra.mxu0 %v2628
    %v2696 = vpop.f32.mrf.mxu0
    %v2697 = vadd.f32 0.0, %v2696
    %v2698 = vpop.f32.mrf.mxu0
    %v2699 = vadd.f32 0.0, %v2698
    %2700 = vdwg.mxu0
    %v2701 = vadd.f32 %v2625, %v2697
    %v2702 = vadd.f32 %v2626, %v2699
    %v2703 = vmul.f32 %v2701, 0.5
    %v2704 = vmul.f32 %v2702, 0.5
    %v2705 = vtanh.pop %v2703
    %v2706 = vtanh.pop %v2704
    %v2707 = vadd.f32 %v2705, 1.0
    %v2708 = vadd.f32 %v2706, 1.0
    %v2709 = vmul.f32 %v2707, 0.5
    %v2710 = vmul.f32 %v2708, 0.5
    %v2711 = vtanh.pop %v2702
    %v2712 = vmul.f32 %v2709, %v2618
    %2714 = vrot.lane.b32.xlu0 %v2711, 64
    %v2715 = vpop.permute.xlu0 %2714
    %v2717 = vmul.f32 %v2709, %v2715
    %2719 = vrot.lane.b32.xlu0 %v2717, 64
    %v2720 = vpop.permute.xlu0 %2719
    %v2722 = vadd.f32 %v2712, %v2720
    %v2723 = vtanh.pop %v2722
    %2725 = vrot.lane.b32.xlu0 %v2723, 64
    %v2726 = vpop.permute.xlu0 %2725
    %v2728 = vmul.f32 %v2710, %v2726
    %v2729 = vld [vmem:[#allocation4 + $0x80] sm:$0xff]
    %v2730 = vld [vmem:[#allocation4 + $0x88] sm:$0xff]
    %v2732 = vsel %vm378, %v2728, 0
    %2734 = vmatprep.subr.mxu0 0.0
    %2735 = vmatpush1.msra.mxu0 0.0
    %2736 = vmatprep.subr.mxu0 0.0
    %2737 = vmatpush1.msra.mxu0 0.0
    %2738 = vmatprep.subr.mxu0 0.0
    %2739 = vmatpush1.msra.mxu0 0.0
    %2740 = vmatprep.subr.mxu0 0.0
    %2741 = vmatpush1.msra.mxu0 0.0
    %2742 = vmatprep.subr.mxu0 0.0
    %2743 = vmatpush1.msra.mxu0 0.0
    %2744 = vmatprep.subr.mxu0 0.0
    %2745 = vmatpush1.msra.mxu0 0.0
    %2746 = vmatprep.subr.mxu0 0.0
    %2747 = vmatpush1.msra.mxu0 0.0
    %2748 = vmatprep.subr.mxu0 0.0
    %2749 = vmatpush1.msra.mxu0 0.0
    %2750 = vmatprep.subr.mxu0 %v2418
    %2751 = vmatpush1.msra.mxu0 %v2417
    %2752 = vmatprep.subr.mxu0 %v2416
    %2753 = vmatpush1.msra.mxu0 %v2415
    %2754 = vmatprep.subr.mxu0 %v2414
    %2755 = vmatpush1.msra.mxu0 %v2413
    %2756 = vmatprep.subr.mxu0 %v2412
    %2757 = vmatpush1.msra.mxu0 %v2411
    %2758 = vmatprep.subr.mxu0 %v2410
    %2759 = vmatpush1.msra.mxu0 %v2409
    %2760 = vmatprep.subr.mxu0 %v2408
    %2761 = vmatpush1.msra.mxu0 %v2407
    %2762 = vmatprep.subr.mxu0 %v2406
    %2763 = vmatpush1.msra.mxu0 %v2405
    %2764 = vmatprep.subr.mxu0 %v2404
    %2765 = vmatpush1.msra.mxu0 %v2403
    %2766 = vmatprep.subr.mxu0 0.0
    %2767 = vmatpush2.msra.mxu0 0.0
    %2768 = vmatprep.subr.mxu0 0.0
    %2769 = vmatpush2.msra.mxu0 0.0
    %2770 = vmatprep.subr.mxu0 0.0
    %2771 = vmatpush2.msra.mxu0 0.0
    %2772 = vmatprep.subr.mxu0 0.0
    %2773 = vmatpush2.msra.mxu0 0.0
    %2774 = vmatprep.subr.mxu0 0.0
    %2775 = vmatpush2.msra.mxu0 0.0
    %2776 = vmatprep.subr.mxu0 0.0
    %2777 = vmatpush2.msra.mxu0 0.0
    %2778 = vmatprep.subr.mxu0 0.0
    %2779 = vmatpush2.msra.mxu0 0.0
    %2780 = vmatprep.subr.mxu0 0.0
    %2781 = vmatpush2.msra.mxu0 0.0
    %2782 = vmatprep.subr.mxu0 0.0
    %2783 = vmatpush2.msra.mxu0 0.0
    %2784 = vmatprep.subr.mxu0 0.0
    %2785 = vmatpush2.msra.mxu0 0.0
    %2786 = vmatprep.subr.mxu0 0.0
    %2787 = vmatpush2.msra.mxu0 0.0
    %2788 = vmatprep.subr.mxu0 0.0
    %2789 = vmatpush2.msra.mxu0 0.0
    %2790 = vmatprep.subr.mxu0 0.0
    %2791 = vmatpush2.msra.mxu0 0.0
    %2792 = vmatprep.subr.mxu0 0.0
    %2793 = vmatpush2.msra.mxu0 0.0
    %2794 = vmatprep.subr.mxu0 0.0
    %2795 = vmatpush2.msra.mxu0 0.0
    %2796 = vmatprep.subr.mxu0 0.0
    %2797 = vmatpush2.msra.mxu0 0.0
    %2798 = vmatprep.mubr.f32.mxu0 0.0
    %2799 = vmatmul.mubr.f32.gmra.mxu0 %v2732
    %v2800 = vpop.f32.mrf.mxu0
    %v2801 = vadd.f32 0.0, %v2800
    %v2802 = vpop.f32.mrf.mxu0
    %v2803 = vadd.f32 0.0, %v2802
    %2804 = vdwg.mxu0
    %v2805 = vadd.f32 %v2729, %v2801
    %v2806 = vadd.f32 %v2730, %v2803
    %v2807 = vmul.f32 %v2805, 0.5
    %v2808 = vmul.f32 %v2806, 0.5
    %v2809 = vtanh.pop %v2807
    %v2810 = vtanh.pop %v2808
    %v2811 = vadd.f32 %v2809, 1.0
    %v2812 = vadd.f32 %v2810, 1.0
    %v2813 = vmul.f32 %v2811, 0.5
    %v2814 = vmul.f32 %v2812, 0.5
    %v2815 = vtanh.pop %v2806
    %v2816 = vmul.f32 %v2813, %v2722
    %2818 = vrot.lane.b32.xlu0 %v2815, 64
    %v2819 = vpop.permute.xlu0 %2818
    %v2821 = vmul.f32 %v2813, %v2819
    %2823 = vrot.lane.b32.xlu0 %v2821, 64
    %v2824 = vpop.permute.xlu0 %2823
    %v2826 = vadd.f32 %v2816, %v2824
    %v2827 = vtanh.pop %v2826
    %2829 = vrot.lane.b32.xlu0 %v2827, 64
    %v2830 = vpop.permute.xlu0 %2829
    %v2832 = vmul.f32 %v2814, %v2830
    %v2833 = vld [vmem:[#allocation4 + $0xa0] sm:$0xff]
    %v2834 = vld [vmem:[#allocation4 + $0xa8] sm:$0xff]
    %v2836 = vsel %vm378, %v2832, 0
    %2838 = vmatprep.subr.mxu0 0.0
    %2839 = vmatpush1.msra.mxu0 0.0
    %2840 = vmatprep.subr.mxu0 0.0
    %2841 = vmatpush1.msra.mxu0 0.0
    %2842 = vmatprep.subr.mxu0 0.0
    %2843 = vmatpush1.msra.mxu0 0.0
    %2844 = vmatprep.subr.mxu0 0.0
    %2845 = vmatpush1.msra.mxu0 0.0
    %2846 = vmatprep.subr.mxu0 0.0
    %2847 = vmatpush1.msra.mxu0 0.0
    %2848 = vmatprep.subr.mxu0 0.0
    %2849 = vmatpush1.msra.mxu0 0.0
    %2850 = vmatprep.subr.mxu0 0.0
    %2851 = vmatpush1.msra.mxu0 0.0
    %2852 = vmatprep.subr.mxu0 0.0
    %2853 = vmatpush1.msra.mxu0 0.0
    %2854 = vmatprep.subr.mxu0 %v2418
    %2855 = vmatpush1.msra.mxu0 %v2417
    %2856 = vmatprep.subr.mxu0 %v2416
    %2857 = vmatpush1.msra.mxu0 %v2415
    %2858 = vmatprep.subr.mxu0 %v2414
    %2859 = vmatpush1.msra.mxu0 %v2413
    %2860 = vmatprep.subr.mxu0 %v2412
    %2861 = vmatpush1.msra.mxu0 %v2411
    %2862 = vmatprep.subr.mxu0 %v2410
    %2863 = vmatpush1.msra.mxu0 %v2409
    %2864 = vmatprep.subr.mxu0 %v2408
    %2865 = vmatpush1.msra.mxu0 %v2407
    %2866 = vmatprep.subr.mxu0 %v2406
    %2867 = vmatpush1.msra.mxu0 %v2405
    %2868 = vmatprep.subr.mxu0 %v2404
    %2869 = vmatpush1.msra.mxu0 %v2403
    %2870 = vmatprep.subr.mxu0 0.0
    %2871 = vmatpush2.msra.mxu0 0.0
    %2872 = vmatprep.subr.mxu0 0.0
    %2873 = vmatpush2.msra.mxu0 0.0
    %2874 = vmatprep.subr.mxu0 0.0
    %2875 = vmatpush2.msra.mxu0 0.0
    %2876 = vmatprep.subr.mxu0 0.0
    %2877 = vmatpush2.msra.mxu0 0.0
    %2878 = vmatprep.subr.mxu0 0.0
    %2879 = vmatpush2.msra.mxu0 0.0
    %2880 = vmatprep.subr.mxu0 0.0
    %2881 = vmatpush2.msra.mxu0 0.0
    %2882 = vmatprep.subr.mxu0 0.0
    %2883 = vmatpush2.msra.mxu0 0.0
    %2884 = vmatprep.subr.mxu0 0.0
    %2885 = vmatpush2.msra.mxu0 0.0
    %2886 = vmatprep.subr.mxu0 0.0
    %2887 = vmatpush2.msra.mxu0 0.0
    %2888 = vmatprep.subr.mxu0 0.0
    %2889 = vmatpush2.msra.mxu0 0.0
    %2890 = vmatprep.subr.mxu0 0.0
    %2891 = vmatpush2.msra.mxu0 0.0
    %2892 = vmatprep.subr.mxu0 0.0
    %2893 = vmatpush2.msra.mxu0 0.0
    %2894 = vmatprep.subr.mxu0 0.0
    %2895 = vmatpush2.msra.mxu0 0.0
    %2896 = vmatprep.subr.mxu0 0.0
    %2897 = vmatpush2.msra.mxu0 0.0
    %2898 = vmatprep.subr.mxu0 0.0
    %2899 = vmatpush2.msra.mxu0 0.0
    %2900 = vmatprep.subr.mxu0 0.0
    %2901 = vmatpush2.msra.mxu0 0.0
    %2902 = vmatprep.mubr.f32.mxu0 0.0
    %2903 = vmatmul.mubr.f32.gmra.mxu0 %v2836
    %v2904 = vpop.f32.mrf.mxu0
    %v2905 = vadd.f32 0.0, %v2904
    %v2906 = vpop.f32.mrf.mxu0
    %v2907 = vadd.f32 0.0, %v2906
    %2908 = vdwg.mxu0
    %v2909 = vadd.f32 %v2833, %v2905
    %v2910 = vadd.f32 %v2834, %v2907
    %v2911 = vmul.f32 %v2909, 0.5
    %v2912 = vmul.f32 %v2910, 0.5
    %v2913 = vtanh.pop %v2911
    %v2914 = vtanh.pop %v2912
    %v2915 = vadd.f32 %v2913, 1.0
    %v2916 = vadd.f32 %v2914, 1.0
    %v2917 = vmul.f32 %v2915, 0.5
    %v2918 = vmul.f32 %v2916, 0.5
    %v2919 = vtanh.pop %v2910
    %v2920 = vmul.f32 %v2917, %v2826
    %2922 = vrot.lane.b32.xlu0 %v2919, 64
    %v2923 = vpop.permute.xlu0 %2922
    %v2925 = vmul.f32 %v2917, %v2923
    %2927 = vrot.lane.b32.xlu0 %v2925, 64
    %v2928 = vpop.permute.xlu0 %2927
    %v2930 = vadd.f32 %v2920, %v2928
    %v2931 = vtanh.pop %v2930
    %2933 = vrot.lane.b32.xlu0 %v2931, 64
    %v2934 = vpop.permute.xlu0 %2933
    %v2936 = vmul.f32 %v2918, %v2934
    %v2937 = vld [vmem:[#allocation4 + $0xc0] sm:$0xff]
    %v2938 = vld [vmem:[#allocation4 + $0xc8] sm:$0xff]
    %v2940 = vsel %vm378, %v2936, 0
    %2942 = vmatprep.subr.mxu0 0.0
    %2943 = vmatpush1.msra.mxu0 0.0
    %2944 = vmatprep.subr.mxu0 0.0
    %2945 = vmatpush1.msra.mxu0 0.0
    %2946 = vmatprep.subr.mxu0 0.0
    %2947 = vmatpush1.msra.mxu0 0.0
    %2948 = vmatprep.subr.mxu0 0.0
    %2949 = vmatpush1.msra.mxu0 0.0
    %2950 = vmatprep.subr.mxu0 0.0
    %2951 = vmatpush1.msra.mxu0 0.0
    %2952 = vmatprep.subr.mxu0 0.0
    %2953 = vmatpush1.msra.mxu0 0.0
    %2954 = vmatprep.subr.mxu0 0.0
    %2955 = vmatpush1.msra.mxu0 0.0
    %2956 = vmatprep.subr.mxu0 0.0
    %2957 = vmatpush1.msra.mxu0 0.0
    %2958 = vmatprep.subr.mxu0 %v2418
    %2959 = vmatpush1.msra.mxu0 %v2417
    %2960 = vmatprep.subr.mxu0 %v2416
    %2961 = vmatpush1.msra.mxu0 %v2415
    %2962 = vmatprep.subr.mxu0 %v2414
    %2963 = vmatpush1.msra.mxu0 %v2413
    %2964 = vmatprep.subr.mxu0 %v2412
    %2965 = vmatpush1.msra.mxu0 %v2411
    %2966 = vmatprep.subr.mxu0 %v2410
    %2967 = vmatpush1.msra.mxu0 %v2409
    %2968 = vmatprep.subr.mxu0 %v2408
    %2969 = vmatpush1.msra.mxu0 %v2407
    %2970 = vmatprep.subr.mxu0 %v2406
    %2971 = vmatpush1.msra.mxu0 %v2405
    %2972 = vmatprep.subr.mxu0 %v2404
    %2973 = vmatpush1.msra.mxu0 %v2403
    %2974 = vmatprep.subr.mxu0 0.0
    %2975 = vmatpush2.msra.mxu0 0.0
    %2976 = vmatprep.subr.mxu0 0.0
    %2977 = vmatpush2.msra.mxu0 0.0
    %2978 = vmatprep.subr.mxu0 0.0
    %2979 = vmatpush2.msra.mxu0 0.0
    %2980 = vmatprep.subr.mxu0 0.0
    %2981 = vmatpush2.msra.mxu0 0.0
    %2982 = vmatprep.subr.mxu0 0.0
    %2983 = vmatpush2.msra.mxu0 0.0
    %2984 = vmatprep.subr.mxu0 0.0
    %2985 = vmatpush2.msra.mxu0 0.0
    %2986 = vmatprep.subr.mxu0 0.0
    %2987 = vmatpush2.msra.mxu0 0.0
    %2988 = vmatprep.subr.mxu0 0.0
    %2989 = vmatpush2.msra.mxu0 0.0
    %2990 = vmatprep.subr.mxu0 0.0
    %2991 = vmatpush2.msra.mxu0 0.0
    %2992 = vmatprep.subr.mxu0 0.0
    %2993 = vmatpush2.msra.mxu0 0.0
    %2994 = vmatprep.subr.mxu0 0.0
    %2995 = vmatpush2.msra.mxu0 0.0
    %2996 = vmatprep.subr.mxu0 0.0
    %2997 = vmatpush2.msra.mxu0 0.0
    %2998 = vmatprep.subr.mxu0 0.0
    %2999 = vmatpush2.msra.mxu0 0.0
    %3000 = vmatprep.subr.mxu0 0.0
    %3001 = vmatpush2.msra.mxu0 0.0
    %3002 = vmatprep.subr.mxu0 0.0
    %3003 = vmatpush2.msra.mxu0 0.0
    %3004 = vmatprep.subr.mxu0 0.0
    %3005 = vmatpush2.msra.mxu0 0.0
    %3006 = vmatprep.mubr.f32.mxu0 0.0
    %3007 = vmatmul.mubr.f32.gmra.mxu0 %v2940
    %v3008 = vpop.f32.mrf.mxu0
    %v3009 = vadd.f32 0.0, %v3008
    %v3010 = vpop.f32.mrf.mxu0
    %v3011 = vadd.f32 0.0, %v3010
    %3012 = vdwg.mxu0
    %v3013 = vadd.f32 %v2937, %v3009
    %v3014 = vadd.f32 %v2938, %v3011
    %v3015 = vmul.f32 %v3013, 0.5
    %v3016 = vmul.f32 %v3014, 0.5
    %v3017 = vtanh.pop %v3015
    %v3018 = vtanh.pop %v3016
    %v3019 = vadd.f32 %v3017, 1.0
    %v3020 = vadd.f32 %v3018, 1.0
    %v3021 = vmul.f32 %v3019, 0.5
    %v3022 = vmul.f32 %v3020, 0.5
    %v3023 = vtanh.pop %v3014
    %v3024 = vmul.f32 %v3021, %v2930
    %3026 = vrot.lane.b32.xlu0 %v3023, 64
    %v3027 = vpop.permute.xlu0 %3026
    %v3029 = vmul.f32 %v3021, %v3027
    %3031 = vrot.lane.b32.xlu0 %v3029, 64
    %v3032 = vpop.permute.xlu0 %3031
    %v3034 = vadd.f32 %v3024, %v3032
    %v3035 = vtanh.pop %v3034
    %3037 = vrot.lane.b32.xlu0 %v3035, 64
    %v3038 = vpop.permute.xlu0 %3037
    %v3040 = vmul.f32 %v3022, %v3038
    %v3041 = vld [vmem:[#allocation4 + $0xe0] sm:$0xff]
    %v3042 = vld [vmem:[#allocation4 + $0xe8] sm:$0xff]
    %v3044 = vsel %vm378, %v3040, 0
    %3046 = vmatprep.subr.mxu0 0.0
    %3047 = vmatpush1.msra.mxu0 0.0
    %3048 = vmatprep.subr.mxu0 0.0
    %3049 = vmatpush1.msra.mxu0 0.0
    %3050 = vmatprep.subr.mxu0 0.0
    %3051 = vmatpush1.msra.mxu0 0.0
    %3052 = vmatprep.subr.mxu0 0.0
    %3053 = vmatpush1.msra.mxu0 0.0
    %3054 = vmatprep.subr.mxu0 0.0
    %3055 = vmatpush1.msra.mxu0 0.0
    %3056 = vmatprep.subr.mxu0 0.0
    %3057 = vmatpush1.msra.mxu0 0.0
    %3058 = vmatprep.subr.mxu0 0.0
    %3059 = vmatpush1.msra.mxu0 0.0
    %3060 = vmatprep.subr.mxu0 0.0
    %3061 = vmatpush1.msra.mxu0 0.0
    %3062 = vmatprep.subr.mxu0 %v2418
    %3063 = vmatpush1.msra.mxu0 %v2417
    %3064 = vmatprep.subr.mxu0 %v2416
    %3065 = vmatpush1.msra.mxu0 %v2415
    %3066 = vmatprep.subr.mxu0 %v2414
    %3067 = vmatpush1.msra.mxu0 %v2413
    %3068 = vmatprep.subr.mxu0 %v2412
    %3069 = vmatpush1.msra.mxu0 %v2411
    %3070 = vmatprep.subr.mxu0 %v2410
    %3071 = vmatpush1.msra.mxu0 %v2409
    %3072 = vmatprep.subr.mxu0 %v2408
    %3073 = vmatpush1.msra.mxu0 %v2407
    %3074 = vmatprep.subr.mxu0 %v2406
    %3075 = vmatpush1.msra.mxu0 %v2405
    %3076 = vmatprep.subr.mxu0 %v2404
    %3077 = vmatpush1.msra.mxu0 %v2403
    %3078 = vmatprep.subr.mxu0 0.0
    %3079 = vmatpush2.msra.mxu0 0.0
    %3080 = vmatprep.subr.mxu0 0.0
    %3081 = vmatpush2.msra.mxu0 0.0
    %3082 = vmatprep.subr.mxu0 0.0
    %3083 = vmatpush2.msra.mxu0 0.0
    %3084 = vmatprep.subr.mxu0 0.0
    %3085 = vmatpush2.msra.mxu0 0.0
    %3086 = vmatprep.subr.mxu0 0.0
    %3087 = vmatpush2.msra.mxu0 0.0
    %3088 = vmatprep.subr.mxu0 0.0
    %3089 = vmatpush2.msra.mxu0 0.0
    %3090 = vmatprep.subr.mxu0 0.0
    %3091 = vmatpush2.msra.mxu0 0.0
    %3092 = vmatprep.subr.mxu0 0.0
    %3093 = vmatpush2.msra.mxu0 0.0
    %3094 = vmatprep.subr.mxu0 0.0
    %3095 = vmatpush2.msra.mxu0 0.0
    %3096 = vmatprep.subr.mxu0 0.0
    %3097 = vmatpush2.msra.mxu0 0.0
    %3098 = vmatprep.subr.mxu0 0.0
    %3099 = vmatpush2.msra.mxu0 0.0
    %3100 = vmatprep.subr.mxu0 0.0
    %3101 = vmatpush2.msra.mxu0 0.0
    %3102 = vmatprep.subr.mxu0 0.0
    %3103 = vmatpush2.msra.mxu0 0.0
    %3104 = vmatprep.subr.mxu0 0.0
    %3105 = vmatpush2.msra.mxu0 0.0
    %3106 = vmatprep.subr.mxu0 0.0
    %3107 = vmatpush2.msra.mxu0 0.0
    %3108 = vmatprep.subr.mxu0 0.0
    %3109 = vmatpush2.msra.mxu0 0.0
    %3110 = vmatprep.mubr.f32.mxu0 0.0
    %3111 = vmatmul.mubr.f32.gmra.mxu0 %v3044
    %v3112 = vpop.f32.mrf.mxu0
    %v3113 = vadd.f32 0.0, %v3112
    %v3114 = vpop.f32.mrf.mxu0
    %v3115 = vadd.f32 0.0, %v3114
    %3116 = vdwg.mxu0
    %v3117 = vadd.f32 %v3041, %v3113
    %v3118 = vadd.f32 %v3042, %v3115
    %v3119 = vmul.f32 %v3117, 0.5
    %v3120 = vmul.f32 %v3118, 0.5
    %v3121 = vtanh.pop %v3119
    %v3122 = vtanh.pop %v3120
    %v3123 = vadd.f32 %v3121, 1.0
    %v3124 = vadd.f32 %v3122, 1.0
    %v3125 = vmul.f32 %v3123, 0.5
    %v3126 = vmul.f32 %v3124, 0.5
    %v3127 = vtanh.pop %v3118
    %v3128 = vmul.f32 %v3125, %v3034
    %3130 = vrot.lane.b32.xlu0 %v3127, 64
    %v3131 = vpop.permute.xlu0 %3130
    %v3133 = vmul.f32 %v3125, %v3131
    %3135 = vrot.lane.b32.xlu0 %v3133, 64
    %v3136 = vpop.permute.xlu0 %3135
    %v3138 = vadd.f32 %v3128, %v3136
    %v3139 = vtanh.pop %v3138
    %3141 = vrot.lane.b32.xlu0 %v3139, 64
    %v3142 = vpop.permute.xlu0 %3141
    %v3144 = vmul.f32 %v3126, %v3142
    %v3145 = vld [vmem:[#allocation4 + $0xf0] sm:$0xff]
    %v3146 = vld [vmem:[#allocation4 + $0xf8] sm:$0xff]
    %v3147 = vmul.f32 %v3145, 0.5
    %v3148 = vmul.f32 %v3146, 0.5
    %v3149 = vtanh.pop %v3147
    %v3150 = vtanh.pop %v3148
    %v3151 = vadd.f32 %v3149, 1.0
    %v3152 = vadd.f32 %v3150, 1.0
    %v3153 = vmul.f32 %v3151, 0.5
    %v3154 = vmul.f32 %v3152, 0.5
    %v3155 = vtanh.pop %v3146
    %v3156 = vmul.f32 %v3153, 0.0
    %3158 = vrot.lane.b32.xlu0 %v3155, 64
    %v3159 = vpop.permute.xlu0 %3158
    %v3161 = vmul.f32 %v3153, %v3159
    %3163 = vrot.lane.b32.xlu0 %v3161, 64
    %v3164 = vpop.permute.xlu0 %3163
    %v3166 = vadd.f32 %v3156, %v3164
    %v3167 = vtanh.pop %v3166
    %3169 = vrot.lane.b32.xlu0 %v3167, 64
    %v3170 = vpop.permute.xlu0 %3169
    %v3172 = vmul.f32 %v3154, %v3170
    %v3173 = vld [vmem:[%s4] sm:$0xff]
    %v3174 = vld [vmem:[%s4 + $0x8] sm:$0xff]
    %v3175 = vld [vmem:[%s4 + $0x10] sm:$0xff]
    %v3176 = vld [vmem:[%s4 + $0x18] sm:$0xff]
    %v3177 = vld [vmem:[%s4 + $0x20] sm:$0xff]
    %v3178 = vld [vmem:[%s4 + $0x28] sm:$0xff]
    %v3179 = vld [vmem:[%s4 + $0x30] sm:$0xff]
    %v3180 = vld [vmem:[%s4 + $0x38] sm:$0xff]
    %v3181 = vld [vmem:[%s4 + $0x40] sm:$0xff]
    %v3182 = vld [vmem:[%s4 + $0x48] sm:$0xff]
    %v3183 = vld [vmem:[%s4 + $0x50] sm:$0xff]
    %v3184 = vld [vmem:[%s4 + $0x58] sm:$0xff]
    %v3185 = vld [vmem:[%s4 + $0x60] sm:$0xff]
    %v3186 = vld [vmem:[%s4 + $0x68] sm:$0xff]
    %v3187 = vld [vmem:[%s4 + $0x70] sm:$0xff]
    %v3188 = vld [vmem:[%s4 + $0x78] sm:$0xff]
    %v3190 = vsel %vm378, %v3172, 0
    %3192 = vmatprep.subr.mxu0 0.0
    %3193 = vmatpush1.msra.mxu0 0.0
    %3194 = vmatprep.subr.mxu0 0.0
    %3195 = vmatpush1.msra.mxu0 0.0
    %3196 = vmatprep.subr.mxu0 0.0
    %3197 = vmatpush1.msra.mxu0 0.0
    %3198 = vmatprep.subr.mxu0 0.0
    %3199 = vmatpush1.msra.mxu0 0.0
    %3200 = vmatprep.subr.mxu0 0.0
    %3201 = vmatpush1.msra.mxu0 0.0
    %3202 = vmatprep.subr.mxu0 0.0
    %3203 = vmatpush1.msra.mxu0 0.0
    %3204 = vmatprep.subr.mxu0 0.0
    %3205 = vmatpush1.msra.mxu0 0.0
    %3206 = vmatprep.subr.mxu0 0.0
    %3207 = vmatpush1.msra.mxu0 0.0
    %3208 = vmatprep.subr.mxu0 0.0
    %3209 = vmatpush1.msra.mxu0 %v3188
    %3210 = vmatprep.subr.mxu0 0.0
    %3211 = vmatpush1.msra.mxu0 %v3187
    %3212 = vmatprep.subr.mxu0 0.0
    %3213 = vmatpush1.msra.mxu0 %v3186
    %3214 = vmatprep.subr.mxu0 0.0
    %3215 = vmatpush1.msra.mxu0 %v3185
    %3216 = vmatprep.subr.mxu0 0.0
    %3217 = vmatpush1.msra.mxu0 %v3184
    %3218 = vmatprep.subr.mxu0 0.0
    %3219 = vmatpush1.msra.mxu0 %v3183
    %3220 = vmatprep.subr.mxu0 0.0
    %3221 = vmatpush1.msra.mxu0 %v3182
    %3222 = vmatprep.subr.mxu0 0.0
    %3223 = vmatpush1.msra.mxu0 %v3181
    %3224 = vmatprep.subr.mxu0 0.0
    %3225 = vmatpush2.msra.mxu0 0.0
    %3226 = vmatprep.subr.mxu0 0.0
    %3227 = vmatpush2.msra.mxu0 0.0
    %3228 = vmatprep.subr.mxu0 0.0
    %3229 = vmatpush2.msra.mxu0 0.0
    %3230 = vmatprep.subr.mxu0 0.0
    %3231 = vmatpush2.msra.mxu0 0.0
    %3232 = vmatprep.subr.mxu0 0.0
    %3233 = vmatpush2.msra.mxu0 0.0
    %3234 = vmatprep.subr.mxu0 0.0
    %3235 = vmatpush2.msra.mxu0 0.0
    %3236 = vmatprep.subr.mxu0 0.0
    %3237 = vmatpush2.msra.mxu0 0.0
    %3238 = vmatprep.subr.mxu0 0.0
    %3239 = vmatpush2.msra.mxu0 0.0
    %3240 = vmatprep.subr.mxu0 0.0
    %3241 = vmatpush2.msra.mxu0 0.0
    %3242 = vmatprep.subr.mxu0 0.0
    %3243 = vmatpush2.msra.mxu0 0.0
    %3244 = vmatprep.subr.mxu0 0.0
    %3245 = vmatpush2.msra.mxu0 0.0
    %3246 = vmatprep.subr.mxu0 0.0
    %3247 = vmatpush2.msra.mxu0 0.0
    %3248 = vmatprep.subr.mxu0 0.0
    %3249 = vmatpush2.msra.mxu0 0.0
    %3250 = vmatprep.subr.mxu0 0.0
    %3251 = vmatpush2.msra.mxu0 0.0
    %3252 = vmatprep.subr.mxu0 0.0
    %3253 = vmatpush2.msra.mxu0 0.0
    %3254 = vmatprep.subr.mxu0 0.0
    %3255 = vmatpush2.msra.mxu0 0.0
    %3256 = vmatprep.mubr.f32.mxu0 0.0
    %3257 = vmatmul.mubr.f32.gmra.mxu0 %v3190
    %v3258 = vpop.f32.mrf.mxu0
    %v3259 = vadd.f32 0.0, %v3258
    %v3260 = vpop.f32.mrf.mxu0
    %3261 = vdwg.mxu0
    %v3263 = vsel %vm378, %v3144, 0
    %3265 = vmatprep.subr.mxu0 0.0
    %3266 = vmatpush1.msra.mxu0 0.0
    %3267 = vmatprep.subr.mxu0 0.0
    %3268 = vmatpush1.msra.mxu0 0.0
    %3269 = vmatprep.subr.mxu0 0.0
    %3270 = vmatpush1.msra.mxu0 0.0
    %3271 = vmatprep.subr.mxu0 0.0
    %3272 = vmatpush1.msra.mxu0 0.0
    %3273 = vmatprep.subr.mxu0 0.0
    %3274 = vmatpush1.msra.mxu0 0.0
    %3275 = vmatprep.subr.mxu0 0.0
    %3276 = vmatpush1.msra.mxu0 0.0
    %3277 = vmatprep.subr.mxu0 0.0
    %3278 = vmatpush1.msra.mxu0 0.0
    %3279 = vmatprep.subr.mxu0 0.0
    %3280 = vmatpush1.msra.mxu0 0.0
    %3281 = vmatprep.subr.mxu0 0.0
    %3282 = vmatpush1.msra.mxu0 %v3180
    %3283 = vmatprep.subr.mxu0 0.0
    %3284 = vmatpush1.msra.mxu0 %v3179
    %3285 = vmatprep.subr.mxu0 0.0
    %3286 = vmatpush1.msra.mxu0 %v3178
    %3287 = vmatprep.subr.mxu0 0.0
    %3288 = vmatpush1.msra.mxu0 %v3177
    %3289 = vmatprep.subr.mxu0 0.0
    %3290 = vmatpush1.msra.mxu0 %v3176
    %3291 = vmatprep.subr.mxu0 0.0
    %3292 = vmatpush1.msra.mxu0 %v3175
    %3293 = vmatprep.subr.mxu0 0.0
    %3294 = vmatpush1.msra.mxu0 %v3174
    %3295 = vmatprep.subr.mxu0 0.0
    %3296 = vmatpush1.msra.mxu0 %v3173
    %3297 = vmatprep.subr.mxu0 0.0
    %3298 = vmatpush2.msra.mxu0 0.0
    %3299 = vmatprep.subr.mxu0 0.0
    %3300 = vmatpush2.msra.mxu0 0.0
    %3301 = vmatprep.subr.mxu0 0.0
    %3302 = vmatpush2.msra.mxu0 0.0
    %3303 = vmatprep.subr.mxu0 0.0
    %3304 = vmatpush2.msra.mxu0 0.0
    %3305 = vmatprep.subr.mxu0 0.0
    %3306 = vmatpush2.msra.mxu0 0.0
    %3307 = vmatprep.subr.mxu0 0.0
    %3308 = vmatpush2.msra.mxu0 0.0
    %3309 = vmatprep.subr.mxu0 0.0
    %3310 = vmatpush2.msra.mxu0 0.0
    %3311 = vmatprep.subr.mxu0 0.0
    %3312 = vmatpush2.msra.mxu0 0.0
    %3313 = vmatprep.subr.mxu0 0.0
    %3314 = vmatpush2.msra.mxu0 0.0
    %3315 = vmatprep.subr.mxu0 0.0
    %3316 = vmatpush2.msra.mxu0 0.0
    %3317 = vmatprep.subr.mxu0 0.0
    %3318 = vmatpush2.msra.mxu0 0.0
    %3319 = vmatprep.subr.mxu0 0.0
    %3320 = vmatpush2.msra.mxu0 0.0
    %3321 = vmatprep.subr.mxu0 0.0
    %3322 = vmatpush2.msra.mxu0 0.0
    %3323 = vmatprep.subr.mxu0 0.0
    %3324 = vmatpush2.msra.mxu0 0.0
    %3325 = vmatprep.subr.mxu0 0.0
    %3326 = vmatpush2.msra.mxu0 0.0
    %3327 = vmatprep.subr.mxu0 0.0
    %3328 = vmatpush2.msra.mxu0 0.0
    %3329 = vmatprep.mubr.f32.mxu0 0.0
    %3330 = vmatmul.mubr.f32.gmra.mxu0 %v3263
    %v3331 = vpop.f32.mrf.mxu0
    %v3332 = vadd.f32 %v3259, %v3331
    %v3333 = vpop.f32.mrf.mxu0
    %3334 = vdwg.mxu0
    %v3335 = vld [vmem:[%s4 + $0x100] sm:$0x1]
    %v3336 = vlaneseq
    %v3337 = vshrl.u32 %v3336, 7
    %v3338 = vsub.s32 0, %v3337
    %v3339 = vrot.slane %v3335, %v3338
    %v3340 = vadd.f32 %v3332, %v3339
    %v3341 = vmax.f32 %v3340, 0.0
    %v3342 = vld [vmem:[%s4 + $0x80] sm:$0xff]
    %v3343 = vld [vmem:[%s4 + $0x88] sm:$0xff]
    %v3344 = vld [vmem:[%s4 + $0x90] sm:$0xff]
    %v3345 = vld [vmem:[%s4 + $0x98] sm:$0xff]
    %v3346 = vld [vmem:[%s4 + $0xa0] sm:$0xff]
    %v3347 = vld [vmem:[%s4 + $0xa8] sm:$0xff]
    %v3348 = vld [vmem:[%s4 + $0xb0] sm:$0xff]
    %v3349 = vld [vmem:[%s4 + $0xb8] sm:$0xff]
    %v3350 = vld [vmem:[%s4 + $0x101] sm:$0x1]
    %v3351 = vlaneseq
    %v3352 = vshrl.u32 %v3351, 7
    %v3353 = vsub.s32 0, %v3352
    %v3354 = vrot.slane %v3350, %v3353
    %v3356 = vsel %vm378, %v3341, 0
    %3358 = vmatprep.subr.mxu0 0.0
    %3359 = vmatpush1.msra.mxu0 0.0
    %3360 = vmatprep.subr.mxu0 0.0
    %3361 = vmatpush1.msra.mxu0 0.0
    %3362 = vmatprep.subr.mxu0 0.0
    %3363 = vmatpush1.msra.mxu0 0.0
    %3364 = vmatprep.subr.mxu0 0.0
    %3365 = vmatpush1.msra.mxu0 0.0
    %3366 = vmatprep.subr.mxu0 0.0
    %3367 = vmatpush1.msra.mxu0 0.0
    %3368 = vmatprep.subr.mxu0 0.0
    %3369 = vmatpush1.msra.mxu0 0.0
    %3370 = vmatprep.subr.mxu0 0.0
    %3371 = vmatpush1.msra.mxu0 0.0
    %3372 = vmatprep.subr.mxu0 0.0
    %3373 = vmatpush1.msra.mxu0 0.0
    %3374 = vmatprep.subr.mxu0 0.0
    %3375 = vmatpush1.msra.mxu0 %v3349
    %3376 = vmatprep.subr.mxu0 0.0
    %3377 = vmatpush1.msra.mxu0 %v3348
    %3378 = vmatprep.subr.mxu0 0.0
    %3379 = vmatpush1.msra.mxu0 %v3347
    %3380 = vmatprep.subr.mxu0 0.0
    %3381 = vmatpush1.msra.mxu0 %v3346
    %3382 = vmatprep.subr.mxu0 0.0
    %3383 = vmatpush1.msra.mxu0 %v3345
    %3384 = vmatprep.subr.mxu0 0.0
    %3385 = vmatpush1.msra.mxu0 %v3344
    %3386 = vmatprep.subr.mxu0 0.0
    %3387 = vmatpush1.msra.mxu0 %v3343
    %3388 = vmatprep.subr.mxu0 0.0
    %3389 = vmatpush1.msra.mxu0 %v3342
    %3390 = vmatprep.subr.mxu0 0.0
    %3391 = vmatpush2.msra.mxu0 0.0
    %3392 = vmatprep.subr.mxu0 0.0
    %3393 = vmatpush2.msra.mxu0 0.0
    %3394 = vmatprep.subr.mxu0 0.0
    %3395 = vmatpush2.msra.mxu0 0.0
    %3396 = vmatprep.subr.mxu0 0.0
    %3397 = vmatpush2.msra.mxu0 0.0
    %3398 = vmatprep.subr.mxu0 0.0
    %3399 = vmatpush2.msra.mxu0 0.0
    %3400 = vmatprep.subr.mxu0 0.0
    %3401 = vmatpush2.msra.mxu0 0.0
    %3402 = vmatprep.subr.mxu0 0.0
    %3403 = vmatpush2.msra.mxu0 0.0
    %3404 = vmatprep.subr.mxu0 0.0
    %3405 = vmatpush2.msra.mxu0 0.0
    %3406 = vmatprep.subr.mxu0 0.0
    %3407 = vmatpush2.msra.mxu0 0.0
    %3408 = vmatprep.subr.mxu0 0.0
    %3409 = vmatpush2.msra.mxu0 0.0
    %3410 = vmatprep.subr.mxu0 0.0
    %3411 = vmatpush2.msra.mxu0 0.0
    %3412 = vmatprep.subr.mxu0 0.0
    %3413 = vmatpush2.msra.mxu0 0.0
    %3414 = vmatprep.subr.mxu0 0.0
    %3415 = vmatpush2.msra.mxu0 0.0
    %3416 = vmatprep.subr.mxu0 0.0
    %3417 = vmatpush2.msra.mxu0 0.0
    %3418 = vmatprep.subr.mxu0 0.0
    %3419 = vmatpush2.msra.mxu0 0.0
    %3420 = vmatprep.subr.mxu0 0.0
    %3421 = vmatpush2.msra.mxu0 0.0
    %3422 = vmatprep.mubr.f32.mxu0 0.0
    %3423 = vmatmul.mubr.f32.gmra.mxu0 %v3356
    %v3424 = vpop.f32.mrf.mxu0
    %v3425 = vadd.f32 %v3354, %v3424
    %v3426 = vpop.f32.mrf.mxu0
    %3427 = vdwg.mxu0
    %v3428 = vmax.f32 %v3425, 0.0
    %v3429 = vld [vmem:[%s4 + $0xc0] sm:$0xff]
    %v3430 = vld [vmem:[%s4 + $0xc8] sm:$0xff]
    %v3431 = vld [vmem:[%s4 + $0xd0] sm:$0xff]
    %v3432 = vld [vmem:[%s4 + $0xd8] sm:$0xff]
    %v3433 = vld [vmem:[%s4 + $0xe0] sm:$0xff]
    %v3434 = vld [vmem:[%s4 + $0xe8] sm:$0xff]
    %v3435 = vld [vmem:[%s4 + $0xf0] sm:$0xff]
    %v3436 = vld [vmem:[%s4 + $0xf8] sm:$0xff]
    %v3437 = vld [vmem:[%s4 + $0x102] sm:$0x1]
    %v3438 = vlaneseq
    %v3439 = vshrl.u32 %v3438, 7
    %v3440 = vsub.s32 0, %v3439
    %v3441 = vrot.slane %v3437, %v3440
    %v3443 = vsel %vm378, %v3428, 0
    %3445 = vmatprep.subr.mxu0 0.0
    %3446 = vmatpush1.msra.mxu0 0.0
    %3447 = vmatprep.subr.mxu0 0.0
    %3448 = vmatpush1.msra.mxu0 0.0
    %3449 = vmatprep.subr.mxu0 0.0
    %3450 = vmatpush1.msra.mxu0 0.0
    %3451 = vmatprep.subr.mxu0 0.0
    %3452 = vmatpush1.msra.mxu0 0.0
    %3453 = vmatprep.subr.mxu0 0.0
    %3454 = vmatpush1.msra.mxu0 0.0
    %3455 = vmatprep.subr.mxu0 0.0
    %3456 = vmatpush1.msra.mxu0 0.0
    %3457 = vmatprep.subr.mxu0 0.0
    %3458 = vmatpush1.msra.mxu0 0.0
    %3459 = vmatprep.subr.mxu0 0.0
    %3460 = vmatpush1.msra.mxu0 0.0
    %3461 = vmatprep.subr.mxu0 0.0
    %3462 = vmatpush1.msra.mxu0 %v3436
    %3463 = vmatprep.subr.mxu0 0.0
    %3464 = vmatpush1.msra.mxu0 %v3435
    %3465 = vmatprep.subr.mxu0 0.0
    %3466 = vmatpush1.msra.mxu0 %v3434
    %3467 = vmatprep.subr.mxu0 0.0
    %3468 = vmatpush1.msra.mxu0 %v3433
    %3469 = vmatprep.subr.mxu0 0.0
    %3470 = vmatpush1.msra.mxu0 %v3432
    %3471 = vmatprep.subr.mxu0 0.0
    %3472 = vmatpush1.msra.mxu0 %v3431
    %3473 = vmatprep.subr.mxu0 0.0
    %3474 = vmatpush1.msra.mxu0 %v3430
    %3475 = vmatprep.subr.mxu0 0.0
    %3476 = vmatpush1.msra.mxu0 %v3429
    %3477 = vmatprep.subr.mxu0 0.0
    %3478 = vmatpush2.msra.mxu0 0.0
    %3479 = vmatprep.subr.mxu0 0.0
    %3480 = vmatpush2.msra.mxu0 0.0
    %3481 = vmatprep.subr.mxu0 0.0
    %3482 = vmatpush2.msra.mxu0 0.0
    %3483 = vmatprep.subr.mxu0 0.0
    %3484 = vmatpush2.msra.mxu0 0.0
    %3485 = vmatprep.subr.mxu0 0.0
    %3486 = vmatpush2.msra.mxu0 0.0
    %3487 = vmatprep.subr.mxu0 0.0
    %3488 = vmatpush2.msra.mxu0 0.0
    %3489 = vmatprep.subr.mxu0 0.0
    %3490 = vmatpush2.msra.mxu0 0.0
    %3491 = vmatprep.subr.mxu0 0.0
    %3492 = vmatpush2.msra.mxu0 0.0
    %3493 = vmatprep.subr.mxu0 0.0
    %3494 = vmatpush2.msra.mxu0 0.0
    %3495 = vmatprep.subr.mxu0 0.0
    %3496 = vmatpush2.msra.mxu0 0.0
    %3497 = vmatprep.subr.mxu0 0.0
    %3498 = vmatpush2.msra.mxu0 0.0
    %3499 = vmatprep.subr.mxu0 0.0
    %3500 = vmatpush2.msra.mxu0 0.0
    %3501 = vmatprep.subr.mxu0 0.0
    %3502 = vmatpush2.msra.mxu0 0.0
    %3503 = vmatprep.subr.mxu0 0.0
    %3504 = vmatpush2.msra.mxu0 0.0
    %3505 = vmatprep.subr.mxu0 0.0
    %3506 = vmatpush2.msra.mxu0 0.0
    %3507 = vmatprep.subr.mxu0 0.0
    %3508 = vmatpush2.msra.mxu0 0.0
    %3509 = vmatprep.mubr.f32.mxu0 0.0
    %3510 = vmatmul.mubr.f32.gmra.mxu0 %v3443
    %v3511 = vpop.f32.mrf.mxu0
    %v3512 = vadd.f32 %v3441, %v3511
    %v3513 = vpop.f32.mrf.mxu0
    %3514 = vdwg.mxu0
    %vm3515 = vcmask 7168
    %3516 = vst.msk [vmem:[%s5] sm:$0xff] %vm3515, %v3512
    // Predicated region
    $region26: #{lstm_model_forward.1} parent=1 // pred_check
      _
    $region27: #{lstm_model_forward.1} parent=1 // pred_check_branch
      %3518 = sbr.rel (0) target = $region29
    $region28: #{lstm_model_forward.1} parent=1 // pred_region
      _
    $region29: #{lstm_model_forward.1} parent=1 // pred_fallthru
      _
    // Predicated region
    $region30: #{lstm_model_forward.1} parent=1 // pred_check
      _
    $region31: #{lstm_model_forward.1} parent=1 // pred_check_branch
      %3520 = sbr.rel (0) target = $region33
    $region32: #{lstm_model_forward.1} parent=1 // pred_region
      _
    $region33: #{lstm_model_forward.1} parent=1 // pred_fallthru
      _
    %3521 = vsyncpa [#allocation6], 1

</llo_original>
